<compile_context>
chip_gen: v6e
topology: v6e:2x2x1
jax: 0.10.0
libtpu: 0.0.40
codegen_flags: <defaults>
</compile_context>

<pallas_src>
import jax
import jax.numpy as jnp
import numpy as np
from jax import lax
from jax.experimental import pallas as pl
from jax.experimental.pallas import tpu as pltpu

NEG_SLOPE = 0.2  # LeakyReLU slope


# --------------------------------------------------------------------------- #
# In-kernel helpers
# --------------------------------------------------------------------------- #
def _leaky(x):
    return jnp.where(x > 0.0, x, NEG_SLOPE * x)


def _decoder_kernel(z_ref, w0_ref, b0_ref, w1_ref, b1_ref, w2_ref, b2_ref, out_ref):
    """Fully fused decoder for one block of BB latent vectors.

    z_ref  : (BB, ny)        latent block
    w0_ref : (ny, 512)       first_upconv as dense matrix, cols = (y, x, c1)
    w1_ref : (512, 1024)     conv[0] as dense matrix,      cols = (y, x, c2)
    w2_ref : (1024, 768)     conv[1] as dense matrix,      cols = (c3, y, x)  (NCHW-flat)
    out_ref: (BB, 768)       rows = batch, lanes = flattened NCHW frame (lane-dense)
    """
    # stage 1: first_upconv on a 1x1 map == dense matmul + LeakyReLU
    h = jnp.dot(z_ref[...], w0_ref[...], preferred_element_type=jnp.float32)
    h = _leaky(h + b0_ref[...])
    # stage 2: ConvTranspose2d(32, 16, 4, s=2, p=1) + LeakyReLU, one matmul
    h = jnp.dot(h, w1_ref[...], preferred_element_type=jnp.float32)
    h = _leaky(h + b1_ref[...])
    # stage 3: ConvTranspose2d(16, 3, 4, s=2, p=1) + sigmoid, one matmul
    h = jnp.dot(h, w2_ref[...], preferred_element_type=jnp.float32)
    h = h + b2_ref[...]
    out_ref[...] = 1.0 / (1.0 + jnp.exp(-h))   # sigmoid (EUP exp + VPU)


# --------------------------------------------------------------------------- #
# Host-side weight packing (pure layout work; do once, outside the hot path)
# --------------------------------------------------------------------------- #
def _dense_convT_matrix(w, hin, win, stride, pad, channel_major_out=False):
    """Materialize a ConvTranspose2d as a dense (hin*win*cin, hout*wout*cout) matrix.

    Row index = (iy*win + ix)*cin + ci                  (spatial-major, channel innermost)
    Col index = (oy*wout + ox)*cout + co                (default)
              =  co*hout*wout + oy*wout + ox            (channel_major_out=True -> NCHW-flat)
    Entries are gathered from the conv weight (exact); absent taps read an appended 0.
    The gather index table is static numpy; only one jnp.take is traced.
    """
    cin, cout, k, _ = w.shape
    hout = (hin - 1) * stride - 2 * pad + k
    wout = (win - 1) * stride - 2 * pad + k
    zero_slot = cin * cout * k * k
    idx = np.full((hin, win, cin, hout, wout, cout), zero_slot, np.int32)
    base = (np.arange(cin)[:, None] * cout + np.arange(cout)[None, :]) * (k * k)
    for iy in range(hin):
        for ix in range(win):
            for ky in range(k):
                for kx in range(k):
                    oy = iy * stride - pad + ky
                    ox = ix * stride - pad + kx
                    if 0 <= oy < hout and 0 <= ox < wout:
                        idx[iy, ix, :, oy, ox, :] = base + ky * k + kx
    if channel_major_out:
        idx = idx.transpose(0, 1, 2, 5, 3, 4)            # (..., cout, hout, wout)
    idx = idx.reshape(hin * win * cin, hout * wout * cout)
    w_flat = jnp.concatenate([w.astype(jnp.float32).reshape(-1),
                              jnp.zeros((1,), jnp.float32)])
    return jnp.take(w_flat, jnp.asarray(idx), axis=0)


def pack_params(params):
    """Pack ConvTranspose2d weights into the matmul layouts the kernel expects."""
    w0, b0 = params["w0"], params["b0"]
    w1, b1 = params["w1"], params["b1"]
    w2, b2 = params["w2"], params["b2"]
    ny, c1, k, _ = w0.shape
    c2, c3 = w1.shape[1], w2.shape[1]
    # first_upconv acting on a 1x1 map: cols = (y, x, c1)
    w0p = jnp.transpose(w0.astype(jnp.float32), (0, 2, 3, 1)).reshape(ny, k * k * c1)
    b0p = jnp.tile(b0.astype(jnp.float32), k * k).reshape(1, k * k * c1)
    # conv[0]: 4x4xC1 -> 8x8xC2, cols = (y, x, c2)  (feeds straight into stage 3)
    w1p = _dense_convT_matrix(w1, 4, 4, 2, 1)
    b1p = jnp.tile(b1.astype(jnp.float32), 64).reshape(1, 64 * c2)
    # conv[1]: 8x8xC2 -> 16x16xC3, cols = (c3, y, x) == flattened NCHW frame
    w2p = _dense_convT_matrix(w2, 8, 8, 2, 1, channel_major_out=True)
    b2p = jnp.repeat(b2.astype(jnp.float32), 256).reshape(1, 256 * c3)
    return {"w0p": w0p, "b0p": b0p, "w1p": w1p, "b1p": b1p, "w2p": w2p, "b2p": b2p}


# --------------------------------------------------------------------------- #
# Decoder: parameters + forward
# --------------------------------------------------------------------------- #
def init_params(key, ny=32, nf=(32, 16), nc=3, k=4):
    ks = jax.random.split(key, 6)
    s = 0.05
    return {
        "w0": s * jax.random.normal(ks[0], (ny, nf[0], k, k), jnp.float32),
        "b0": s * jax.random.normal(ks[1], (nf[0],), jnp.float32),
        "w1": s * jax.random.normal(ks[2], (nf[0], nf[1], k, k), jnp.float32),
        "b1": s * jax.random.normal(ks[3], (nf[1],), jnp.float32),
        "w2": s * jax.random.normal(ks[4], (nf[1], nc, k, k), jnp.float32),
        "b2": s * jax.random.normal(ks[5], (nc,), jnp.float32),
    }


def _round_up(x, m):
    return ((x + m - 1) // m) * m


def base_decoder_forward(packed, z, skip=None, block_b=128, out_chw=(3, 16, 16)):
    """Pallas version of BaseDecoder.forward (self.skip == False).

    block_b: batch rows per grid step.  Multiple of 8; 64-256 amortizes the
    ~0.35 us per-step overhead (perf review).  When the batch exceeds block_b the
    grid has >= 2 "parallel" steps so v7x can shard them across its 2 TensorCores.
    """
    # TODO(synk): skip-connection variant (self.skip=True, torch.cat with encoder
    # features before each conv block) is not instantiated here.
    assert skip is None
    w0p, b0p = packed["w0p"], packed["b0p"]
    w1p, b1p = packed["w1p"], packed["b1p"]
    w2p, b2p = packed["w2p"], packed["b2p"]
    ny = w0p.shape[0]
    npix_out = w2p.shape[1]                 # 768 = 3*16*16, multiple of 128 (lane-dense)

    B = z.shape[0]
    BB = min(_round_up(block_b, 8), _round_up(max(B, 1), 8))
    nb = pl.cdiv(B, BB)
    zp = jnp.pad(z.astype(jnp.float32), ((0, nb * BB - B), (0, 0)))

    flops = 2 * nb * BB * (w0p.shape[0] * w0p.shape[1]
                           + w1p.shape[0] * w1p.shape[1]
                           + w2p.shape[0] * w2p.shape[1])
    bytes_accessed = 4 * (zp.size + w0p.size + b0p.size + w1p.size + b1p.size
                          + w2p.size + b2p.size + nb * BB * npix_out)
    transcendentals = nb * BB * npix_out    # sigmoid exp

    out2d = pl.pallas_call(
        _decoder_kernel,
        out_shape=jax.ShapeDtypeStruct((nb * BB, npix_out), jnp.float32),
        grid=(nb,),
        in_specs=[
            pl.BlockSpec((BB, ny), lambda i: (i, 0)),
            pl.BlockSpec(w0p.shape, lambda i: (0, 0)),   # weights / biases stay
            pl.BlockSpec(b0p.shape, lambda i: (0, 0)),   # VMEM-resident across steps
            pl.BlockSpec(w1p.shape, lambda i: (0, 0)),
            pl.BlockSpec(b1p.shape, lambda i: (0, 0)),
            pl.BlockSpec(w2p.shape, lambda i: (0, 0)),
            pl.BlockSpec(b2p.shape, lambda i: (0, 0)),
        ],
        out_specs=pl.BlockSpec((BB, npix_out), lambda i: (i, 0)),
        compiler_params=pltpu.CompilerParams(
            dimension_semantics=("parallel",),
            vmem_limit_bytes=40 * 1024 * 1024,   # weights ~5.3 MB (x2 buf) + acts; safe on v5e/v6e/v7x
        ),
        cost_estimate=pl.CostEstimate(flops=flops,
                                      transcendentals=transcendentals,
                                      bytes_accessed=bytes_accessed),
    )(zp, w0p, b0p, w1p, b1p, w2p, b2p)

    # Lanes are already NCHW-flattened (c, y, x): the un-interleave is a free reshape.
    c, h, w = out_chw
    return out2d[:B].reshape(B, c, h, w)


# --------------------------------------------------------------------------- #
# Pure-JAX reference (for correctness check)
# --------------------------------------------------------------------------- #
def _conv_transpose_ref(x, w, b, stride, pad):
    k = w.shape[2]
    out = lax.conv_general_dilated(
        x,
        jnp.transpose(w, (1, 0, 2, 3))[:, :, ::-1, ::-1],
        window_strides=(1, 1),
        padding=[(k - 1 - pad, k - 1 - pad)] * 2,
        lhs_dilation=(stride, stride),
        dimension_numbers=("NCHW", "OIHW", "NCHW"),
        precision=lax.Precision.HIGHEST)
    return out + b.reshape(1, -1, 1, 1)


def reference_forward(params, z):
    lrelu = lambda x: jnp.where(x > 0, x, NEG_SLOPE * x)
    x = z.reshape(*z.shape, 1, 1)
    h = lrelu(_conv_transpose_ref(x, params["w0"], params["b0"], 1, 0))
    h = lrelu(_conv_transpose_ref(h, params["w1"], params["b1"], 2, 1))
    h = _conv_transpose_ref(h, params["w2"], params["b2"], 2, 1)
    return jax.nn.sigmoid(h)


if __name__ == "__main__":
    key = jax.random.PRNGKey(0)
    pkey, zkey = jax.random.split(key)
    ny, batch = 32, 2
    params = init_params(pkey, ny=ny)
    z = jax.random.normal(zkey, (batch, ny), jnp.float32)

    packed = pack_params(params)                      # one-time layout work
    fwd = jax.jit(base_decoder_forward)
    out = jax.block_until_ready(fwd(packed, z))
    assert out.shape == (batch, 3, 16, 16), out.shape

    ref = reference_forward(params, z)
    np.testing.assert_allclose(np.asarray(out), np.asarray(ref),
                               rtol=1e-4, atol=1e-5)
    print("KERNEL_OK")
</pallas_src>

<mosaic_0001>
module attributes {stable_mosaic.version = 11 : i64} {
  func.func @_decoder_kernel(%arg0: i32, %arg1: memref<8x32xf32, #tpu.memory_space<vmem>>, %arg2: memref<32x512xf32, #tpu.memory_space<vmem>>, %arg3: memref<1x512xf32, #tpu.memory_space<vmem>>, %arg4: memref<512x1024xf32, #tpu.memory_space<vmem>>, %arg5: memref<1x1024xf32, #tpu.memory_space<vmem>>, %arg6: memref<1024x768xf32, #tpu.memory_space<vmem>>, %arg7: memref<1x768xf32, #tpu.memory_space<vmem>>, %arg8: memref<8x768xf32, #tpu.memory_space<vmem>>) attributes {dimension_semantics = [#tpu.dimension_semantics<parallel>], iteration_bounds = array<i64: 1>, scalar_prefetch = 0 : i64, scratch_operands = 0 : i64, tpu.core_type = #tpu.core_type<tc>, window_params = [{transform_indices = @transform_0, window_bounds = array<i64: 8, 32>}, {pipeline_mode = #tpu.pipeline_mode<synchronous>, transform_indices = @transform_1, window_bounds = array<i64: 32, 512>}, {pipeline_mode = #tpu.pipeline_mode<synchronous>, transform_indices = @transform_2, window_bounds = array<i64: 1, 512>}, {pipeline_mode = #tpu.pipeline_mode<synchronous>, transform_indices = @transform_3, window_bounds = array<i64: 512, 1024>}, {pipeline_mode = #tpu.pipeline_mode<synchronous>, transform_indices = @transform_4, window_bounds = array<i64: 1, 1024>}, {pipeline_mode = #tpu.pipeline_mode<synchronous>, transform_indices = @transform_5, window_bounds = array<i64: 1024, 768>}, {pipeline_mode = #tpu.pipeline_mode<synchronous>, transform_indices = @transform_6, window_bounds = array<i64: 1, 768>}, {transform_indices = @transform_7, window_bounds = array<i64: 8, 768>}]} {
    %c0 = arith.constant 0 : index
    %c0_0 = arith.constant 0 : index
    %0 = vector.load %arg1[%c0, %c0_0] : memref<8x32xf32, #tpu.memory_space<vmem>>, vector<8x32xf32>
    %c0_1 = arith.constant 0 : index
    %c0_2 = arith.constant 0 : index
    %1 = vector.load %arg2[%c0_1, %c0_2] : memref<32x512xf32, #tpu.memory_space<vmem>>, vector<32x512xf32>
    %cst = arith.constant dense<0.000000e+00> : vector<8x512xf32>
    %2 = tpu.matmul %0, %1, %cst {dimension_numbers = #tpu.dot_dimension_numbers<[1], [0], [0], [1], [0, 0, 1, 1], [], []>} : vector<8x32xf32>, vector<32x512xf32>, vector<8x512xf32> -> vector<8x512xf32>
    %c0_3 = arith.constant 0 : index
    %c0_4 = arith.constant 0 : index
    %3 = vector.load %arg3[%c0_3, %c0_4] : memref<1x512xf32, #tpu.memory_space<vmem>>, vector<1x512xf32>
    %4 = vector.broadcast %3 : vector<1x512xf32> to vector<8x512xf32>
    %5 = arith.addf %2, %4 : vector<8x512xf32>
    %cst_5 = arith.constant 0.000000e+00 : f32
    %6 = vector.broadcast %cst_5 : f32 to vector<8x512xf32>
    %7 = arith.cmpf ogt, %5, %6 : vector<8x512xf32>
    %cst_6 = arith.constant 2.000000e-01 : f32
    %8 = vector.broadcast %cst_6 : f32 to vector<8x512xf32>
    %9 = arith.mulf %8, %5 : vector<8x512xf32>
    %10 = arith.select %7, %5, %9 : vector<8x512xi1>, vector<8x512xf32>
    %c0_7 = arith.constant 0 : index
    %c0_8 = arith.constant 0 : index
    %11 = vector.load %arg4[%c0_7, %c0_8] : memref<512x1024xf32, #tpu.memory_space<vmem>>, vector<512x1024xf32>
    %cst_9 = arith.constant dense<0.000000e+00> : vector<8x1024xf32>
    %12 = tpu.matmul %10, %11, %cst_9 {dimension_numbers = #tpu.dot_dimension_numbers<[1], [0], [0], [1], [0, 0, 1, 1], [], []>} : vector<8x512xf32>, vector<512x1024xf32>, vector<8x1024xf32> -> vector<8x1024xf32>
    %c0_10 = arith.constant 0 : index
    %c0_11 = arith.constant 0 : index
    %13 = vector.load %arg5[%c0_10, %c0_11] : memref<1x1024xf32, #tpu.memory_space<vmem>>, vector<1x1024xf32>
    %14 = vector.broadcast %13 : vector<1x1024xf32> to vector<8x1024xf32>
    %15 = arith.addf %12, %14 : vector<8x1024xf32>
    %cst_12 = arith.constant 0.000000e+00 : f32
    %16 = vector.broadcast %cst_12 : f32 to vector<8x1024xf32>
    %17 = arith.cmpf ogt, %15, %16 : vector<8x1024xf32>
    %cst_13 = arith.constant 2.000000e-01 : f32
    %18 = vector.broadcast %cst_13 : f32 to vector<8x1024xf32>
    %19 = arith.mulf %18, %15 : vector<8x1024xf32>
    %20 = arith.select %17, %15, %19 : vector<8x1024xi1>, vector<8x1024xf32>
    %c0_14 = arith.constant 0 : index
    %c0_15 = arith.constant 0 : index
    %21 = vector.load %arg6[%c0_14, %c0_15] : memref<1024x768xf32, #tpu.memory_space<vmem>>, vector<1024x768xf32>
    %cst_16 = arith.constant dense<0.000000e+00> : vector<8x768xf32>
    %22 = tpu.matmul %20, %21, %cst_16 {dimension_numbers = #tpu.dot_dimension_numbers<[1], [0], [0], [1], [0, 0, 1, 1], [], []>} : vector<8x1024xf32>, vector<1024x768xf32>, vector<8x768xf32> -> vector<8x768xf32>
    %c0_17 = arith.constant 0 : index
    %c0_18 = arith.constant 0 : index
    %23 = vector.load %arg7[%c0_17, %c0_18] : memref<1x768xf32, #tpu.memory_space<vmem>>, vector<1x768xf32>
    %24 = vector.broadcast %23 : vector<1x768xf32> to vector<8x768xf32>
    %25 = arith.addf %22, %24 : vector<8x768xf32>
    %cst_19 = arith.constant 0.000000e+00 : f32
    %26 = vector.broadcast %cst_19 : f32 to vector<8x768xf32>
    %27 = arith.subf %26, %25 : vector<8x768xf32>
    %28 = math.exp %27 : vector<8x768xf32>
    %cst_20 = arith.constant 1.000000e+00 : f32
    %29 = vector.broadcast %cst_20 : f32 to vector<8x768xf32>
    %30 = arith.addf %29, %28 : vector<8x768xf32>
    %cst_21 = arith.constant 1.000000e+00 : f32
    %31 = vector.broadcast %cst_21 : f32 to vector<8x768xf32>
    %32 = arith.divf %31, %30 : vector<8x768xf32>
    %c0_22 = arith.constant 0 : index
    %c0_23 = arith.constant 0 : index
    %33 = vector.load %arg8[%c0_22, %c0_23] : memref<8x768xf32, #tpu.memory_space<vmem>>, vector<8x768xf32>
    tpu.vector_store %arg8[%c0_22, %c0_23], %32 {strides = array<i32>} : memref<8x768xf32, #tpu.memory_space<vmem>>, vector<8x768xf32>,
    return
  }
  func.func @transform_0(%arg0: i32) -> (i32, i32) {
    %c0_i32 = arith.constant 0 : i32
    %c0_i32_0 = arith.constant 0 : i32
    return %arg0, %c0_i32 : i32, i32
  }
  func.func @transform_1(%arg0: i32) -> (i32, i32) {
    %c0_i32 = arith.constant 0 : i32
    %c0_i32_0 = arith.constant 0 : i32
    %c0_i32_1 = arith.constant 0 : i32
    return %c0_i32, %c0_i32_0 : i32, i32
  }
  func.func @transform_2(%arg0: i32) -> (i32, i32) {
    %c0_i32 = arith.constant 0 : i32
    %c0_i32_0 = arith.constant 0 : i32
    %c0_i32_1 = arith.constant 0 : i32
    return %c0_i32, %c0_i32_0 : i32, i32
  }
  func.func @transform_3(%arg0: i32) -> (i32, i32) {
    %c0_i32 = arith.constant 0 : i32
    %c0_i32_0 = arith.constant 0 : i32
    %c0_i32_1 = arith.constant 0 : i32
    return %c0_i32, %c0_i32_0 : i32, i32
  }
  func.func @transform_4(%arg0: i32) -> (i32, i32) {
    %c0_i32 = arith.constant 0 : i32
    %c0_i32_0 = arith.constant 0 : i32
    %c0_i32_1 = arith.constant 0 : i32
    return %c0_i32, %c0_i32_0 : i32, i32
  }
  func.func @transform_5(%arg0: i32) -> (i32, i32) {
    %c0_i32 = arith.constant 0 : i32
    %c0_i32_0 = arith.constant 0 : i32
    %c0_i32_1 = arith.constant 0 : i32
    return %c0_i32, %c0_i32_0 : i32, i32
  }
  func.func @transform_6(%arg0: i32) -> (i32, i32) {
    %c0_i32 = arith.constant 0 : i32
    %c0_i32_0 = arith.constant 0 : i32
    %c0_i32_1 = arith.constant 0 : i32
    return %c0_i32, %c0_i32_0 : i32, i32
  }
  func.func @transform_7(%arg0: i32) -> (i32, i32) {
    %c0_i32 = arith.constant 0 : i32
    %c0_i32_0 = arith.constant 0 : i32
    return %arg0, %c0_i32 : i32, i32
  }
}

</mosaic_0001>

<llo_original>
// kernel: base_decoder_forward.1
$region0: #{base_decoder_forward.1}
  #allocation0 [shape = 'u32[]', space=smem, size = 0x4, offset = 0x4, fixed_abs, tag = 'smem constant byte address 0x4 - core index']
  #allocation1 [shape = 'u32[144,128]{1,0:T(1,128)}', space=vmem, size = 0x12000, scoped, tag = 'internal scratch']
  %s0 = inlined_call_operand.vmem [shape: f32[8,32], index: 0, kind: input, shape index: {}]
  %s1 = inlined_call_operand.hbm [shape: f32[32,512], index: 1, kind: input, shape index: {}]
  %s2 = inlined_call_operand.hbm [shape: f32[1,512], index: 2, kind: input, shape index: {}]
  %s3 = inlined_call_operand.hbm [shape: f32[512,1024], index: 3, kind: input, shape index: {}]
  %s4 = inlined_call_operand.hbm [shape: f32[1,1024], index: 4, kind: input, shape index: {}]
  %s5 = inlined_call_operand.hbm [shape: f32[1024,768], index: 5, kind: input, shape index: {}]
  %s6 = inlined_call_operand.hbm [shape: f32[1,768], index: 6, kind: input, shape index: {}]
  %s7 = inlined_call_operand.vmem [shape: f32[8,768], index: 7, kind: output, shape index: {}]
  %s8 = sld [smem:[#allocation0]]
  $region62: #{base_decoder_forward.1} parent=0
    _
  %s10 = ssub.s32 1, %s8
  %s11 = scalar_select 0, %s10, %s8
  $region1: #{base_decoder_forward.1} parent=0
    #allocation2 [shape = 'u8[65536]{0}', space=vmem, size = 0x10000, scoped, tag = 'input window, operand 1, single buffered']
    #allocation3 [shape = 's32[1]{0}', space=sflag, size = 0x4, scoped, tag = 'scoped memory for base_decoder_forward.1']
    #allocation4 [shape = 'u8[2048]{0}', space=vmem, size = 0x800, scoped, tag = 'input window, operand 2, single buffered']
    #allocation5 [shape = 's32[1]{0}', space=sflag, size = 0x4, scoped, tag = 'scoped memory for base_decoder_forward.1']
    #allocation6 [shape = 'u8[2097152]{0}', space=vmem, size = 0x200000, scoped, tag = 'input window, operand 3, single buffered']
    #allocation7 [shape = 'u8[4096]{0}', space=vmem, size = 0x1000, scoped, tag = 'input window, operand 4, single buffered']
    #allocation8 [shape = 's32[1]{0}', space=sflag, size = 0x4, scoped, tag = 'scoped memory for base_decoder_forward.1']
    #allocation9 [shape = 'u8[3145728]{0}', space=vmem, size = 0x300000, scoped, tag = 'input window, operand 5, single buffered']
    #allocation10 [shape = 'u8[3072]{0}', space=vmem, size = 0xc00, scoped, tag = 'input window, operand 6, single buffered']
    #allocation11 [shape = 's32[1]{0}', space=sflag, size = 0x4, scoped, tag = 'scoped memory for base_decoder_forward.1']
    %12 = vsyncpa [#allocation3], 0
    %13 = vsyncpa [#allocation5], 0
    %14 = vsyncpa [#allocation8], 0
    %15 = vsyncpa [#allocation11], 0
    // Predicated region
    $region2: #{base_decoder_forward.1} parent=1 // pred_check
      _
    $region3: #{base_decoder_forward.1} parent=1 // pred_check_branch
      %17 = sbr.rel (0) target = $region5
    $region4: #{base_decoder_forward.1} parent=1 // pred_region
      _
    $region5: #{base_decoder_forward.1} parent=1 // pred_fallthru
      _
    // Predicated region
    $region6: #{base_decoder_forward.1} parent=1 // pred_check
      _
    $region7: #{base_decoder_forward.1} parent=1 // pred_check_branch
      %19 = sbr.rel (0) target = $region9
    $region8: #{base_decoder_forward.1} parent=1 // pred_region
      %s21 = ssub.s32 2048, 2048
      %22 = vsyncadd [#allocation3], %s21
      %s23 = sshll.u32 [#allocation2], 4
      %s24 = int_to_ptr.vmem [resolvable:$true] %s23
      %29 = dma.hbm_to_vmem [thread:$0]  %s1, 2048, %s24, [#allocation3], 512, 512, 32
    $region9: #{base_decoder_forward.1} parent=1 // pred_fallthru
      _
    // Predicated region
    $region10: #{base_decoder_forward.1} parent=1 // pred_check
      _
    $region11: #{base_decoder_forward.1} parent=1 // pred_check_branch
      %31 = sbr.rel (0) target = $region13
    $region12: #{base_decoder_forward.1} parent=1 // pred_region
      %s33 = ssub.s32 64, 64
      %34 = vsyncadd [#allocation5], %s33
      %s36 = sshll.u32 [#allocation4], 4
      %s37 = int_to_ptr.vmem [resolvable:$true] %s36
      %39 = dma.hbm_to_vmem [thread:$0]  %s2, 64, %s37, [#allocation5]
    $region13: #{base_decoder_forward.1} parent=1 // pred_fallthru
      _
    // Predicated region
    $region14: #{base_decoder_forward.1} parent=1 // pred_check
      _
    $region15: #{base_decoder_forward.1} parent=1 // pred_check_branch
      %41 = sbr.rel (0) target = $region17
    $region16: #{base_decoder_forward.1} parent=1 // pred_region
      %s43 = ssub.s32 65536, 65536
      %44 = vsyncadd [#allocation5], %s43
      %s45 = sshll.u32 [#allocation6], 4
      %s46 = int_to_ptr.vmem [resolvable:$true] %s45
      %51 = dma.hbm_to_vmem [thread:$0]  %s3, 65536, %s46, [#allocation5], 1024, 1024, 64
    $region17: #{base_decoder_forward.1} parent=1 // pred_fallthru
      _
    // Predicated region
    $region18: #{base_decoder_forward.1} parent=1 // pred_check
      _
    $region19: #{base_decoder_forward.1} parent=1 // pred_check_branch
      %53 = sbr.rel (0) target = $region21
    $region20: #{base_decoder_forward.1} parent=1 // pred_region
      %s55 = ssub.s32 128, 128
      %56 = vsyncadd [#allocation8], %s55
      %s58 = sshll.u32 [#allocation7], 4
      %s59 = int_to_ptr.vmem [resolvable:$true] %s58
      %61 = dma.hbm_to_vmem [thread:$0]  %s4, 128, %s59, [#allocation8]
    $region21: #{base_decoder_forward.1} parent=1 // pred_fallthru
      _
    // Predicated region
    $region22: #{base_decoder_forward.1} parent=1 // pred_check
      _
    $region23: #{base_decoder_forward.1} parent=1 // pred_check_branch
      %63 = sbr.rel (0) target = $region25
    $region24: #{base_decoder_forward.1} parent=1 // pred_region
      %s65 = ssub.s32 98304, 98304
      %66 = vsyncadd [#allocation8], %s65
      %s67 = sshll.u32 [#allocation9], 4
      %s68 = int_to_ptr.vmem [resolvable:$true] %s67
      %73 = dma.hbm_to_vmem [thread:$0]  %s5, 98304, %s68, [#allocation8], 768, 768, 48
    $region25: #{base_decoder_forward.1} parent=1 // pred_fallthru
      _
    // Predicated region
    $region26: #{base_decoder_forward.1} parent=1 // pred_check
      _
    $region27: #{base_decoder_forward.1} parent=1 // pred_check_branch
      %75 = sbr.rel (0) target = $region29
    $region28: #{base_decoder_forward.1} parent=1 // pred_region
      %s77 = ssub.s32 96, 96
      %78 = vsyncadd [#allocation11], %s77
      %s80 = sshll.u32 [#allocation10], 4
      %s81 = int_to_ptr.vmem [resolvable:$true] %s80
      %83 = dma.hbm_to_vmem [thread:$0]  %s6, 96, %s81, [#allocation11]
    $region29: #{base_decoder_forward.1} parent=1 // pred_fallthru
      _
    // Predicated region
    $region30: #{base_decoder_forward.1} parent=1 // pred_check
      _
    $region31: #{base_decoder_forward.1} parent=1 // pred_check_branch
      %85 = sbr.rel (0) target = $region33
    $region32: #{base_decoder_forward.1} parent=1 // pred_region
      %86 = dma.done [#allocation3], 2048
    $region33: #{base_decoder_forward.1} parent=1 // pred_fallthru
      _
    // Predicated region
    $region34: #{base_decoder_forward.1} parent=1 // pred_check
      _
    $region35: #{base_decoder_forward.1} parent=1 // pred_check_branch
      %88 = sbr.rel (0) target = $region37
    $region36: #{base_decoder_forward.1} parent=1 // pred_region
      %89 = dma.done [#allocation5], 64
    $region37: #{base_decoder_forward.1} parent=1 // pred_fallthru
      _
    // Predicated region
    $region38: #{base_decoder_forward.1} parent=1 // pred_check
      _
    $region39: #{base_decoder_forward.1} parent=1 // pred_check_branch
      %91 = sbr.rel (0) target = $region41
    $region40: #{base_decoder_forward.1} parent=1 // pred_region
      %92 = dma.done [#allocation5], 65536
    $region41: #{base_decoder_forward.1} parent=1 // pred_fallthru
      _
    // Predicated region
    $region42: #{base_decoder_forward.1} parent=1 // pred_check
      _
    $region43: #{base_decoder_forward.1} parent=1 // pred_check_branch
      %94 = sbr.rel (0) target = $region45
    $region44: #{base_decoder_forward.1} parent=1 // pred_region
      %95 = dma.done [#allocation8], 128
    $region45: #{base_decoder_forward.1} parent=1 // pred_fallthru
      _
    // Predicated region
    $region46: #{base_decoder_forward.1} parent=1 // pred_check
      _
    $region47: #{base_decoder_forward.1} parent=1 // pred_check_branch
      %97 = sbr.rel (0) target = $region49
    $region48: #{base_decoder_forward.1} parent=1 // pred_region
      %98 = dma.done [#allocation8], 98304
    $region49: #{base_decoder_forward.1} parent=1 // pred_fallthru
      _
    // Predicated region
    $region50: #{base_decoder_forward.1} parent=1 // pred_check
      _
    $region51: #{base_decoder_forward.1} parent=1 // pred_check_branch
      %100 = sbr.rel (0) target = $region53
    $region52: #{base_decoder_forward.1} parent=1 // pred_region
      %101 = dma.done [#allocation11], 96
    $region53: #{base_decoder_forward.1} parent=1 // pred_fallthru
      _
    %v102 = vld [vmem:[%s0] sm:$0xff]
    %v103 = vld [vmem:[#allocation2] sm:$0xff]
    %v104 = vld [vmem:[#allocation2 + $0x8] sm:$0xff]
    %v105 = vld [vmem:[#allocation2 + $0x10] sm:$0xff]
    %v106 = vld [vmem:[#allocation2 + $0x18] sm:$0xff]
    %v107 = vld [vmem:[#allocation2 + $0x20] sm:$0xff]
    %v108 = vld [vmem:[#allocation2 + $0x28] sm:$0xff]
    %v109 = vld [vmem:[#allocation2 + $0x30] sm:$0xff]
    %v110 = vld [vmem:[#allocation2 + $0x38] sm:$0xff]
    %v111 = vld [vmem:[#allocation2 + $0x40] sm:$0xff]
    %v112 = vld [vmem:[#allocation2 + $0x48] sm:$0xff]
    %v113 = vld [vmem:[#allocation2 + $0x50] sm:$0xff]
    %v114 = vld [vmem:[#allocation2 + $0x58] sm:$0xff]
    %v115 = vld [vmem:[#allocation2 + $0x60] sm:$0xff]
    %v116 = vld [vmem:[#allocation2 + $0x68] sm:$0xff]
    %v117 = vld [vmem:[#allocation2 + $0x70] sm:$0xff]
    %v118 = vld [vmem:[#allocation2 + $0x78] sm:$0xff]
    %v119 = vld [vmem:[#allocation4] sm:$0xf]
    %v121 = vlaneseq
    %v122 = vshrl.u32 %v121, 7
    %v123 = vsub.s32 0, %v122
    %v124 = vrot.slane %v119, %v123
    %v125 = vlaneseq
    %v126 = vshrl.u32 %v125, 7
    %v127 = vsub.s32 1, %v126
    %v128 = vrot.slane %v119, %v127
    %v129 = vlaneseq
    %v130 = vshrl.u32 %v129, 7
    %v131 = vsub.s32 2, %v130
    %v132 = vrot.slane %v119, %v131
    %v133 = vlaneseq
    %v134 = vshrl.u32 %v133, 7
    %v135 = vsub.s32 3, %v134
    %v136 = vrot.slane %v119, %v135
    %vm141 = vcmask 261120
    %v143 = vsel %vm141, %v102, 0
    %145 = vmatprep.subr.mxu0 0.0
    %146 = vmatpush1.msra.mxu0 0.0
    %147 = vmatprep.subr.mxu0 0.0
    %148 = vmatpush1.msra.mxu0 0.0
    %149 = vmatprep.subr.mxu0 0.0
    %150 = vmatpush1.msra.mxu0 0.0
    %151 = vmatprep.subr.mxu0 0.0
    %152 = vmatpush1.msra.mxu0 0.0
    %153 = vmatprep.subr.mxu0 0.0
    %154 = vmatpush1.msra.mxu0 0.0
    %155 = vmatprep.subr.mxu0 0.0
    %156 = vmatpush1.msra.mxu0 0.0
    %157 = vmatprep.subr.mxu0 0.0
    %158 = vmatpush1.msra.mxu0 0.0
    %159 = vmatprep.subr.mxu0 0.0
    %160 = vmatpush1.msra.mxu0 0.0
    %161 = vmatprep.subr.mxu0 0.0
    %162 = vmatpush1.msra.mxu0 0.0
    %163 = vmatprep.subr.mxu0 0.0
    %164 = vmatpush1.msra.mxu0 0.0
    %165 = vmatprep.subr.mxu0 0.0
    %166 = vmatpush1.msra.mxu0 0.0
    %167 = vmatprep.subr.mxu0 0.0
    %168 = vmatpush1.msra.mxu0 0.0
    %169 = vmatprep.subr.mxu0 %v116
    %170 = vmatpush1.msra.mxu0 %v115
    %171 = vmatprep.subr.mxu0 %v112
    %172 = vmatpush1.msra.mxu0 %v111
    %173 = vmatprep.subr.mxu0 %v108
    %174 = vmatpush1.msra.mxu0 %v107
    %175 = vmatprep.subr.mxu0 %v104
    %176 = vmatpush1.msra.mxu0 %v103
    %177 = vmatprep.subr.mxu0 0.0
    %178 = vmatpush2.msra.mxu0 0.0
    %179 = vmatprep.subr.mxu0 0.0
    %180 = vmatpush2.msra.mxu0 0.0
    %181 = vmatprep.subr.mxu0 0.0
    %182 = vmatpush2.msra.mxu0 0.0
    %183 = vmatprep.subr.mxu0 0.0
    %184 = vmatpush2.msra.mxu0 0.0
    %185 = vmatprep.subr.mxu0 0.0
    %186 = vmatpush2.msra.mxu0 0.0
    %187 = vmatprep.subr.mxu0 0.0
    %188 = vmatpush2.msra.mxu0 0.0
    %189 = vmatprep.subr.mxu0 0.0
    %190 = vmatpush2.msra.mxu0 0.0
    %191 = vmatprep.subr.mxu0 0.0
    %192 = vmatpush2.msra.mxu0 0.0
    %193 = vmatprep.subr.mxu0 0.0
    %194 = vmatpush2.msra.mxu0 0.0
    %195 = vmatprep.subr.mxu0 0.0
    %196 = vmatpush2.msra.mxu0 0.0
    %197 = vmatprep.subr.mxu0 0.0
    %198 = vmatpush2.msra.mxu0 0.0
    %199 = vmatprep.subr.mxu0 0.0
    %200 = vmatpush2.msra.mxu0 0.0
    %201 = vmatprep.subr.mxu0 0.0
    %202 = vmatpush2.msra.mxu0 0.0
    %203 = vmatprep.subr.mxu0 0.0
    %204 = vmatpush2.msra.mxu0 0.0
    %205 = vmatprep.subr.mxu0 0.0
    %206 = vmatpush2.msra.mxu0 0.0
    %207 = vmatprep.subr.mxu0 0.0
    %208 = vmatpush2.msra.mxu0 0.0
    %209 = vmatprep.mubr.f32.mxu0 0.0
    %210 = vmatmul.mubr.f32.gmra.mxu0 %v143
    %v211 = vpop.f32.mrf.mxu0
    %v212 = vadd.f32 %v124, %v211
    %v213 = vpop.f32.mrf.mxu0
    %v214 = vadd.f32 %v128, %v213
    %215 = vdwg.mxu0
    %216 = vmatprep.subr.mxu0 0.0
    %217 = vmatpush1.msra.mxu0 0.0
    %218 = vmatprep.subr.mxu0 0.0
    %219 = vmatpush1.msra.mxu0 0.0
    %220 = vmatprep.subr.mxu0 0.0
    %221 = vmatpush1.msra.mxu0 0.0
    %222 = vmatprep.subr.mxu0 0.0
    %223 = vmatpush1.msra.mxu0 0.0
    %224 = vmatprep.subr.mxu0 0.0
    %225 = vmatpush1.msra.mxu0 0.0
    %226 = vmatprep.subr.mxu0 0.0
    %227 = vmatpush1.msra.mxu0 0.0
    %228 = vmatprep.subr.mxu0 0.0
    %229 = vmatpush1.msra.mxu0 0.0
    %230 = vmatprep.subr.mxu0 0.0
    %231 = vmatpush1.msra.mxu0 0.0
    %232 = vmatprep.subr.mxu0 0.0
    %233 = vmatpush1.msra.mxu0 0.0
    %234 = vmatprep.subr.mxu0 0.0
    %235 = vmatpush1.msra.mxu0 0.0
    %236 = vmatprep.subr.mxu0 0.0
    %237 = vmatpush1.msra.mxu0 0.0
    %238 = vmatprep.subr.mxu0 0.0
    %239 = vmatpush1.msra.mxu0 0.0
    %240 = vmatprep.subr.mxu0 %v118
    %241 = vmatpush1.msra.mxu0 %v117
    %242 = vmatprep.subr.mxu0 %v114
    %243 = vmatpush1.msra.mxu0 %v113
    %244 = vmatprep.subr.mxu0 %v110
    %245 = vmatpush1.msra.mxu0 %v109
    %246 = vmatprep.subr.mxu0 %v106
    %247 = vmatpush1.msra.mxu0 %v105
    %248 = vmatprep.subr.mxu0 0.0
    %249 = vmatpush2.msra.mxu0 0.0
    %250 = vmatprep.subr.mxu0 0.0
    %251 = vmatpush2.msra.mxu0 0.0
    %252 = vmatprep.subr.mxu0 0.0
    %253 = vmatpush2.msra.mxu0 0.0
    %254 = vmatprep.subr.mxu0 0.0
    %255 = vmatpush2.msra.mxu0 0.0
    %256 = vmatprep.subr.mxu0 0.0
    %257 = vmatpush2.msra.mxu0 0.0
    %258 = vmatprep.subr.mxu0 0.0
    %259 = vmatpush2.msra.mxu0 0.0
    %260 = vmatprep.subr.mxu0 0.0
    %261 = vmatpush2.msra.mxu0 0.0
    %262 = vmatprep.subr.mxu0 0.0
    %263 = vmatpush2.msra.mxu0 0.0
    %264 = vmatprep.subr.mxu0 0.0
    %265 = vmatpush2.msra.mxu0 0.0
    %266 = vmatprep.subr.mxu0 0.0
    %267 = vmatpush2.msra.mxu0 0.0
    %268 = vmatprep.subr.mxu0 0.0
    %269 = vmatpush2.msra.mxu0 0.0
    %270 = vmatprep.subr.mxu0 0.0
    %271 = vmatpush2.msra.mxu0 0.0
    %272 = vmatprep.subr.mxu0 0.0
    %273 = vmatpush2.msra.mxu0 0.0
    %274 = vmatprep.subr.mxu0 0.0
    %275 = vmatpush2.msra.mxu0 0.0
    %276 = vmatprep.subr.mxu0 0.0
    %277 = vmatpush2.msra.mxu0 0.0
    %278 = vmatprep.subr.mxu0 0.0
    %279 = vmatpush2.msra.mxu0 0.0
    %280 = vmatprep.mubr.f32.mxu0 0.0
    %281 = vmatmul.mubr.f32.gmra.mxu0 %v143
    %v282 = vpop.f32.mrf.mxu0
    %v283 = vadd.f32 %v132, %v282
    %v284 = vpop.f32.mrf.mxu0
    %v285 = vadd.f32 %v136, %v284
    %286 = vdwg.mxu0
    %vm287 = vcmp.gt.f32.partialorder %v212, 0.0
    %vm288 = vcmp.gt.f32.partialorder %v214, 0.0
    %vm289 = vcmp.gt.f32.partialorder %v283, 0.0
    %vm290 = vcmp.gt.f32.partialorder %v285, 0.0
    %v291 = vmul.f32 %v212, 0.2
    %v292 = vmul.f32 %v214, 0.2
    %v293 = vmul.f32 %v283, 0.2
    %v294 = vmul.f32 %v285, 0.2
    %v295 = vsel %vm287, %v212, %v291
    %v296 = vsel %vm288, %v214, %v292
    %v297 = vsel %vm289, %v283, %v293
    %v298 = vsel %vm290, %v285, %v294
    %v299 = vld [vmem:[#allocation6] sm:$0xff]
    %v300 = vld [vmem:[#allocation6 + $0x8] sm:$0xff]
    %v301 = vld [vmem:[#allocation6 + $0x10] sm:$0xff]
    %v302 = vld [vmem:[#allocation6 + $0x18] sm:$0xff]
    %v303 = vld [vmem:[#allocation6 + $0x20] sm:$0xff]
    %v304 = vld [vmem:[#allocation6 + $0x28] sm:$0xff]
    %v305 = vld [vmem:[#allocation6 + $0x30] sm:$0xff]
    %v306 = vld [vmem:[#allocation6 + $0x38] sm:$0xff]
    %v307 = vld [vmem:[#allocation6 + $0x40] sm:$0xff]
    %v308 = vld [vmem:[#allocation6 + $0x48] sm:$0xff]
    %v309 = vld [vmem:[#allocation6 + $0x50] sm:$0xff]
    %v310 = vld [vmem:[#allocation6 + $0x58] sm:$0xff]
    %v311 = vld [vmem:[#allocation6 + $0x60] sm:$0xff]
    %v312 = vld [vmem:[#allocation6 + $0x68] sm:$0xff]
    %v313 = vld [vmem:[#allocation6 + $0x70] sm:$0xff]
    %v314 = vld [vmem:[#allocation6 + $0x78] sm:$0xff]
    %v315 = vld [vmem:[#allocation6 + $0x80] sm:$0xff]
    %v316 = vld [vmem:[#allocation6 + $0x88] sm:$0xff]
    %v317 = vld [vmem:[#allocation6 + $0x90] sm:$0xff]
    %v318 = vld [vmem:[#allocation6 + $0x98] sm:$0xff]
    %v319 = vld [vmem:[#allocation6 + $0xa0] sm:$0xff]
    %v320 = vld [vmem:[#allocation6 + $0xa8] sm:$0xff]
    %v321 = vld [vmem:[#allocation6 + $0xb0] sm:$0xff]
    %v322 = vld [vmem:[#allocation6 + $0xb8] sm:$0xff]
    %v323 = vld [vmem:[#allocation6 + $0xc0] sm:$0xff]
    %v324 = vld [vmem:[#allocation6 + $0xc8] sm:$0xff]
    %v325 = vld [vmem:[#allocation6 + $0xd0] sm:$0xff]
    %v326 = vld [vmem:[#allocation6 + $0xd8] sm:$0xff]
    %v327 = vld [vmem:[#allocation6 + $0xe0] sm:$0xff]
    %v328 = vld [vmem:[#allocation6 + $0xe8] sm:$0xff]
    %v329 = vld [vmem:[#allocation6 + $0xf0] sm:$0xff]
    %v330 = vld [vmem:[#allocation6 + $0xf8] sm:$0xff]
    %v331 = vld [vmem:[#allocation6 + $0x100] sm:$0xff]
    %v332 = vld [vmem:[#allocation6 + $0x108] sm:$0xff]
    %v333 = vld [vmem:[#allocation6 + $0x110] sm:$0xff]
    %v334 = vld [vmem:[#allocation6 + $0x118] sm:$0xff]
    %v335 = vld [vmem:[#allocation6 + $0x120] sm:$0xff]
    %v336 = vld [vmem:[#allocation6 + $0x128] sm:$0xff]
    %v337 = vld [vmem:[#allocation6 + $0x130] sm:$0xff]
    %v338 = vld [vmem:[#allocation6 + $0x138] sm:$0xff]
    %v339 = vld [vmem:[#allocation6 + $0x140] sm:$0xff]
    %v340 = vld [vmem:[#allocation6 + $0x148] sm:$0xff]
    %v341 = vld [vmem:[#allocation6 + $0x150] sm:$0xff]
    %v342 = vld [vmem:[#allocation6 + $0x158] sm:$0xff]
    %v343 = vld [vmem:[#allocation6 + $0x160] sm:$0xff]
    %v344 = vld [vmem:[#allocation6 + $0x168] sm:$0xff]
    %v345 = vld [vmem:[#allocation6 + $0x170] sm:$0xff]
    %v346 = vld [vmem:[#allocation6 + $0x178] sm:$0xff]
    %v347 = vld [vmem:[#allocation6 + $0x180] sm:$0xff]
    %v348 = vld [vmem:[#allocation6 + $0x188] sm:$0xff]
    %v349 = vld [vmem:[#allocation6 + $0x190] sm:$0xff]
    %v350 = vld [vmem:[#allocation6 + $0x198] sm:$0xff]
    %v351 = vld [vmem:[#allocation6 + $0x1a0] sm:$0xff]
    %v352 = vld [vmem:[#allocation6 + $0x1a8] sm:$0xff]
    %v353 = vld [vmem:[#allocation6 + $0x1b0] sm:$0xff]
    %v354 = vld [vmem:[#allocation6 + $0x1b8] sm:$0xff]
    %v355 = vld [vmem:[#allocation6 + $0x1c0] sm:$0xff]
    %v356 = vld [vmem:[#allocation6 + $0x1c8] sm:$0xff]
    %v357 = vld [vmem:[#allocation6 + $0x1d0] sm:$0xff]
    %v358 = vld [vmem:[#allocation6 + $0x1d8] sm:$0xff]
    %v359 = vld [vmem:[#allocation6 + $0x1e0] sm:$0xff]
    %v360 = vld [vmem:[#allocation6 + $0x1e8] sm:$0xff]
    %v361 = vld [vmem:[#allocation6 + $0x1f0] sm:$0xff]
    %v362 = vld [vmem:[#allocation6 + $0x1f8] sm:$0xff]
    %v363 = vld [vmem:[#allocation6 + $0x200] sm:$0xff]
    %v364 = vld [vmem:[#allocation6 + $0x208] sm:$0xff]
    %v365 = vld [vmem:[#allocation6 + $0x210] sm:$0xff]
    %v366 = vld [vmem:[#allocation6 + $0x218] sm:$0xff]
    %v367 = vld [vmem:[#allocation6 + $0x220] sm:$0xff]
    %v368 = vld [vmem:[#allocation6 + $0x228] sm:$0xff]
    %v369 = vld [vmem:[#allocation6 + $0x230] sm:$0xff]
    %v370 = vld [vmem:[#allocation6 + $0x238] sm:$0xff]
    %v371 = vld [vmem:[#allocation6 + $0x240] sm:$0xff]
    %v372 = vld [vmem:[#allocation6 + $0x248] sm:$0xff]
    %v373 = vld [vmem:[#allocation6 + $0x250] sm:$0xff]
    %v374 = vld [vmem:[#allocation6 + $0x258] sm:$0xff]
    %v375 = vld [vmem:[#allocation6 + $0x260] sm:$0xff]
    %v376 = vld [vmem:[#allocation6 + $0x268] sm:$0xff]
    %v377 = vld [vmem:[#allocation6 + $0x270] sm:$0xff]
    %v378 = vld [vmem:[#allocation6 + $0x278] sm:$0xff]
    %v379 = vld [vmem:[#allocation6 + $0x280] sm:$0xff]
    %v380 = vld [vmem:[#allocation6 + $0x288] sm:$0xff]
    %v381 = vld [vmem:[#allocation6 + $0x290] sm:$0xff]
    %v382 = vld [vmem:[#allocation6 + $0x298] sm:$0xff]
    %v383 = vld [vmem:[#allocation6 + $0x2a0] sm:$0xff]
    %v384 = vld [vmem:[#allocation6 + $0x2a8] sm:$0xff]
    %v385 = vld [vmem:[#allocation6 + $0x2b0] sm:$0xff]
    %v386 = vld [vmem:[#allocation6 + $0x2b8] sm:$0xff]
    %v387 = vld [vmem:[#allocation6 + $0x2c0] sm:$0xff]
    %v388 = vld [vmem:[#allocation6 + $0x2c8] sm:$0xff]
    %v389 = vld [vmem:[#allocation6 + $0x2d0] sm:$0xff]
    %v390 = vld [vmem:[#allocation6 + $0x2d8] sm:$0xff]
    %v391 = vld [vmem:[#allocation6 + $0x2e0] sm:$0xff]
    %v392 = vld [vmem:[#allocation6 + $0x2e8] sm:$0xff]
    %v393 = vld [vmem:[#allocation6 + $0x2f0] sm:$0xff]
    %v394 = vld [vmem:[#allocation6 + $0x2f8] sm:$0xff]
    %v395 = vld [vmem:[#allocation6 + $0x300] sm:$0xff]
    %v396 = vld [vmem:[#allocation6 + $0x308] sm:$0xff]
    %v397 = vld [vmem:[#allocation6 + $0x310] sm:$0xff]
    %v398 = vld [vmem:[#allocation6 + $0x318] sm:$0xff]
    %v399 = vld [vmem:[#allocation6 + $0x320] sm:$0xff]
    %v400 = vld [vmem:[#allocation6 + $0x328] sm:$0xff]
    %v401 = vld [vmem:[#allocation6 + $0x330] sm:$0xff]
    %v402 = vld [vmem:[#allocation6 + $0x338] sm:$0xff]
    %v403 = vld [vmem:[#allocation6 + $0x340] sm:$0xff]
    %v404 = vld [vmem:[#allocation6 + $0x348] sm:$0xff]
    %v405 = vld [vmem:[#allocation6 + $0x350] sm:$0xff]
    %v406 = vld [vmem:[#allocation6 + $0x358] sm:$0xff]
    %v407 = vld [vmem:[#allocation6 + $0x360] sm:$0xff]
    %v408 = vld [vmem:[#allocation6 + $0x368] sm:$0xff]
    %v409 = vld [vmem:[#allocation6 + $0x370] sm:$0xff]
    %v410 = vld [vmem:[#allocation6 + $0x378] sm:$0xff]
    %v411 = vld [vmem:[#allocation6 + $0x380] sm:$0xff]
    %v412 = vld [vmem:[#allocation6 + $0x388] sm:$0xff]
    %v413 = vld [vmem:[#allocation6 + $0x390] sm:$0xff]
    %v414 = vld [vmem:[#allocation6 + $0x398] sm:$0xff]
    %v415 = vld [vmem:[#allocation6 + $0x3a0] sm:$0xff]
    %v416 = vld [vmem:[#allocation6 + $0x3a8] sm:$0xff]
    %v417 = vld [vmem:[#allocation6 + $0x3b0] sm:$0xff]
    %v418 = vld [vmem:[#allocation6 + $0x3b8] sm:$0xff]
    %v419 = vld [vmem:[#allocation6 + $0x3c0] sm:$0xff]
    %v420 = vld [vmem:[#allocation6 + $0x3c8] sm:$0xff]
    %v421 = vld [vmem:[#allocation6 + $0x3d0] sm:$0xff]
    %v422 = vld [vmem:[#allocation6 + $0x3d8] sm:$0xff]
    %v423 = vld [vmem:[#allocation6 + $0x3e0] sm:$0xff]
    %v424 = vld [vmem:[#allocation6 + $0x3e8] sm:$0xff]
    %v425 = vld [vmem:[#allocation6 + $0x3f0] sm:$0xff]
    %v426 = vld [vmem:[#allocation6 + $0x3f8] sm:$0xff]
    %v427 = vld [vmem:[#allocation6 + $0x400] sm:$0xff]
    %v428 = vld [vmem:[#allocation6 + $0x408] sm:$0xff]
    %v429 = vld [vmem:[#allocation6 + $0x410] sm:$0xff]
    %v430 = vld [vmem:[#allocation6 + $0x418] sm:$0xff]
    %v431 = vld [vmem:[#allocation6 + $0x420] sm:$0xff]
    %v432 = vld [vmem:[#allocation6 + $0x428] sm:$0xff]
    %v433 = vld [vmem:[#allocation6 + $0x430] sm:$0xff]
    %v434 = vld [vmem:[#allocation6 + $0x438] sm:$0xff]
    %v435 = vld [vmem:[#allocation6 + $0x440] sm:$0xff]
    %v436 = vld [vmem:[#allocation6 + $0x448] sm:$0xff]
    %v437 = vld [vmem:[#allocation6 + $0x450] sm:$0xff]
    %v438 = vld [vmem:[#allocation6 + $0x458] sm:$0xff]
    %v439 = vld [vmem:[#allocation6 + $0x460] sm:$0xff]
    %v440 = vld [vmem:[#allocation6 + $0x468] sm:$0xff]
    %v441 = vld [vmem:[#allocation6 + $0x470] sm:$0xff]
    %v442 = vld [vmem:[#allocation6 + $0x478] sm:$0xff]
    %v443 = vld [vmem:[#allocation6 + $0x480] sm:$0xff]
    %v444 = vld [vmem:[#allocation6 + $0x488] sm:$0xff]
    %v445 = vld [vmem:[#allocation6 + $0x490] sm:$0xff]
    %v446 = vld [vmem:[#allocation6 + $0x498] sm:$0xff]
    %v447 = vld [vmem:[#allocation6 + $0x4a0] sm:$0xff]
    %v448 = vld [vmem:[#allocation6 + $0x4a8] sm:$0xff]
    %v449 = vld [vmem:[#allocation6 + $0x4b0] sm:$0xff]
    %v450 = vld [vmem:[#allocation6 + $0x4b8] sm:$0xff]
    %v451 = vld [vmem:[#allocation6 + $0x4c0] sm:$0xff]
    %v452 = vld [vmem:[#allocation6 + $0x4c8] sm:$0xff]
    %v453 = vld [vmem:[#allocation6 + $0x4d0] sm:$0xff]
    %v454 = vld [vmem:[#allocation6 + $0x4d8] sm:$0xff]
    %v455 = vld [vmem:[#allocation6 + $0x4e0] sm:$0xff]
    %v456 = vld [vmem:[#allocation6 + $0x4e8] sm:$0xff]
    %v457 = vld [vmem:[#allocation6 + $0x4f0] sm:$0xff]
    %v458 = vld [vmem:[#allocation6 + $0x4f8] sm:$0xff]
    %v459 = vld [vmem:[#allocation6 + $0x500] sm:$0xff]
    %v460 = vld [vmem:[#allocation6 + $0x508] sm:$0xff]
    %v461 = vld [vmem:[#allocation6 + $0x510] sm:$0xff]
    %v462 = vld [vmem:[#allocation6 + $0x518] sm:$0xff]
    %v463 = vld [vmem:[#allocation6 + $0x520] sm:$0xff]
    %v464 = vld [vmem:[#allocation6 + $0x528] sm:$0xff]
    %v465 = vld [vmem:[#allocation6 + $0x530] sm:$0xff]
    %v466 = vld [vmem:[#allocation6 + $0x538] sm:$0xff]
    %v467 = vld [vmem:[#allocation6 + $0x540] sm:$0xff]
    %v468 = vld [vmem:[#allocation6 + $0x548] sm:$0xff]
    %v469 = vld [vmem:[#allocation6 + $0x550] sm:$0xff]
    %v470 = vld [vmem:[#allocation6 + $0x558] sm:$0xff]
    %v471 = vld [vmem:[#allocation6 + $0x560] sm:$0xff]
    %v472 = vld [vmem:[#allocation6 + $0x568] sm:$0xff]
    %v473 = vld [vmem:[#allocation6 + $0x570] sm:$0xff]
    %v474 = vld [vmem:[#allocation6 + $0x578] sm:$0xff]
    %v475 = vld [vmem:[#allocation6 + $0x580] sm:$0xff]
    %v476 = vld [vmem:[#allocation6 + $0x588] sm:$0xff]
    %v477 = vld [vmem:[#allocation6 + $0x590] sm:$0xff]
    %v478 = vld [vmem:[#allocation6 + $0x598] sm:$0xff]
    %v479 = vld [vmem:[#allocation6 + $0x5a0] sm:$0xff]
    %v480 = vld [vmem:[#allocation6 + $0x5a8] sm:$0xff]
    %v481 = vld [vmem:[#allocation6 + $0x5b0] sm:$0xff]
    %v482 = vld [vmem:[#allocation6 + $0x5b8] sm:$0xff]
    %v483 = vld [vmem:[#allocation6 + $0x5c0] sm:$0xff]
    %v484 = vld [vmem:[#allocation6 + $0x5c8] sm:$0xff]
    %v485 = vld [vmem:[#allocation6 + $0x5d0] sm:$0xff]
    %v486 = vld [vmem:[#allocation6 + $0x5d8] sm:$0xff]
    %v487 = vld [vmem:[#allocation6 + $0x5e0] sm:$0xff]
    %v488 = vld [vmem:[#allocation6 + $0x5e8] sm:$0xff]
    %v489 = vld [vmem:[#allocation6 + $0x5f0] sm:$0xff]
    %v490 = vld [vmem:[#allocation6 + $0x5f8] sm:$0xff]
    %v491 = vld [vmem:[#allocation6 + $0x600] sm:$0xff]
    %v492 = vld [vmem:[#allocation6 + $0x608] sm:$0xff]
    %v493 = vld [vmem:[#allocation6 + $0x610] sm:$0xff]
    %v494 = vld [vmem:[#allocation6 + $0x618] sm:$0xff]
    %v495 = vld [vmem:[#allocation6 + $0x620] sm:$0xff]
    %v496 = vld [vmem:[#allocation6 + $0x628] sm:$0xff]
    %v497 = vld [vmem:[#allocation6 + $0x630] sm:$0xff]
    %v498 = vld [vmem:[#allocation6 + $0x638] sm:$0xff]
    %v499 = vld [vmem:[#allocation6 + $0x640] sm:$0xff]
    %v500 = vld [vmem:[#allocation6 + $0x648] sm:$0xff]
    %v501 = vld [vmem:[#allocation6 + $0x650] sm:$0xff]
    %v502 = vld [vmem:[#allocation6 + $0x658] sm:$0xff]
    %v503 = vld [vmem:[#allocation6 + $0x660] sm:$0xff]
    %v504 = vld [vmem:[#allocation6 + $0x668] sm:$0xff]
    %v505 = vld [vmem:[#allocation6 + $0x670] sm:$0xff]
    %v506 = vld [vmem:[#allocation6 + $0x678] sm:$0xff]
    %v507 = vld [vmem:[#allocation6 + $0x680] sm:$0xff]
    %v508 = vld [vmem:[#allocation6 + $0x688] sm:$0xff]
    %v509 = vld [vmem:[#allocation6 + $0x690] sm:$0xff]
    %v510 = vld [vmem:[#allocation6 + $0x698] sm:$0xff]
    %v511 = vld [vmem:[#allocation6 + $0x6a0] sm:$0xff]
    %v512 = vld [vmem:[#allocation6 + $0x6a8] sm:$0xff]
    %v513 = vld [vmem:[#allocation6 + $0x6b0] sm:$0xff]
    %v514 = vld [vmem:[#allocation6 + $0x6b8] sm:$0xff]
    %v515 = vld [vmem:[#allocation6 + $0x6c0] sm:$0xff]
    %v516 = vld [vmem:[#allocation6 + $0x6c8] sm:$0xff]
    %v517 = vld [vmem:[#allocation6 + $0x6d0] sm:$0xff]
    %v518 = vld [vmem:[#allocation6 + $0x6d8] sm:$0xff]
    %v519 = vld [vmem:[#allocation6 + $0x6e0] sm:$0xff]
    %v520 = vld [vmem:[#allocation6 + $0x6e8] sm:$0xff]
    %v521 = vld [vmem:[#allocation6 + $0x6f0] sm:$0xff]
    %v522 = vld [vmem:[#allocation6 + $0x6f8] sm:$0xff]
    %v523 = vld [vmem:[#allocation6 + $0x700] sm:$0xff]
    %v524 = vld [vmem:[#allocation6 + $0x708] sm:$0xff]
    %v525 = vld [vmem:[#allocation6 + $0x710] sm:$0xff]
    %v526 = vld [vmem:[#allocation6 + $0x718] sm:$0xff]
    %v527 = vld [vmem:[#allocation6 + $0x720] sm:$0xff]
    %v528 = vld [vmem:[#allocation6 + $0x728] sm:$0xff]
    %v529 = vld [vmem:[#allocation6 + $0x730] sm:$0xff]
    %v530 = vld [vmem:[#allocation6 + $0x738] sm:$0xff]
    %v531 = vld [vmem:[#allocation6 + $0x740] sm:$0xff]
    %v532 = vld [vmem:[#allocation6 + $0x748] sm:$0xff]
    %v533 = vld [vmem:[#allocation6 + $0x750] sm:$0xff]
    %v534 = vld [vmem:[#allocation6 + $0x758] sm:$0xff]
    %v535 = vld [vmem:[#allocation6 + $0x760] sm:$0xff]
    %v536 = vld [vmem:[#allocation6 + $0x768] sm:$0xff]
    %v537 = vld [vmem:[#allocation6 + $0x770] sm:$0xff]
    %v538 = vld [vmem:[#allocation6 + $0x778] sm:$0xff]
    %v539 = vld [vmem:[#allocation6 + $0x780] sm:$0xff]
    %v540 = vld [vmem:[#allocation6 + $0x788] sm:$0xff]
    %v541 = vld [vmem:[#allocation6 + $0x790] sm:$0xff]
    %v542 = vld [vmem:[#allocation6 + $0x798] sm:$0xff]
    %v543 = vld [vmem:[#allocation6 + $0x7a0] sm:$0xff]
    %v544 = vld [vmem:[#allocation6 + $0x7a8] sm:$0xff]
    %v545 = vld [vmem:[#allocation6 + $0x7b0] sm:$0xff]
    %v546 = vld [vmem:[#allocation6 + $0x7b8] sm:$0xff]
    %v547 = vld [vmem:[#allocation6 + $0x7c0] sm:$0xff]
    %v548 = vld [vmem:[#allocation6 + $0x7c8] sm:$0xff]
    %v549 = vld [vmem:[#allocation6 + $0x7d0] sm:$0xff]
    %v550 = vld [vmem:[#allocation6 + $0x7d8] sm:$0xff]
    %v551 = vld [vmem:[#allocation6 + $0x7e0] sm:$0xff]
    %v552 = vld [vmem:[#allocation6 + $0x7e8] sm:$0xff]
    %v553 = vld [vmem:[#allocation6 + $0x7f0] sm:$0xff]
    %v554 = vld [vmem:[#allocation6 + $0x7f8] sm:$0xff]
    %v555 = vld [vmem:[#allocation6 + $0x800] sm:$0xff]
    %v556 = vld [vmem:[#allocation6 + $0x808] sm:$0xff]
    %v557 = vld [vmem:[#allocation6 + $0x810] sm:$0xff]
    %v558 = vld [vmem:[#allocation6 + $0x818] sm:$0xff]
    %v559 = vld [vmem:[#allocation6 + $0x820] sm:$0xff]
    %v560 = vld [vmem:[#allocation6 + $0x828] sm:$0xff]
    %v561 = vld [vmem:[#allocation6 + $0x830] sm:$0xff]
    %v562 = vld [vmem:[#allocation6 + $0x838] sm:$0xff]
    %v563 = vld [vmem:[#allocation6 + $0x840] sm:$0xff]
    %v564 = vld [vmem:[#allocation6 + $0x848] sm:$0xff]
    %v565 = vld [vmem:[#allocation6 + $0x850] sm:$0xff]
    %v566 = vld [vmem:[#allocation6 + $0x858] sm:$0xff]
    %v567 = vld [vmem:[#allocation6 + $0x860] sm:$0xff]
    %v568 = vld [vmem:[#allocation6 + $0x868] sm:$0xff]
    %v569 = vld [vmem:[#allocation6 + $0x870] sm:$0xff]
    %v570 = vld [vmem:[#allocation6 + $0x878] sm:$0xff]
    %v571 = vld [vmem:[#allocation6 + $0x880] sm:$0xff]
    %v572 = vld [vmem:[#allocation6 + $0x888] sm:$0xff]
    %v573 = vld [vmem:[#allocation6 + $0x890] sm:$0xff]
    %v574 = vld [vmem:[#allocation6 + $0x898] sm:$0xff]
    %v575 = vld [vmem:[#allocation6 + $0x8a0] sm:$0xff]
    %v576 = vld [vmem:[#allocation6 + $0x8a8] sm:$0xff]
    %v577 = vld [vmem:[#allocation6 + $0x8b0] sm:$0xff]
    %v578 = vld [vmem:[#allocation6 + $0x8b8] sm:$0xff]
    %v579 = vld [vmem:[#allocation6 + $0x8c0] sm:$0xff]
    %v580 = vld [vmem:[#allocation6 + $0x8c8] sm:$0xff]
    %v581 = vld [vmem:[#allocation6 + $0x8d0] sm:$0xff]
    %v582 = vld [vmem:[#allocation6 + $0x8d8] sm:$0xff]
    %v583 = vld [vmem:[#allocation6 + $0x8e0] sm:$0xff]
    %v584 = vld [vmem:[#allocation6 + $0x8e8] sm:$0xff]
    %v585 = vld [vmem:[#allocation6 + $0x8f0] sm:$0xff]
    %v586 = vld [vmem:[#allocation6 + $0x8f8] sm:$0xff]
    %v587 = vld [vmem:[#allocation6 + $0x900] sm:$0xff]
    %v588 = vld [vmem:[#allocation6 + $0x908] sm:$0xff]
    %v589 = vld [vmem:[#allocation6 + $0x910] sm:$0xff]
    %v590 = vld [vmem:[#allocation6 + $0x918] sm:$0xff]
    %v591 = vld [vmem:[#allocation6 + $0x920] sm:$0xff]
    %v592 = vld [vmem:[#allocation6 + $0x928] sm:$0xff]
    %v593 = vld [vmem:[#allocation6 + $0x930] sm:$0xff]
    %v594 = vld [vmem:[#allocation6 + $0x938] sm:$0xff]
    %v595 = vld [vmem:[#allocation6 + $0x940] sm:$0xff]
    %v596 = vld [vmem:[#allocation6 + $0x948] sm:$0xff]
    %v597 = vld [vmem:[#allocation6 + $0x950] sm:$0xff]
    %v598 = vld [vmem:[#allocation6 + $0x958] sm:$0xff]
    %v599 = vld [vmem:[#allocation6 + $0x960] sm:$0xff]
    %v600 = vld [vmem:[#allocation6 + $0x968] sm:$0xff]
    %v601 = vld [vmem:[#allocation6 + $0x970] sm:$0xff]
    %v602 = vld [vmem:[#allocation6 + $0x978] sm:$0xff]
    %v603 = vld [vmem:[#allocation6 + $0x980] sm:$0xff]
    %v604 = vld [vmem:[#allocation6 + $0x988] sm:$0xff]
    %v605 = vld [vmem:[#allocation6 + $0x990] sm:$0xff]
    %v606 = vld [vmem:[#allocation6 + $0x998] sm:$0xff]
    %v607 = vld [vmem:[#allocation6 + $0x9a0] sm:$0xff]
    %v608 = vld [vmem:[#allocation6 + $0x9a8] sm:$0xff]
    %v609 = vld [vmem:[#allocation6 + $0x9b0] sm:$0xff]
    %v610 = vld [vmem:[#allocation6 + $0x9b8] sm:$0xff]
    %v611 = vld [vmem:[#allocation6 + $0x9c0] sm:$0xff]
    %v612 = vld [vmem:[#allocation6 + $0x9c8] sm:$0xff]
    %v613 = vld [vmem:[#allocation6 + $0x9d0] sm:$0xff]
    %v614 = vld [vmem:[#allocation6 + $0x9d8] sm:$0xff]
    %v615 = vld [vmem:[#allocation6 + $0x9e0] sm:$0xff]
    %v616 = vld [vmem:[#allocation6 + $0x9e8] sm:$0xff]
    %v617 = vld [vmem:[#allocation6 + $0x9f0] sm:$0xff]
    %v618 = vld [vmem:[#allocation6 + $0x9f8] sm:$0xff]
    %v619 = vld [vmem:[#allocation6 + $0xa00] sm:$0xff]
    %v620 = vld [vmem:[#allocation6 + $0xa08] sm:$0xff]
    %v621 = vld [vmem:[#allocation6 + $0xa10] sm:$0xff]
    %v622 = vld [vmem:[#allocation6 + $0xa18] sm:$0xff]
    %v623 = vld [vmem:[#allocation6 + $0xa20] sm:$0xff]
    %v624 = vld [vmem:[#allocation6 + $0xa28] sm:$0xff]
    %v625 = vld [vmem:[#allocation6 + $0xa30] sm:$0xff]
    %v626 = vld [vmem:[#allocation6 + $0xa38] sm:$0xff]
    %v627 = vld [vmem:[#allocation6 + $0xa40] sm:$0xff]
    %v628 = vld [vmem:[#allocation6 + $0xa48] sm:$0xff]
    %v629 = vld [vmem:[#allocation6 + $0xa50] sm:$0xff]
    %v630 = vld [vmem:[#allocation6 + $0xa58] sm:$0xff]
    %v631 = vld [vmem:[#allocation6 + $0xa60] sm:$0xff]
    %v632 = vld [vmem:[#allocation6 + $0xa68] sm:$0xff]
    %v633 = vld [vmem:[#allocation6 + $0xa70] sm:$0xff]
    %v634 = vld [vmem:[#allocation6 + $0xa78] sm:$0xff]
    %v635 = vld [vmem:[#allocation6 + $0xa80] sm:$0xff]
    %v636 = vld [vmem:[#allocation6 + $0xa88] sm:$0xff]
    %v637 = vld [vmem:[#allocation6 + $0xa90] sm:$0xff]
    %v638 = vld [vmem:[#allocation6 + $0xa98] sm:$0xff]
    %v639 = vld [vmem:[#allocation6 + $0xaa0] sm:$0xff]
    %v640 = vld [vmem:[#allocation6 + $0xaa8] sm:$0xff]
    %v641 = vld [vmem:[#allocation6 + $0xab0] sm:$0xff]
    %v642 = vld [vmem:[#allocation6 + $0xab8] sm:$0xff]
    %v643 = vld [vmem:[#allocation6 + $0xac0] sm:$0xff]
    %v644 = vld [vmem:[#allocation6 + $0xac8] sm:$0xff]
    %v645 = vld [vmem:[#allocation6 + $0xad0] sm:$0xff]
    %v646 = vld [vmem:[#allocation6 + $0xad8] sm:$0xff]
    %v647 = vld [vmem:[#allocation6 + $0xae0] sm:$0xff]
    %v648 = vld [vmem:[#allocation6 + $0xae8] sm:$0xff]
    %v649 = vld [vmem:[#allocation6 + $0xaf0] sm:$0xff]
    %v650 = vld [vmem:[#allocation6 + $0xaf8] sm:$0xff]
    %v651 = vld [vmem:[#allocation6 + $0xb00] sm:$0xff]
    %v652 = vld [vmem:[#allocation6 + $0xb08] sm:$0xff]
    %v653 = vld [vmem:[#allocation6 + $0xb10] sm:$0xff]
    %v654 = vld [vmem:[#allocation6 + $0xb18] sm:$0xff]
    %v655 = vld [vmem:[#allocation6 + $0xb20] sm:$0xff]
    %v656 = vld [vmem:[#allocation6 + $0xb28] sm:$0xff]
    %v657 = vld [vmem:[#allocation6 + $0xb30] sm:$0xff]
    %v658 = vld [vmem:[#allocation6 + $0xb38] sm:$0xff]
    %v659 = vld [vmem:[#allocation6 + $0xb40] sm:$0xff]
    %v660 = vld [vmem:[#allocation6 + $0xb48] sm:$0xff]
    %v661 = vld [vmem:[#allocation6 + $0xb50] sm:$0xff]
    %v662 = vld [vmem:[#allocation6 + $0xb58] sm:$0xff]
    %v663 = vld [vmem:[#allocation6 + $0xb60] sm:$0xff]
    %v664 = vld [vmem:[#allocation6 + $0xb68] sm:$0xff]
    %v665 = vld [vmem:[#allocation6 + $0xb70] sm:$0xff]
    %v666 = vld [vmem:[#allocation6 + $0xb78] sm:$0xff]
    %v667 = vld [vmem:[#allocation6 + $0xb80] sm:$0xff]
    %v668 = vld [vmem:[#allocation6 + $0xb88] sm:$0xff]
    %v669 = vld [vmem:[#allocation6 + $0xb90] sm:$0xff]
    %v670 = vld [vmem:[#allocation6 + $0xb98] sm:$0xff]
    %v671 = vld [vmem:[#allocation6 + $0xba0] sm:$0xff]
    %v672 = vld [vmem:[#allocation6 + $0xba8] sm:$0xff]
    %v673 = vld [vmem:[#allocation6 + $0xbb0] sm:$0xff]
    %v674 = vld [vmem:[#allocation6 + $0xbb8] sm:$0xff]
    %v675 = vld [vmem:[#allocation6 + $0xbc0] sm:$0xff]
    %v676 = vld [vmem:[#allocation6 + $0xbc8] sm:$0xff]
    %v677 = vld [vmem:[#allocation6 + $0xbd0] sm:$0xff]
    %v678 = vld [vmem:[#allocation6 + $0xbd8] sm:$0xff]
    %v679 = vld [vmem:[#allocation6 + $0xbe0] sm:$0xff]
    %v680 = vld [vmem:[#allocation6 + $0xbe8] sm:$0xff]
    %v681 = vld [vmem:[#allocation6 + $0xbf0] sm:$0xff]
    %v682 = vld [vmem:[#allocation6 + $0xbf8] sm:$0xff]
    %v683 = vld [vmem:[#allocation6 + $0xc00] sm:$0xff]
    %v684 = vld [vmem:[#allocation6 + $0xc08] sm:$0xff]
    %v685 = vld [vmem:[#allocation6 + $0xc10] sm:$0xff]
    %v686 = vld [vmem:[#allocation6 + $0xc18] sm:$0xff]
    %v687 = vld [vmem:[#allocation6 + $0xc20] sm:$0xff]
    %v688 = vld [vmem:[#allocation6 + $0xc28] sm:$0xff]
    %v689 = vld [vmem:[#allocation6 + $0xc30] sm:$0xff]
    %v690 = vld [vmem:[#allocation6 + $0xc38] sm:$0xff]
    %v691 = vld [vmem:[#allocation6 + $0xc40] sm:$0xff]
    %v692 = vld [vmem:[#allocation6 + $0xc48] sm:$0xff]
    %v693 = vld [vmem:[#allocation6 + $0xc50] sm:$0xff]
    %v694 = vld [vmem:[#allocation6 + $0xc58] sm:$0xff]
    %v695 = vld [vmem:[#allocation6 + $0xc60] sm:$0xff]
    %v696 = vld [vmem:[#allocation6 + $0xc68] sm:$0xff]
    %v697 = vld [vmem:[#allocation6 + $0xc70] sm:$0xff]
    %v698 = vld [vmem:[#allocation6 + $0xc78] sm:$0xff]
    %v699 = vld [vmem:[#allocation6 + $0xc80] sm:$0xff]
    %v700 = vld [vmem:[#allocation6 + $0xc88] sm:$0xff]
    %v701 = vld [vmem:[#allocation6 + $0xc90] sm:$0xff]
    %v702 = vld [vmem:[#allocation6 + $0xc98] sm:$0xff]
    %v703 = vld [vmem:[#allocation6 + $0xca0] sm:$0xff]
    %v704 = vld [vmem:[#allocation6 + $0xca8] sm:$0xff]
    %v705 = vld [vmem:[#allocation6 + $0xcb0] sm:$0xff]
    %v706 = vld [vmem:[#allocation6 + $0xcb8] sm:$0xff]
    %v707 = vld [vmem:[#allocation6 + $0xcc0] sm:$0xff]
    %v708 = vld [vmem:[#allocation6 + $0xcc8] sm:$0xff]
    %v709 = vld [vmem:[#allocation6 + $0xcd0] sm:$0xff]
    %v710 = vld [vmem:[#allocation6 + $0xcd8] sm:$0xff]
    %v711 = vld [vmem:[#allocation6 + $0xce0] sm:$0xff]
    %v712 = vld [vmem:[#allocation6 + $0xce8] sm:$0xff]
    %v713 = vld [vmem:[#allocation6 + $0xcf0] sm:$0xff]
    %v714 = vld [vmem:[#allocation6 + $0xcf8] sm:$0xff]
    %v715 = vld [vmem:[#allocation6 + $0xd00] sm:$0xff]
    %v716 = vld [vmem:[#allocation6 + $0xd08] sm:$0xff]
    %v717 = vld [vmem:[#allocation6 + $0xd10] sm:$0xff]
    %v718 = vld [vmem:[#allocation6 + $0xd18] sm:$0xff]
    %v719 = vld [vmem:[#allocation6 + $0xd20] sm:$0xff]
    %v720 = vld [vmem:[#allocation6 + $0xd28] sm:$0xff]
    %v721 = vld [vmem:[#allocation6 + $0xd30] sm:$0xff]
    %v722 = vld [vmem:[#allocation6 + $0xd38] sm:$0xff]
    %v723 = vld [vmem:[#allocation6 + $0xd40] sm:$0xff]
    %v724 = vld [vmem:[#allocation6 + $0xd48] sm:$0xff]
    %v725 = vld [vmem:[#allocation6 + $0xd50] sm:$0xff]
    %v726 = vld [vmem:[#allocation6 + $0xd58] sm:$0xff]
    %v727 = vld [vmem:[#allocation6 + $0xd60] sm:$0xff]
    %v728 = vld [vmem:[#allocation6 + $0xd68] sm:$0xff]
    %v729 = vld [vmem:[#allocation6 + $0xd70] sm:$0xff]
    %v730 = vld [vmem:[#allocation6 + $0xd78] sm:$0xff]
    %v731 = vld [vmem:[#allocation6 + $0xd80] sm:$0xff]
    %v732 = vld [vmem:[#allocation6 + $0xd88] sm:$0xff]
    %v733 = vld [vmem:[#allocation6 + $0xd90] sm:$0xff]
    %v734 = vld [vmem:[#allocation6 + $0xd98] sm:$0xff]
    %v735 = vld [vmem:[#allocation6 + $0xda0] sm:$0xff]
    %v736 = vld [vmem:[#allocation6 + $0xda8] sm:$0xff]
    %v737 = vld [vmem:[#allocation6 + $0xdb0] sm:$0xff]
    %v738 = vld [vmem:[#allocation6 + $0xdb8] sm:$0xff]
    %v739 = vld [vmem:[#allocation6 + $0xdc0] sm:$0xff]
    %v740 = vld [vmem:[#allocation6 + $0xdc8] sm:$0xff]
    %v741 = vld [vmem:[#allocation6 + $0xdd0] sm:$0xff]
    %v742 = vld [vmem:[#allocation6 + $0xdd8] sm:$0xff]
    %v743 = vld [vmem:[#allocation6 + $0xde0] sm:$0xff]
    %v744 = vld [vmem:[#allocation6 + $0xde8] sm:$0xff]
    %v745 = vld [vmem:[#allocation6 + $0xdf0] sm:$0xff]
    %v746 = vld [vmem:[#allocation6 + $0xdf8] sm:$0xff]
    %v747 = vld [vmem:[#allocation6 + $0xe00] sm:$0xff]
    %v748 = vld [vmem:[#allocation6 + $0xe08] sm:$0xff]
    %v749 = vld [vmem:[#allocation6 + $0xe10] sm:$0xff]
    %v750 = vld [vmem:[#allocation6 + $0xe18] sm:$0xff]
    %v751 = vld [vmem:[#allocation6 + $0xe20] sm:$0xff]
    %v752 = vld [vmem:[#allocation6 + $0xe28] sm:$0xff]
    %v753 = vld [vmem:[#allocation6 + $0xe30] sm:$0xff]
    %v754 = vld [vmem:[#allocation6 + $0xe38] sm:$0xff]
    %v755 = vld [vmem:[#allocation6 + $0xe40] sm:$0xff]
    %v756 = vld [vmem:[#allocation6 + $0xe48] sm:$0xff]
    %v757 = vld [vmem:[#allocation6 + $0xe50] sm:$0xff]
    %v758 = vld [vmem:[#allocation6 + $0xe58] sm:$0xff]
    %v759 = vld [vmem:[#allocation6 + $0xe60] sm:$0xff]
    %v760 = vld [vmem:[#allocation6 + $0xe68] sm:$0xff]
    %v761 = vld [vmem:[#allocation6 + $0xe70] sm:$0xff]
    %v762 = vld [vmem:[#allocation6 + $0xe78] sm:$0xff]
    %v763 = vld [vmem:[#allocation6 + $0xe80] sm:$0xff]
    %v764 = vld [vmem:[#allocation6 + $0xe88] sm:$0xff]
    %v765 = vld [vmem:[#allocation6 + $0xe90] sm:$0xff]
    %v766 = vld [vmem:[#allocation6 + $0xe98] sm:$0xff]
    %v767 = vld [vmem:[#allocation6 + $0xea0] sm:$0xff]
    %v768 = vld [vmem:[#allocation6 + $0xea8] sm:$0xff]
    %v769 = vld [vmem:[#allocation6 + $0xeb0] sm:$0xff]
    %v770 = vld [vmem:[#allocation6 + $0xeb8] sm:$0xff]
    %v771 = vld [vmem:[#allocation6 + $0xec0] sm:$0xff]
    %v772 = vld [vmem:[#allocation6 + $0xec8] sm:$0xff]
    %v773 = vld [vmem:[#allocation6 + $0xed0] sm:$0xff]
    %v774 = vld [vmem:[#allocation6 + $0xed8] sm:$0xff]
    %v775 = vld [vmem:[#allocation6 + $0xee0] sm:$0xff]
    %v776 = vld [vmem:[#allocation6 + $0xee8] sm:$0xff]
    %v777 = vld [vmem:[#allocation6 + $0xef0] sm:$0xff]
    %v778 = vld [vmem:[#allocation6 + $0xef8] sm:$0xff]
    %v779 = vld [vmem:[#allocation6 + $0xf00] sm:$0xff]
    %v780 = vld [vmem:[#allocation6 + $0xf08] sm:$0xff]
    %v781 = vld [vmem:[#allocation6 + $0xf10] sm:$0xff]
    %v782 = vld [vmem:[#allocation6 + $0xf18] sm:$0xff]
    %v783 = vld [vmem:[#allocation6 + $0xf20] sm:$0xff]
    %v784 = vld [vmem:[#allocation6 + $0xf28] sm:$0xff]
    %v785 = vld [vmem:[#allocation6 + $0xf30] sm:$0xff]
    %v786 = vld [vmem:[#allocation6 + $0xf38] sm:$0xff]
    %v787 = vld [vmem:[#allocation6 + $0xf40] sm:$0xff]
    %v788 = vld [vmem:[#allocation6 + $0xf48] sm:$0xff]
    %v789 = vld [vmem:[#allocation6 + $0xf50] sm:$0xff]
    %v790 = vld [vmem:[#allocation6 + $0xf58] sm:$0xff]
    %v791 = vld [vmem:[#allocation6 + $0xf60] sm:$0xff]
    %v792 = vld [vmem:[#allocation6 + $0xf68] sm:$0xff]
    %v793 = vld [vmem:[#allocation6 + $0xf70] sm:$0xff]
    %v794 = vld [vmem:[#allocation6 + $0xf78] sm:$0xff]
    %v795 = vld [vmem:[#allocation6 + $0xf80] sm:$0xff]
    %v796 = vld [vmem:[#allocation6 + $0xf88] sm:$0xff]
    %v797 = vld [vmem:[#allocation6 + $0xf90] sm:$0xff]
    %v798 = vld [vmem:[#allocation6 + $0xf98] sm:$0xff]
    %v799 = vld [vmem:[#allocation6 + $0xfa0] sm:$0xff]
    %v800 = vld [vmem:[#allocation6 + $0xfa8] sm:$0xff]
    %v801 = vld [vmem:[#allocation6 + $0xfb0] sm:$0xff]
    %v802 = vld [vmem:[#allocation6 + $0xfb8] sm:$0xff]
    %v803 = vld [vmem:[#allocation6 + $0xfc0] sm:$0xff]
    %v804 = vld [vmem:[#allocation6 + $0xfc8] sm:$0xff]
    %v805 = vld [vmem:[#allocation6 + $0xfd0] sm:$0xff]
    %v806 = vld [vmem:[#allocation6 + $0xfd8] sm:$0xff]
    %v807 = vld [vmem:[#allocation6 + $0xfe0] sm:$0xff]
    %v808 = vld [vmem:[#allocation6 + $0xfe8] sm:$0xff]
    %v809 = vld [vmem:[#allocation6 + $0xff0] sm:$0xff]
    %v810 = vld [vmem:[#allocation6 + $0xff8] sm:$0xff]
    %v811 = vld [vmem:[#allocation7] sm:$0xff]
    %v813 = vlaneseq
    %v814 = vshrl.u32 %v813, 7
    %v815 = vsub.s32 0, %v814
    %v816 = vrot.slane %v811, %v815
    %v817 = vlaneseq
    %v818 = vshrl.u32 %v817, 7
    %v819 = vsub.s32 1, %v818
    %v820 = vrot.slane %v811, %v819
    %v821 = vlaneseq
    %v822 = vshrl.u32 %v821, 7
    %v823 = vsub.s32 2, %v822
    %v824 = vrot.slane %v811, %v823
    %v825 = vlaneseq
    %v826 = vshrl.u32 %v825, 7
    %v827 = vsub.s32 3, %v826
    %v828 = vrot.slane %v811, %v827
    %v829 = vlaneseq
    %v830 = vshrl.u32 %v829, 7
    %v831 = vsub.s32 4, %v830
    %v832 = vrot.slane %v811, %v831
    %v833 = vlaneseq
    %v834 = vshrl.u32 %v833, 7
    %v835 = vsub.s32 5, %v834
    %v836 = vrot.slane %v811, %v835
    %v837 = vlaneseq
    %v838 = vshrl.u32 %v837, 7
    %v839 = vsub.s32 6, %v838
    %v840 = vrot.slane %v811, %v839
    %v841 = vlaneseq
    %v842 = vshrl.u32 %v841, 7
    %v843 = vsub.s32 7, %v842
    %v844 = vrot.slane %v811, %v843
    %853 = vmatprep.subr.mxu0 %v420
    %854 = vmatpush1.msra.mxu0 %v419
    %855 = vmatprep.subr.mxu0 %v412
    %856 = vmatpush1.msra.mxu0 %v411
    %857 = vmatprep.subr.mxu0 %v404
    %858 = vmatpush1.msra.mxu0 %v403
    %859 = vmatprep.subr.mxu0 %v396
    %860 = vmatpush1.msra.mxu0 %v395
    %861 = vmatprep.subr.mxu0 %v388
    %862 = vmatpush1.msra.mxu0 %v387
    %863 = vmatprep.subr.mxu0 %v380
    %864 = vmatpush1.msra.mxu0 %v379
    %865 = vmatprep.subr.mxu0 %v372
    %866 = vmatpush1.msra.mxu0 %v371
    %867 = vmatprep.subr.mxu0 %v364
    %868 = vmatpush1.msra.mxu0 %v363
    %869 = vmatprep.subr.mxu0 %v356
    %870 = vmatpush1.msra.mxu0 %v355
    %871 = vmatprep.subr.mxu0 %v348
    %872 = vmatpush1.msra.mxu0 %v347
    %873 = vmatprep.subr.mxu0 %v340
    %874 = vmatpush1.msra.mxu0 %v339
    %875 = vmatprep.subr.mxu0 %v332
    %876 = vmatpush1.msra.mxu0 %v331
    %877 = vmatprep.subr.mxu0 %v324
    %878 = vmatpush1.msra.mxu0 %v323
    %879 = vmatprep.subr.mxu0 %v316
    %880 = vmatpush1.msra.mxu0 %v315
    %881 = vmatprep.subr.mxu0 %v308
    %882 = vmatpush1.msra.mxu0 %v307
    %883 = vmatprep.subr.mxu0 %v300
    %884 = vmatpush1.msra.mxu0 %v299
    %885 = vmatprep.subr.mxu0 %v548
    %886 = vmatpush2.msra.mxu0 %v547
    %887 = vmatprep.subr.mxu0 %v540
    %888 = vmatpush2.msra.mxu0 %v539
    %889 = vmatprep.subr.mxu0 %v532
    %890 = vmatpush2.msra.mxu0 %v531
    %891 = vmatprep.subr.mxu0 %v524
    %892 = vmatpush2.msra.mxu0 %v523
    %893 = vmatprep.subr.mxu0 %v516
    %894 = vmatpush2.msra.mxu0 %v515
    %895 = vmatprep.subr.mxu0 %v508
    %896 = vmatpush2.msra.mxu0 %v507
    %897 = vmatprep.subr.mxu0 %v500
    %898 = vmatpush2.msra.mxu0 %v499
    %899 = vmatprep.subr.mxu0 %v492
    %900 = vmatpush2.msra.mxu0 %v491
    %901 = vmatprep.subr.mxu0 %v484
    %902 = vmatpush2.msra.mxu0 %v483
    %903 = vmatprep.subr.mxu0 %v476
    %904 = vmatpush2.msra.mxu0 %v475
    %905 = vmatprep.subr.mxu0 %v468
    %906 = vmatpush2.msra.mxu0 %v467
    %907 = vmatprep.subr.mxu0 %v460
    %908 = vmatpush2.msra.mxu0 %v459
    %909 = vmatprep.subr.mxu0 %v452
    %910 = vmatpush2.msra.mxu0 %v451
    %911 = vmatprep.subr.mxu0 %v444
    %912 = vmatpush2.msra.mxu0 %v443
    %913 = vmatprep.subr.mxu0 %v436
    %914 = vmatpush2.msra.mxu0 %v435
    %915 = vmatprep.subr.mxu0 %v428
    %916 = vmatpush2.msra.mxu0 %v427
    %917 = vmatprep.mubr.f32.mxu0 %v296
    %918 = vmatmul.mubr.f32.gmra.mxu0 %v295
    %v919 = vpop.f32.mrf.mxu0
    %v920 = vadd.f32 %v816, %v919
    %v921 = vpop.f32.mrf.mxu0
    %v922 = vadd.f32 %v820, %v921
    %923 = vdwg.mxu0
    %924 = vmatprep.subr.mxu0 %v676
    %925 = vmatpush1.msra.mxu0 %v675
    %926 = vmatprep.subr.mxu0 %v668
    %927 = vmatpush1.msra.mxu0 %v667
    %928 = vmatprep.subr.mxu0 %v660
    %929 = vmatpush1.msra.mxu0 %v659
    %930 = vmatprep.subr.mxu0 %v652
    %931 = vmatpush1.msra.mxu0 %v651
    %932 = vmatprep.subr.mxu0 %v644
    %933 = vmatpush1.msra.mxu0 %v643
    %934 = vmatprep.subr.mxu0 %v636
    %935 = vmatpush1.msra.mxu0 %v635
    %936 = vmatprep.subr.mxu0 %v628
    %937 = vmatpush1.msra.mxu0 %v627
    %938 = vmatprep.subr.mxu0 %v620
    %939 = vmatpush1.msra.mxu0 %v619
    %940 = vmatprep.subr.mxu0 %v612
    %941 = vmatpush1.msra.mxu0 %v611
    %942 = vmatprep.subr.mxu0 %v604
    %943 = vmatpush1.msra.mxu0 %v603
    %944 = vmatprep.subr.mxu0 %v596
    %945 = vmatpush1.msra.mxu0 %v595
    %946 = vmatprep.subr.mxu0 %v588
    %947 = vmatpush1.msra.mxu0 %v587
    %948 = vmatprep.subr.mxu0 %v580
    %949 = vmatpush1.msra.mxu0 %v579
    %950 = vmatprep.subr.mxu0 %v572
    %951 = vmatpush1.msra.mxu0 %v571
    %952 = vmatprep.subr.mxu0 %v564
    %953 = vmatpush1.msra.mxu0 %v563
    %954 = vmatprep.subr.mxu0 %v556
    %955 = vmatpush1.msra.mxu0 %v555
    %956 = vmatprep.subr.mxu0 %v804
    %957 = vmatpush2.msra.mxu0 %v803
    %958 = vmatprep.subr.mxu0 %v796
    %959 = vmatpush2.msra.mxu0 %v795
    %960 = vmatprep.subr.mxu0 %v788
    %961 = vmatpush2.msra.mxu0 %v787
    %962 = vmatprep.subr.mxu0 %v780
    %963 = vmatpush2.msra.mxu0 %v779
    %964 = vmatprep.subr.mxu0 %v772
    %965 = vmatpush2.msra.mxu0 %v771
    %966 = vmatprep.subr.mxu0 %v764
    %967 = vmatpush2.msra.mxu0 %v763
    %968 = vmatprep.subr.mxu0 %v756
    %969 = vmatpush2.msra.mxu0 %v755
    %970 = vmatprep.subr.mxu0 %v748
    %971 = vmatpush2.msra.mxu0 %v747
    %972 = vmatprep.subr.mxu0 %v740
    %973 = vmatpush2.msra.mxu0 %v739
    %974 = vmatprep.subr.mxu0 %v732
    %975 = vmatpush2.msra.mxu0 %v731
    %976 = vmatprep.subr.mxu0 %v724
    %977 = vmatpush2.msra.mxu0 %v723
    %978 = vmatprep.subr.mxu0 %v716
    %979 = vmatpush2.msra.mxu0 %v715
    %980 = vmatprep.subr.mxu0 %v708
    %981 = vmatpush2.msra.mxu0 %v707
    %982 = vmatprep.subr.mxu0 %v700
    %983 = vmatpush2.msra.mxu0 %v699
    %984 = vmatprep.subr.mxu0 %v692
    %985 = vmatpush2.msra.mxu0 %v691
    %986 = vmatprep.subr.mxu0 %v684
    %987 = vmatpush2.msra.mxu0 %v683
    %988 = vmatprep.mubr.f32.mxu0 %v298
    %989 = vmatmul.mubr.f32.gmra.mxu0 %v297
    %v990 = vpop.f32.mrf.mxu0
    %v991 = vadd.f32 %v920, %v990
    %v992 = vpop.f32.mrf.mxu0
    %v993 = vadd.f32 %v922, %v992
    %994 = vdwg.mxu0
    %995 = vmatprep.subr.mxu0 %v422
    %996 = vmatpush1.msra.mxu0 %v421
    %997 = vmatprep.subr.mxu0 %v414
    %998 = vmatpush1.msra.mxu0 %v413
    %999 = vmatprep.subr.mxu0 %v406
    %1000 = vmatpush1.msra.mxu0 %v405
    %1001 = vmatprep.subr.mxu0 %v398
    %1002 = vmatpush1.msra.mxu0 %v397
    %1003 = vmatprep.subr.mxu0 %v390
    %1004 = vmatpush1.msra.mxu0 %v389
    %1005 = vmatprep.subr.mxu0 %v382
    %1006 = vmatpush1.msra.mxu0 %v381
    %1007 = vmatprep.subr.mxu0 %v374
    %1008 = vmatpush1.msra.mxu0 %v373
    %1009 = vmatprep.subr.mxu0 %v366
    %1010 = vmatpush1.msra.mxu0 %v365
    %1011 = vmatprep.subr.mxu0 %v358
    %1012 = vmatpush1.msra.mxu0 %v357
    %1013 = vmatprep.subr.mxu0 %v350
    %1014 = vmatpush1.msra.mxu0 %v349
    %1015 = vmatprep.subr.mxu0 %v342
    %1016 = vmatpush1.msra.mxu0 %v341
    %1017 = vmatprep.subr.mxu0 %v334
    %1018 = vmatpush1.msra.mxu0 %v333
    %1019 = vmatprep.subr.mxu0 %v326
    %1020 = vmatpush1.msra.mxu0 %v325
    %1021 = vmatprep.subr.mxu0 %v318
    %1022 = vmatpush1.msra.mxu0 %v317
    %1023 = vmatprep.subr.mxu0 %v310
    %1024 = vmatpush1.msra.mxu0 %v309
    %1025 = vmatprep.subr.mxu0 %v302
    %1026 = vmatpush1.msra.mxu0 %v301
    %1027 = vmatprep.subr.mxu0 %v550
    %1028 = vmatpush2.msra.mxu0 %v549
    %1029 = vmatprep.subr.mxu0 %v542
    %1030 = vmatpush2.msra.mxu0 %v541
    %1031 = vmatprep.subr.mxu0 %v534
    %1032 = vmatpush2.msra.mxu0 %v533
    %1033 = vmatprep.subr.mxu0 %v526
    %1034 = vmatpush2.msra.mxu0 %v525
    %1035 = vmatprep.subr.mxu0 %v518
    %1036 = vmatpush2.msra.mxu0 %v517
    %1037 = vmatprep.subr.mxu0 %v510
    %1038 = vmatpush2.msra.mxu0 %v509
    %1039 = vmatprep.subr.mxu0 %v502
    %1040 = vmatpush2.msra.mxu0 %v501
    %1041 = vmatprep.subr.mxu0 %v494
    %1042 = vmatpush2.msra.mxu0 %v493
    %1043 = vmatprep.subr.mxu0 %v486
    %1044 = vmatpush2.msra.mxu0 %v485
    %1045 = vmatprep.subr.mxu0 %v478
    %1046 = vmatpush2.msra.mxu0 %v477
    %1047 = vmatprep.subr.mxu0 %v470
    %1048 = vmatpush2.msra.mxu0 %v469
    %1049 = vmatprep.subr.mxu0 %v462
    %1050 = vmatpush2.msra.mxu0 %v461
    %1051 = vmatprep.subr.mxu0 %v454
    %1052 = vmatpush2.msra.mxu0 %v453
    %1053 = vmatprep.subr.mxu0 %v446
    %1054 = vmatpush2.msra.mxu0 %v445
    %1055 = vmatprep.subr.mxu0 %v438
    %1056 = vmatpush2.msra.mxu0 %v437
    %1057 = vmatprep.subr.mxu0 %v430
    %1058 = vmatpush2.msra.mxu0 %v429
    %1059 = vmatprep.mubr.f32.mxu0 %v296
    %1060 = vmatmul.mubr.f32.gmra.mxu0 %v295
    %v1061 = vpop.f32.mrf.mxu0
    %v1062 = vadd.f32 %v824, %v1061
    %v1063 = vpop.f32.mrf.mxu0
    %v1064 = vadd.f32 %v828, %v1063
    %1065 = vdwg.mxu0
    %1066 = vmatprep.subr.mxu0 %v678
    %1067 = vmatpush1.msra.mxu0 %v677
    %1068 = vmatprep.subr.mxu0 %v670
    %1069 = vmatpush1.msra.mxu0 %v669
    %1070 = vmatprep.subr.mxu0 %v662
    %1071 = vmatpush1.msra.mxu0 %v661
    %1072 = vmatprep.subr.mxu0 %v654
    %1073 = vmatpush1.msra.mxu0 %v653
    %1074 = vmatprep.subr.mxu0 %v646
    %1075 = vmatpush1.msra.mxu0 %v645
    %1076 = vmatprep.subr.mxu0 %v638
    %1077 = vmatpush1.msra.mxu0 %v637
    %1078 = vmatprep.subr.mxu0 %v630
    %1079 = vmatpush1.msra.mxu0 %v629
    %1080 = vmatprep.subr.mxu0 %v622
    %1081 = vmatpush1.msra.mxu0 %v621
    %1082 = vmatprep.subr.mxu0 %v614
    %1083 = vmatpush1.msra.mxu0 %v613
    %1084 = vmatprep.subr.mxu0 %v606
    %1085 = vmatpush1.msra.mxu0 %v605
    %1086 = vmatprep.subr.mxu0 %v598
    %1087 = vmatpush1.msra.mxu0 %v597
    %1088 = vmatprep.subr.mxu0 %v590
    %1089 = vmatpush1.msra.mxu0 %v589
    %1090 = vmatprep.subr.mxu0 %v582
    %1091 = vmatpush1.msra.mxu0 %v581
    %1092 = vmatprep.subr.mxu0 %v574
    %1093 = vmatpush1.msra.mxu0 %v573
    %1094 = vmatprep.subr.mxu0 %v566
    %1095 = vmatpush1.msra.mxu0 %v565
    %1096 = vmatprep.subr.mxu0 %v558
    %1097 = vmatpush1.msra.mxu0 %v557
    %1098 = vmatprep.subr.mxu0 %v806
    %1099 = vmatpush2.msra.mxu0 %v805
    %1100 = vmatprep.subr.mxu0 %v798
    %1101 = vmatpush2.msra.mxu0 %v797
    %1102 = vmatprep.subr.mxu0 %v790
    %1103 = vmatpush2.msra.mxu0 %v789
    %1104 = vmatprep.subr.mxu0 %v782
    %1105 = vmatpush2.msra.mxu0 %v781
    %1106 = vmatprep.subr.mxu0 %v774
    %1107 = vmatpush2.msra.mxu0 %v773
    %1108 = vmatprep.subr.mxu0 %v766
    %1109 = vmatpush2.msra.mxu0 %v765
    %1110 = vmatprep.subr.mxu0 %v758
    %1111 = vmatpush2.msra.mxu0 %v757
    %1112 = vmatprep.subr.mxu0 %v750
    %1113 = vmatpush2.msra.mxu0 %v749
    %1114 = vmatprep.subr.mxu0 %v742
    %1115 = vmatpush2.msra.mxu0 %v741
    %1116 = vmatprep.subr.mxu0 %v734
    %1117 = vmatpush2.msra.mxu0 %v733
    %1118 = vmatprep.subr.mxu0 %v726
    %1119 = vmatpush2.msra.mxu0 %v725
    %1120 = vmatprep.subr.mxu0 %v718
    %1121 = vmatpush2.msra.mxu0 %v717
    %1122 = vmatprep.subr.mxu0 %v710
    %1123 = vmatpush2.msra.mxu0 %v709
    %1124 = vmatprep.subr.mxu0 %v702
    %1125 = vmatpush2.msra.mxu0 %v701
    %1126 = vmatprep.subr.mxu0 %v694
    %1127 = vmatpush2.msra.mxu0 %v693
    %1128 = vmatprep.subr.mxu0 %v686
    %1129 = vmatpush2.msra.mxu0 %v685
    %1130 = vmatprep.mubr.f32.mxu0 %v298
    %1131 = vmatmul.mubr.f32.gmra.mxu0 %v297
    %v1132 = vpop.f32.mrf.mxu0
    %v1133 = vadd.f32 %v1062, %v1132
    %v1134 = vpop.f32.mrf.mxu0
    %v1135 = vadd.f32 %v1064, %v1134
    %1136 = vdwg.mxu0
    %1137 = vmatprep.subr.mxu0 %v424
    %1138 = vmatpush1.msra.mxu0 %v423
    %1139 = vmatprep.subr.mxu0 %v416
    %1140 = vmatpush1.msra.mxu0 %v415
    %1141 = vmatprep.subr.mxu0 %v408
    %1142 = vmatpush1.msra.mxu0 %v407
    %1143 = vmatprep.subr.mxu0 %v400
    %1144 = vmatpush1.msra.mxu0 %v399
    %1145 = vmatprep.subr.mxu0 %v392
    %1146 = vmatpush1.msra.mxu0 %v391
    %1147 = vmatprep.subr.mxu0 %v384
    %1148 = vmatpush1.msra.mxu0 %v383
    %1149 = vmatprep.subr.mxu0 %v376
    %1150 = vmatpush1.msra.mxu0 %v375
    %1151 = vmatprep.subr.mxu0 %v368
    %1152 = vmatpush1.msra.mxu0 %v367
    %1153 = vmatprep.subr.mxu0 %v360
    %1154 = vmatpush1.msra.mxu0 %v359
    %1155 = vmatprep.subr.mxu0 %v352
    %1156 = vmatpush1.msra.mxu0 %v351
    %1157 = vmatprep.subr.mxu0 %v344
    %1158 = vmatpush1.msra.mxu0 %v343
    %1159 = vmatprep.subr.mxu0 %v336
    %1160 = vmatpush1.msra.mxu0 %v335
    %1161 = vmatprep.subr.mxu0 %v328
    %1162 = vmatpush1.msra.mxu0 %v327
    %1163 = vmatprep.subr.mxu0 %v320
    %1164 = vmatpush1.msra.mxu0 %v319
    %1165 = vmatprep.subr.mxu0 %v312
    %1166 = vmatpush1.msra.mxu0 %v311
    %1167 = vmatprep.subr.mxu0 %v304
    %1168 = vmatpush1.msra.mxu0 %v303
    %1169 = vmatprep.subr.mxu0 %v552
    %1170 = vmatpush2.msra.mxu0 %v551
    %1171 = vmatprep.subr.mxu0 %v544
    %1172 = vmatpush2.msra.mxu0 %v543
    %1173 = vmatprep.subr.mxu0 %v536
    %1174 = vmatpush2.msra.mxu0 %v535
    %1175 = vmatprep.subr.mxu0 %v528
    %1176 = vmatpush2.msra.mxu0 %v527
    %1177 = vmatprep.subr.mxu0 %v520
    %1178 = vmatpush2.msra.mxu0 %v519
    %1179 = vmatprep.subr.mxu0 %v512
    %1180 = vmatpush2.msra.mxu0 %v511
    %1181 = vmatprep.subr.mxu0 %v504
    %1182 = vmatpush2.msra.mxu0 %v503
    %1183 = vmatprep.subr.mxu0 %v496
    %1184 = vmatpush2.msra.mxu0 %v495
    %1185 = vmatprep.subr.mxu0 %v488
    %1186 = vmatpush2.msra.mxu0 %v487
    %1187 = vmatprep.subr.mxu0 %v480
    %1188 = vmatpush2.msra.mxu0 %v479
    %1189 = vmatprep.subr.mxu0 %v472
    %1190 = vmatpush2.msra.mxu0 %v471
    %1191 = vmatprep.subr.mxu0 %v464
    %1192 = vmatpush2.msra.mxu0 %v463
    %1193 = vmatprep.subr.mxu0 %v456
    %1194 = vmatpush2.msra.mxu0 %v455
    %1195 = vmatprep.subr.mxu0 %v448
    %1196 = vmatpush2.msra.mxu0 %v447
    %1197 = vmatprep.subr.mxu0 %v440
    %1198 = vmatpush2.msra.mxu0 %v439
    %1199 = vmatprep.subr.mxu0 %v432
    %1200 = vmatpush2.msra.mxu0 %v431
    %1201 = vmatprep.mubr.f32.mxu0 %v296
    %1202 = vmatmul.mubr.f32.gmra.mxu0 %v295
    %v1203 = vpop.f32.mrf.mxu0
    %v1204 = vadd.f32 %v832, %v1203
    %v1205 = vpop.f32.mrf.mxu0
    %v1206 = vadd.f32 %v836, %v1205
    %1207 = vdwg.mxu0
    %1208 = vmatprep.subr.mxu0 %v680
    %1209 = vmatpush1.msra.mxu0 %v679
    %1210 = vmatprep.subr.mxu0 %v672
    %1211 = vmatpush1.msra.mxu0 %v671
    %1212 = vmatprep.subr.mxu0 %v664
    %1213 = vmatpush1.msra.mxu0 %v663
    %1214 = vmatprep.subr.mxu0 %v656
    %1215 = vmatpush1.msra.mxu0 %v655
    %1216 = vmatprep.subr.mxu0 %v648
    %1217 = vmatpush1.msra.mxu0 %v647
    %1218 = vmatprep.subr.mxu0 %v640
    %1219 = vmatpush1.msra.mxu0 %v639
    %1220 = vmatprep.subr.mxu0 %v632
    %1221 = vmatpush1.msra.mxu0 %v631
    %1222 = vmatprep.subr.mxu0 %v624
    %1223 = vmatpush1.msra.mxu0 %v623
    %1224 = vmatprep.subr.mxu0 %v616
    %1225 = vmatpush1.msra.mxu0 %v615
    %1226 = vmatprep.subr.mxu0 %v608
    %1227 = vmatpush1.msra.mxu0 %v607
    %1228 = vmatprep.subr.mxu0 %v600
    %1229 = vmatpush1.msra.mxu0 %v599
    %1230 = vmatprep.subr.mxu0 %v592
    %1231 = vmatpush1.msra.mxu0 %v591
    %1232 = vmatprep.subr.mxu0 %v584
    %1233 = vmatpush1.msra.mxu0 %v583
    %1234 = vmatprep.subr.mxu0 %v576
    %1235 = vmatpush1.msra.mxu0 %v575
    %1236 = vmatprep.subr.mxu0 %v568
    %1237 = vmatpush1.msra.mxu0 %v567
    %1238 = vmatprep.subr.mxu0 %v560
    %1239 = vmatpush1.msra.mxu0 %v559
    %1240 = vmatprep.subr.mxu0 %v808
    %1241 = vmatpush2.msra.mxu0 %v807
    %1242 = vmatprep.subr.mxu0 %v800
    %1243 = vmatpush2.msra.mxu0 %v799
    %1244 = vmatprep.subr.mxu0 %v792
    %1245 = vmatpush2.msra.mxu0 %v791
    %1246 = vmatprep.subr.mxu0 %v784
    %1247 = vmatpush2.msra.mxu0 %v783
    %1248 = vmatprep.subr.mxu0 %v776
    %1249 = vmatpush2.msra.mxu0 %v775
    %1250 = vmatprep.subr.mxu0 %v768
    %1251 = vmatpush2.msra.mxu0 %v767
    %1252 = vmatprep.subr.mxu0 %v760
    %1253 = vmatpush2.msra.mxu0 %v759
    %1254 = vmatprep.subr.mxu0 %v752
    %1255 = vmatpush2.msra.mxu0 %v751
    %1256 = vmatprep.subr.mxu0 %v744
    %1257 = vmatpush2.msra.mxu0 %v743
    %1258 = vmatprep.subr.mxu0 %v736
    %1259 = vmatpush2.msra.mxu0 %v735
    %1260 = vmatprep.subr.mxu0 %v728
    %1261 = vmatpush2.msra.mxu0 %v727
    %1262 = vmatprep.subr.mxu0 %v720
    %1263 = vmatpush2.msra.mxu0 %v719
    %1264 = vmatprep.subr.mxu0 %v712
    %1265 = vmatpush2.msra.mxu0 %v711
    %1266 = vmatprep.subr.mxu0 %v704
    %1267 = vmatpush2.msra.mxu0 %v703
    %1268 = vmatprep.subr.mxu0 %v696
    %1269 = vmatpush2.msra.mxu0 %v695
    %1270 = vmatprep.subr.mxu0 %v688
    %1271 = vmatpush2.msra.mxu0 %v687
    %1272 = vmatprep.mubr.f32.mxu0 %v298
    %1273 = vmatmul.mubr.f32.gmra.mxu0 %v297
    %v1274 = vpop.f32.mrf.mxu0
    %v1275 = vadd.f32 %v1204, %v1274
    %v1276 = vpop.f32.mrf.mxu0
    %v1277 = vadd.f32 %v1206, %v1276
    %1278 = vdwg.mxu0
    %1279 = vmatprep.subr.mxu0 %v426
    %1280 = vmatpush1.msra.mxu0 %v425
    %1281 = vmatprep.subr.mxu0 %v418
    %1282 = vmatpush1.msra.mxu0 %v417
    %1283 = vmatprep.subr.mxu0 %v410
    %1284 = vmatpush1.msra.mxu0 %v409
    %1285 = vmatprep.subr.mxu0 %v402
    %1286 = vmatpush1.msra.mxu0 %v401
    %1287 = vmatprep.subr.mxu0 %v394
    %1288 = vmatpush1.msra.mxu0 %v393
    %1289 = vmatprep.subr.mxu0 %v386
    %1290 = vmatpush1.msra.mxu0 %v385
    %1291 = vmatprep.subr.mxu0 %v378
    %1292 = vmatpush1.msra.mxu0 %v377
    %1293 = vmatprep.subr.mxu0 %v370
    %1294 = vmatpush1.msra.mxu0 %v369
    %1295 = vmatprep.subr.mxu0 %v362
    %1296 = vmatpush1.msra.mxu0 %v361
    %1297 = vmatprep.subr.mxu0 %v354
    %1298 = vmatpush1.msra.mxu0 %v353
    %1299 = vmatprep.subr.mxu0 %v346
    %1300 = vmatpush1.msra.mxu0 %v345
    %1301 = vmatprep.subr.mxu0 %v338
    %1302 = vmatpush1.msra.mxu0 %v337
    %1303 = vmatprep.subr.mxu0 %v330
    %1304 = vmatpush1.msra.mxu0 %v329
    %1305 = vmatprep.subr.mxu0 %v322
    %1306 = vmatpush1.msra.mxu0 %v321
    %1307 = vmatprep.subr.mxu0 %v314
    %1308 = vmatpush1.msra.mxu0 %v313
    %1309 = vmatprep.subr.mxu0 %v306
    %1310 = vmatpush1.msra.mxu0 %v305
    %1311 = vmatprep.subr.mxu0 %v554
    %1312 = vmatpush2.msra.mxu0 %v553
    %1313 = vmatprep.subr.mxu0 %v546
    %1314 = vmatpush2.msra.mxu0 %v545
    %1315 = vmatprep.subr.mxu0 %v538
    %1316 = vmatpush2.msra.mxu0 %v537
    %1317 = vmatprep.subr.mxu0 %v530
    %1318 = vmatpush2.msra.mxu0 %v529
    %1319 = vmatprep.subr.mxu0 %v522
    %1320 = vmatpush2.msra.mxu0 %v521
    %1321 = vmatprep.subr.mxu0 %v514
    %1322 = vmatpush2.msra.mxu0 %v513
    %1323 = vmatprep.subr.mxu0 %v506
    %1324 = vmatpush2.msra.mxu0 %v505
    %1325 = vmatprep.subr.mxu0 %v498
    %1326 = vmatpush2.msra.mxu0 %v497
    %1327 = vmatprep.subr.mxu0 %v490
    %1328 = vmatpush2.msra.mxu0 %v489
    %1329 = vmatprep.subr.mxu0 %v482
    %1330 = vmatpush2.msra.mxu0 %v481
    %1331 = vmatprep.subr.mxu0 %v474
    %1332 = vmatpush2.msra.mxu0 %v473
    %1333 = vmatprep.subr.mxu0 %v466
    %1334 = vmatpush2.msra.mxu0 %v465
    %1335 = vmatprep.subr.mxu0 %v458
    %1336 = vmatpush2.msra.mxu0 %v457
    %1337 = vmatprep.subr.mxu0 %v450
    %1338 = vmatpush2.msra.mxu0 %v449
    %1339 = vmatprep.subr.mxu0 %v442
    %1340 = vmatpush2.msra.mxu0 %v441
    %1341 = vmatprep.subr.mxu0 %v434
    %1342 = vmatpush2.msra.mxu0 %v433
    %1343 = vmatprep.mubr.f32.mxu0 %v296
    %1344 = vmatmul.mubr.f32.gmra.mxu0 %v295
    %v1345 = vpop.f32.mrf.mxu0
    %v1346 = vadd.f32 %v840, %v1345
    %v1347 = vpop.f32.mrf.mxu0
    %v1348 = vadd.f32 %v844, %v1347
    %1349 = vdwg.mxu0
    %1350 = vmatprep.subr.mxu0 %v682
    %1351 = vmatpush1.msra.mxu0 %v681
    %1352 = vmatprep.subr.mxu0 %v674
    %1353 = vmatpush1.msra.mxu0 %v673
    %1354 = vmatprep.subr.mxu0 %v666
    %1355 = vmatpush1.msra.mxu0 %v665
    %1356 = vmatprep.subr.mxu0 %v658
    %1357 = vmatpush1.msra.mxu0 %v657
    %1358 = vmatprep.subr.mxu0 %v650
    %1359 = vmatpush1.msra.mxu0 %v649
    %1360 = vmatprep.subr.mxu0 %v642
    %1361 = vmatpush1.msra.mxu0 %v641
    %1362 = vmatprep.subr.mxu0 %v634
    %1363 = vmatpush1.msra.mxu0 %v633
    %1364 = vmatprep.subr.mxu0 %v626
    %1365 = vmatpush1.msra.mxu0 %v625
    %1366 = vmatprep.subr.mxu0 %v618
    %1367 = vmatpush1.msra.mxu0 %v617
    %1368 = vmatprep.subr.mxu0 %v610
    %1369 = vmatpush1.msra.mxu0 %v609
    %1370 = vmatprep.subr.mxu0 %v602
    %1371 = vmatpush1.msra.mxu0 %v601
    %1372 = vmatprep.subr.mxu0 %v594
    %1373 = vmatpush1.msra.mxu0 %v593
    %1374 = vmatprep.subr.mxu0 %v586
    %1375 = vmatpush1.msra.mxu0 %v585
    %1376 = vmatprep.subr.mxu0 %v578
    %1377 = vmatpush1.msra.mxu0 %v577
    %1378 = vmatprep.subr.mxu0 %v570
    %1379 = vmatpush1.msra.mxu0 %v569
    %1380 = vmatprep.subr.mxu0 %v562
    %1381 = vmatpush1.msra.mxu0 %v561
    %1382 = vmatprep.subr.mxu0 %v810
    %1383 = vmatpush2.msra.mxu0 %v809
    %1384 = vmatprep.subr.mxu0 %v802
    %1385 = vmatpush2.msra.mxu0 %v801
    %1386 = vmatprep.subr.mxu0 %v794
    %1387 = vmatpush2.msra.mxu0 %v793
    %1388 = vmatprep.subr.mxu0 %v786
    %1389 = vmatpush2.msra.mxu0 %v785
    %1390 = vmatprep.subr.mxu0 %v778
    %1391 = vmatpush2.msra.mxu0 %v777
    %1392 = vmatprep.subr.mxu0 %v770
    %1393 = vmatpush2.msra.mxu0 %v769
    %1394 = vmatprep.subr.mxu0 %v762
    %1395 = vmatpush2.msra.mxu0 %v761
    %1396 = vmatprep.subr.mxu0 %v754
    %1397 = vmatpush2.msra.mxu0 %v753
    %1398 = vmatprep.subr.mxu0 %v746
    %1399 = vmatpush2.msra.mxu0 %v745
    %1400 = vmatprep.subr.mxu0 %v738
    %1401 = vmatpush2.msra.mxu0 %v737
    %1402 = vmatprep.subr.mxu0 %v730
    %1403 = vmatpush2.msra.mxu0 %v729
    %1404 = vmatprep.subr.mxu0 %v722
    %1405 = vmatpush2.msra.mxu0 %v721
    %1406 = vmatprep.subr.mxu0 %v714
    %1407 = vmatpush2.msra.mxu0 %v713
    %1408 = vmatprep.subr.mxu0 %v706
    %1409 = vmatpush2.msra.mxu0 %v705
    %1410 = vmatprep.subr.mxu0 %v698
    %1411 = vmatpush2.msra.mxu0 %v697
    %1412 = vmatprep.subr.mxu0 %v690
    %1413 = vmatpush2.msra.mxu0 %v689
    %1414 = vmatprep.mubr.f32.mxu0 %v298
    %1415 = vmatmul.mubr.f32.gmra.mxu0 %v297
    %v1416 = vpop.f32.mrf.mxu0
    %v1417 = vadd.f32 %v1346, %v1416
    %v1418 = vpop.f32.mrf.mxu0
    %v1419 = vadd.f32 %v1348, %v1418
    %1420 = vdwg.mxu0
    %vm1421 = vcmp.gt.f32.partialorder %v991, 0.0
    %vm1422 = vcmp.gt.f32.partialorder %v993, 0.0
    %vm1423 = vcmp.gt.f32.partialorder %v1133, 0.0
    %vm1424 = vcmp.gt.f32.partialorder %v1135, 0.0
    %vm1425 = vcmp.gt.f32.partialorder %v1275, 0.0
    %vm1426 = vcmp.gt.f32.partialorder %v1277, 0.0
    %vm1427 = vcmp.gt.f32.partialorder %v1417, 0.0
    %vm1428 = vcmp.gt.f32.partialorder %v1419, 0.0
    %v1429 = vmul.f32 %v991, 0.2
    %v1430 = vmul.f32 %v993, 0.2
    %v1431 = vmul.f32 %v1133, 0.2
    %v1432 = vmul.f32 %v1135, 0.2
    %v1433 = vmul.f32 %v1275, 0.2
    %v1434 = vmul.f32 %v1277, 0.2
    %v1435 = vmul.f32 %v1417, 0.2
    %v1436 = vmul.f32 %v1419, 0.2
    %v1437 = vsel %vm1421, %v991, %v1429
    %v1438 = vsel %vm1422, %v993, %v1430
    %v1439 = vsel %vm1423, %v1133, %v1431
    %v1440 = vsel %vm1424, %v1135, %v1432
    %v1441 = vsel %vm1425, %v1275, %v1433
    %v1442 = vsel %vm1426, %v1277, %v1434
    %v1443 = vsel %vm1427, %v1417, %v1435
    %v1444 = vsel %vm1428, %v1419, %v1436
    %v1445 = vld [vmem:[#allocation9] sm:$0xff]
    %v1446 = vld [vmem:[#allocation9 + $0x8] sm:$0xff]
    %v1447 = vld [vmem:[#allocation9 + $0x10] sm:$0xff]
    %v1448 = vld [vmem:[#allocation9 + $0x18] sm:$0xff]
    %v1449 = vld [vmem:[#allocation9 + $0x20] sm:$0xff]
    %v1450 = vld [vmem:[#allocation9 + $0x28] sm:$0xff]
    %v1451 = vld [vmem:[#allocation9 + $0x30] sm:$0xff]
    %v1452 = vld [vmem:[#allocation9 + $0x38] sm:$0xff]
    %v1453 = vld [vmem:[#allocation9 + $0x40] sm:$0xff]
    %v1454 = vld [vmem:[#allocation9 + $0x48] sm:$0xff]
    %v1455 = vld [vmem:[#allocation9 + $0x50] sm:$0xff]
    %v1456 = vld [vmem:[#allocation9 + $0x58] sm:$0xff]
    %v1457 = vld [vmem:[#allocation9 + $0x60] sm:$0xff]
    %v1458 = vld [vmem:[#allocation9 + $0x68] sm:$0xff]
    %v1459 = vld [vmem:[#allocation9 + $0x70] sm:$0xff]
    %v1460 = vld [vmem:[#allocation9 + $0x78] sm:$0xff]
    %v1461 = vld [vmem:[#allocation9 + $0x80] sm:$0xff]
    %v1462 = vld [vmem:[#allocation9 + $0x88] sm:$0xff]
    %v1463 = vld [vmem:[#allocation9 + $0x90] sm:$0xff]
    %v1464 = vld [vmem:[#allocation9 + $0x98] sm:$0xff]
    %v1465 = vld [vmem:[#allocation9 + $0xa0] sm:$0xff]
    %v1466 = vld [vmem:[#allocation9 + $0xa8] sm:$0xff]
    %v1467 = vld [vmem:[#allocation9 + $0xb0] sm:$0xff]
    %v1468 = vld [vmem:[#allocation9 + $0xb8] sm:$0xff]
    %v1469 = vld [vmem:[#allocation9 + $0xc0] sm:$0xff]
    %v1470 = vld [vmem:[#allocation9 + $0xc8] sm:$0xff]
    %v1471 = vld [vmem:[#allocation9 + $0xd0] sm:$0xff]
    %v1472 = vld [vmem:[#allocation9 + $0xd8] sm:$0xff]
    %v1473 = vld [vmem:[#allocation9 + $0xe0] sm:$0xff]
    %v1474 = vld [vmem:[#allocation9 + $0xe8] sm:$0xff]
    %v1475 = vld [vmem:[#allocation9 + $0xf0] sm:$0xff]
    %v1476 = vld [vmem:[#allocation9 + $0xf8] sm:$0xff]
    %v1477 = vld [vmem:[#allocation9 + $0x100] sm:$0xff]
    %v1478 = vld [vmem:[#allocation9 + $0x108] sm:$0xff]
    %v1479 = vld [vmem:[#allocation9 + $0x110] sm:$0xff]
    %v1480 = vld [vmem:[#allocation9 + $0x118] sm:$0xff]
    %v1481 = vld [vmem:[#allocation9 + $0x120] sm:$0xff]
    %v1482 = vld [vmem:[#allocation9 + $0x128] sm:$0xff]
    %v1483 = vld [vmem:[#allocation9 + $0x130] sm:$0xff]
    %v1484 = vld [vmem:[#allocation9 + $0x138] sm:$0xff]
    %v1485 = vld [vmem:[#allocation9 + $0x140] sm:$0xff]
    %v1486 = vld [vmem:[#allocation9 + $0x148] sm:$0xff]
    %v1487 = vld [vmem:[#allocation9 + $0x150] sm:$0xff]
    %v1488 = vld [vmem:[#allocation9 + $0x158] sm:$0xff]
    %v1489 = vld [vmem:[#allocation9 + $0x160] sm:$0xff]
    %v1490 = vld [vmem:[#allocation9 + $0x168] sm:$0xff]
    %v1491 = vld [vmem:[#allocation9 + $0x170] sm:$0xff]
    %v1492 = vld [vmem:[#allocation9 + $0x178] sm:$0xff]
    %v1493 = vld [vmem:[#allocation9 + $0x180] sm:$0xff]
    %v1494 = vld [vmem:[#allocation9 + $0x188] sm:$0xff]
    %v1495 = vld [vmem:[#allocation9 + $0x190] sm:$0xff]
    %v1496 = vld [vmem:[#allocation9 + $0x198] sm:$0xff]
    %v1497 = vld [vmem:[#allocation9 + $0x1a0] sm:$0xff]
    %v1498 = vld [vmem:[#allocation9 + $0x1a8] sm:$0xff]
    %v1499 = vld [vmem:[#allocation9 + $0x1b0] sm:$0xff]
    %v1500 = vld [vmem:[#allocation9 + $0x1b8] sm:$0xff]
    %v1501 = vld [vmem:[#allocation9 + $0x1c0] sm:$0xff]
    %v1502 = vld [vmem:[#allocation9 + $0x1c8] sm:$0xff]
    %v1503 = vld [vmem:[#allocation9 + $0x1d0] sm:$0xff]
    %v1504 = vld [vmem:[#allocation9 + $0x1d8] sm:$0xff]
    %v1505 = vld [vmem:[#allocation9 + $0x1e0] sm:$0xff]
    %v1506 = vld [vmem:[#allocation9 + $0x1e8] sm:$0xff]
    %v1507 = vld [vmem:[#allocation9 + $0x1f0] sm:$0xff]
    %v1508 = vld [vmem:[#allocation9 + $0x1f8] sm:$0xff]
    %v1509 = vld [vmem:[#allocation9 + $0x200] sm:$0xff]
    %v1510 = vld [vmem:[#allocation9 + $0x208] sm:$0xff]
    %v1511 = vld [vmem:[#allocation9 + $0x210] sm:$0xff]
    %v1512 = vld [vmem:[#allocation9 + $0x218] sm:$0xff]
    %v1513 = vld [vmem:[#allocation9 + $0x220] sm:$0xff]
    %v1514 = vld [vmem:[#allocation9 + $0x228] sm:$0xff]
    %v1515 = vld [vmem:[#allocation9 + $0x230] sm:$0xff]
    %v1516 = vld [vmem:[#allocation9 + $0x238] sm:$0xff]
    %v1517 = vld [vmem:[#allocation9 + $0x240] sm:$0xff]
    %v1518 = vld [vmem:[#allocation9 + $0x248] sm:$0xff]
    %v1519 = vld [vmem:[#allocation9 + $0x250] sm:$0xff]
    %v1520 = vld [vmem:[#allocation9 + $0x258] sm:$0xff]
    %v1521 = vld [vmem:[#allocation9 + $0x260] sm:$0xff]
    %v1522 = vld [vmem:[#allocation9 + $0x268] sm:$0xff]
    %v1523 = vld [vmem:[#allocation9 + $0x270] sm:$0xff]
    %v1524 = vld [vmem:[#allocation9 + $0x278] sm:$0xff]
    %v1525 = vld [vmem:[#allocation9 + $0x280] sm:$0xff]
    %v1526 = vld [vmem:[#allocation9 + $0x288] sm:$0xff]
    %v1527 = vld [vmem:[#allocation9 + $0x290] sm:$0xff]
    %v1528 = vld [vmem:[#allocation9 + $0x298] sm:$0xff]
    %v1529 = vld [vmem:[#allocation9 + $0x2a0] sm:$0xff]
    %v1530 = vld [vmem:[#allocation9 + $0x2a8] sm:$0xff]
    %v1531 = vld [vmem:[#allocation9 + $0x2b0] sm:$0xff]
    %v1532 = vld [vmem:[#allocation9 + $0x2b8] sm:$0xff]
    %v1533 = vld [vmem:[#allocation9 + $0x2c0] sm:$0xff]
    %v1534 = vld [vmem:[#allocation9 + $0x2c8] sm:$0xff]
    %v1535 = vld [vmem:[#allocation9 + $0x2d0] sm:$0xff]
    %v1536 = vld [vmem:[#allocation9 + $0x2d8] sm:$0xff]
    %v1537 = vld [vmem:[#allocation9 + $0x2e0] sm:$0xff]
    %v1538 = vld [vmem:[#allocation9 + $0x2e8] sm:$0xff]
    %v1539 = vld [vmem:[#allocation9 + $0x2f0] sm:$0xff]
    %v1540 = vld [vmem:[#allocation9 + $0x2f8] sm:$0xff]
    %v1541 = vld [vmem:[#allocation9 + $0x300] sm:$0xff]
    %v1542 = vld [vmem:[#allocation9 + $0x308] sm:$0xff]
    %v1543 = vld [vmem:[#allocation9 + $0x310] sm:$0xff]
    %v1544 = vld [vmem:[#allocation9 + $0x318] sm:$0xff]
    %v1545 = vld [vmem:[#allocation9 + $0x320] sm:$0xff]
    %v1546 = vld [vmem:[#allocation9 + $0x328] sm:$0xff]
    %v1547 = vld [vmem:[#allocation9 + $0x330] sm:$0xff]
    %v1548 = vld [vmem:[#allocation9 + $0x338] sm:$0xff]
    %v1549 = vld [vmem:[#allocation9 + $0x340] sm:$0xff]
    %v1550 = vld [vmem:[#allocation9 + $0x348] sm:$0xff]
    %v1551 = vld [vmem:[#allocation9 + $0x350] sm:$0xff]
    %v1552 = vld [vmem:[#allocation9 + $0x358] sm:$0xff]
    %v1553 = vld [vmem:[#allocation9 + $0x360] sm:$0xff]
    %v1554 = vld [vmem:[#allocation9 + $0x368] sm:$0xff]
    %v1555 = vld [vmem:[#allocation9 + $0x370] sm:$0xff]
    %v1556 = vld [vmem:[#allocation9 + $0x378] sm:$0xff]
    %v1557 = vld [vmem:[#allocation9 + $0x380] sm:$0xff]
    %v1558 = vld [vmem:[#allocation9 + $0x388] sm:$0xff]
    %v1559 = vld [vmem:[#allocation9 + $0x390] sm:$0xff]
    %v1560 = vld [vmem:[#allocation9 + $0x398] sm:$0xff]
    %v1561 = vld [vmem:[#allocation9 + $0x3a0] sm:$0xff]
    %v1562 = vld [vmem:[#allocation9 + $0x3a8] sm:$0xff]
    %v1563 = vld [vmem:[#allocation9 + $0x3b0] sm:$0xff]
    %v1564 = vld [vmem:[#allocation9 + $0x3b8] sm:$0xff]
    %v1565 = vld [vmem:[#allocation9 + $0x3c0] sm:$0xff]
    %v1566 = vld [vmem:[#allocation9 + $0x3c8] sm:$0xff]
    %v1567 = vld [vmem:[#allocation9 + $0x3d0] sm:$0xff]
    %v1568 = vld [vmem:[#allocation9 + $0x3d8] sm:$0xff]
    %v1569 = vld [vmem:[#allocation9 + $0x3e0] sm:$0xff]
    %v1570 = vld [vmem:[#allocation9 + $0x3e8] sm:$0xff]
    %v1571 = vld [vmem:[#allocation9 + $0x3f0] sm:$0xff]
    %v1572 = vld [vmem:[#allocation9 + $0x3f8] sm:$0xff]
    %v1573 = vld [vmem:[#allocation9 + $0x400] sm:$0xff]
    %v1574 = vld [vmem:[#allocation9 + $0x408] sm:$0xff]
    %v1575 = vld [vmem:[#allocation9 + $0x410] sm:$0xff]
    %v1576 = vld [vmem:[#allocation9 + $0x418] sm:$0xff]
    %v1577 = vld [vmem:[#allocation9 + $0x420] sm:$0xff]
    %v1578 = vld [vmem:[#allocation9 + $0x428] sm:$0xff]
    %v1579 = vld [vmem:[#allocation9 + $0x430] sm:$0xff]
    %v1580 = vld [vmem:[#allocation9 + $0x438] sm:$0xff]
    %v1581 = vld [vmem:[#allocation9 + $0x440] sm:$0xff]
    %v1582 = vld [vmem:[#allocation9 + $0x448] sm:$0xff]
    %v1583 = vld [vmem:[#allocation9 + $0x450] sm:$0xff]
    %v1584 = vld [vmem:[#allocation9 + $0x458] sm:$0xff]
    %v1585 = vld [vmem:[#allocation9 + $0x460] sm:$0xff]
    %v1586 = vld [vmem:[#allocation9 + $0x468] sm:$0xff]
    %v1587 = vld [vmem:[#allocation9 + $0x470] sm:$0xff]
    %v1588 = vld [vmem:[#allocation9 + $0x478] sm:$0xff]
    %v1589 = vld [vmem:[#allocation9 + $0x480] sm:$0xff]
    %v1590 = vld [vmem:[#allocation9 + $0x488] sm:$0xff]
    %v1591 = vld [vmem:[#allocation9 + $0x490] sm:$0xff]
    %v1592 = vld [vmem:[#allocation9 + $0x498] sm:$0xff]
    %v1593 = vld [vmem:[#allocation9 + $0x4a0] sm:$0xff]
    %v1594 = vld [vmem:[#allocation9 + $0x4a8] sm:$0xff]
    %v1595 = vld [vmem:[#allocation9 + $0x4b0] sm:$0xff]
    %v1596 = vld [vmem:[#allocation9 + $0x4b8] sm:$0xff]
    %v1597 = vld [vmem:[#allocation9 + $0x4c0] sm:$0xff]
    %v1598 = vld [vmem:[#allocation9 + $0x4c8] sm:$0xff]
    %v1599 = vld [vmem:[#allocation9 + $0x4d0] sm:$0xff]
    %v1600 = vld [vmem:[#allocation9 + $0x4d8] sm:$0xff]
    %v1601 = vld [vmem:[#allocation9 + $0x4e0] sm:$0xff]
    %v1602 = vld [vmem:[#allocation9 + $0x4e8] sm:$0xff]
    %v1603 = vld [vmem:[#allocation9 + $0x4f0] sm:$0xff]
    %v1604 = vld [vmem:[#allocation9 + $0x4f8] sm:$0xff]
    %v1605 = vld [vmem:[#allocation9 + $0x500] sm:$0xff]
    %v1606 = vld [vmem:[#allocation9 + $0x508] sm:$0xff]
    %v1607 = vld [vmem:[#allocation9 + $0x510] sm:$0xff]
    %v1608 = vld [vmem:[#allocation9 + $0x518] sm:$0xff]
    %v1609 = vld [vmem:[#allocation9 + $0x520] sm:$0xff]
    %v1610 = vld [vmem:[#allocation9 + $0x528] sm:$0xff]
    %v1611 = vld [vmem:[#allocation9 + $0x530] sm:$0xff]
    %v1612 = vld [vmem:[#allocation9 + $0x538] sm:$0xff]
    %v1613 = vld [vmem:[#allocation9 + $0x540] sm:$0xff]
    %v1614 = vld [vmem:[#allocation9 + $0x548] sm:$0xff]
    %v1615 = vld [vmem:[#allocation9 + $0x550] sm:$0xff]
    %v1616 = vld [vmem:[#allocation9 + $0x558] sm:$0xff]
    %v1617 = vld [vmem:[#allocation9 + $0x560] sm:$0xff]
    %v1618 = vld [vmem:[#allocation9 + $0x568] sm:$0xff]
    %v1619 = vld [vmem:[#allocation9 + $0x570] sm:$0xff]
    %v1620 = vld [vmem:[#allocation9 + $0x578] sm:$0xff]
    %v1621 = vld [vmem:[#allocation9 + $0x580] sm:$0xff]
    %v1622 = vld [vmem:[#allocation9 + $0x588] sm:$0xff]
    %v1623 = vld [vmem:[#allocation9 + $0x590] sm:$0xff]
    %v1624 = vld [vmem:[#allocation9 + $0x598] sm:$0xff]
    %v1625 = vld [vmem:[#allocation9 + $0x5a0] sm:$0xff]
    %v1626 = vld [vmem:[#allocation9 + $0x5a8] sm:$0xff]
    %v1627 = vld [vmem:[#allocation9 + $0x5b0] sm:$0xff]
    %v1628 = vld [vmem:[#allocation9 + $0x5b8] sm:$0xff]
    %v1629 = vld [vmem:[#allocation9 + $0x5c0] sm:$0xff]
    %v1630 = vld [vmem:[#allocation9 + $0x5c8] sm:$0xff]
    %v1631 = vld [vmem:[#allocation9 + $0x5d0] sm:$0xff]
    %v1632 = vld [vmem:[#allocation9 + $0x5d8] sm:$0xff]
    %v1633 = vld [vmem:[#allocation9 + $0x5e0] sm:$0xff]
    %v1634 = vld [vmem:[#allocation9 + $0x5e8] sm:$0xff]
    %v1635 = vld [vmem:[#allocation9 + $0x5f0] sm:$0xff]
    %v1636 = vld [vmem:[#allocation9 + $0x5f8] sm:$0xff]
    %v1637 = vld [vmem:[#allocation9 + $0x600] sm:$0xff]
    %v1638 = vld [vmem:[#allocation9 + $0x608] sm:$0xff]
    %v1639 = vld [vmem:[#allocation9 + $0x610] sm:$0xff]
    %v1640 = vld [vmem:[#allocation9 + $0x618] sm:$0xff]
    %v1641 = vld [vmem:[#allocation9 + $0x620] sm:$0xff]
    %v1642 = vld [vmem:[#allocation9 + $0x628] sm:$0xff]
    %v1643 = vld [vmem:[#allocation9 + $0x630] sm:$0xff]
    %v1644 = vld [vmem:[#allocation9 + $0x638] sm:$0xff]
    %v1645 = vld [vmem:[#allocation9 + $0x640] sm:$0xff]
    %v1646 = vld [vmem:[#allocation9 + $0x648] sm:$0xff]
    %v1647 = vld [vmem:[#allocation9 + $0x650] sm:$0xff]
    %v1648 = vld [vmem:[#allocation9 + $0x658] sm:$0xff]
    %v1649 = vld [vmem:[#allocation9 + $0x660] sm:$0xff]
    %v1650 = vld [vmem:[#allocation9 + $0x668] sm:$0xff]
    %v1651 = vld [vmem:[#allocation9 + $0x670] sm:$0xff]
    %v1652 = vld [vmem:[#allocation9 + $0x678] sm:$0xff]
    %v1653 = vld [vmem:[#allocation9 + $0x680] sm:$0xff]
    %v1654 = vld [vmem:[#allocation9 + $0x688] sm:$0xff]
    %v1655 = vld [vmem:[#allocation9 + $0x690] sm:$0xff]
    %v1656 = vld [vmem:[#allocation9 + $0x698] sm:$0xff]
    %v1657 = vld [vmem:[#allocation9 + $0x6a0] sm:$0xff]
    %v1658 = vld [vmem:[#allocation9 + $0x6a8] sm:$0xff]
    %v1659 = vld [vmem:[#allocation9 + $0x6b0] sm:$0xff]
    %v1660 = vld [vmem:[#allocation9 + $0x6b8] sm:$0xff]
    %v1661 = vld [vmem:[#allocation9 + $0x6c0] sm:$0xff]
    %v1662 = vld [vmem:[#allocation9 + $0x6c8] sm:$0xff]
    %v1663 = vld [vmem:[#allocation9 + $0x6d0] sm:$0xff]
    %v1664 = vld [vmem:[#allocation9 + $0x6d8] sm:$0xff]
    %v1665 = vld [vmem:[#allocation9 + $0x6e0] sm:$0xff]
    %v1666 = vld [vmem:[#allocation9 + $0x6e8] sm:$0xff]
    %v1667 = vld [vmem:[#allocation9 + $0x6f0] sm:$0xff]
    %v1668 = vld [vmem:[#allocation9 + $0x6f8] sm:$0xff]
    %v1669 = vld [vmem:[#allocation9 + $0x700] sm:$0xff]
    %v1670 = vld [vmem:[#allocation9 + $0x708] sm:$0xff]
    %v1671 = vld [vmem:[#allocation9 + $0x710] sm:$0xff]
    %v1672 = vld [vmem:[#allocation9 + $0x718] sm:$0xff]
    %v1673 = vld [vmem:[#allocation9 + $0x720] sm:$0xff]
    %v1674 = vld [vmem:[#allocation9 + $0x728] sm:$0xff]
    %v1675 = vld [vmem:[#allocation9 + $0x730] sm:$0xff]
    %v1676 = vld [vmem:[#allocation9 + $0x738] sm:$0xff]
    %v1677 = vld [vmem:[#allocation9 + $0x740] sm:$0xff]
    %v1678 = vld [vmem:[#allocation9 + $0x748] sm:$0xff]
    %v1679 = vld [vmem:[#allocation9 + $0x750] sm:$0xff]
    %v1680 = vld [vmem:[#allocation9 + $0x758] sm:$0xff]
    %v1681 = vld [vmem:[#allocation9 + $0x760] sm:$0xff]
    %v1682 = vld [vmem:[#allocation9 + $0x768] sm:$0xff]
    %v1683 = vld [vmem:[#allocation9 + $0x770] sm:$0xff]
    %v1684 = vld [vmem:[#allocation9 + $0x778] sm:$0xff]
    %v1685 = vld [vmem:[#allocation9 + $0x780] sm:$0xff]
    %v1686 = vld [vmem:[#allocation9 + $0x788] sm:$0xff]
    %v1687 = vld [vmem:[#allocation9 + $0x790] sm:$0xff]
    %v1688 = vld [vmem:[#allocation9 + $0x798] sm:$0xff]
    %v1689 = vld [vmem:[#allocation9 + $0x7a0] sm:$0xff]
    %v1690 = vld [vmem:[#allocation9 + $0x7a8] sm:$0xff]
    %v1691 = vld [vmem:[#allocation9 + $0x7b0] sm:$0xff]
    %v1692 = vld [vmem:[#allocation9 + $0x7b8] sm:$0xff]
    %v1693 = vld [vmem:[#allocation9 + $0x7c0] sm:$0xff]
    %v1694 = vld [vmem:[#allocation9 + $0x7c8] sm:$0xff]
    %v1695 = vld [vmem:[#allocation9 + $0x7d0] sm:$0xff]
    %v1696 = vld [vmem:[#allocation9 + $0x7d8] sm:$0xff]
    %v1697 = vld [vmem:[#allocation9 + $0x7e0] sm:$0xff]
    %v1698 = vld [vmem:[#allocation9 + $0x7e8] sm:$0xff]
    %v1699 = vld [vmem:[#allocation9 + $0x7f0] sm:$0xff]
    %v1700 = vld [vmem:[#allocation9 + $0x7f8] sm:$0xff]
    %v1701 = vld [vmem:[#allocation9 + $0x800] sm:$0xff]
    %v1702 = vld [vmem:[#allocation9 + $0x808] sm:$0xff]
    %v1703 = vld [vmem:[#allocation9 + $0x810] sm:$0xff]
    %v1704 = vld [vmem:[#allocation9 + $0x818] sm:$0xff]
    %v1705 = vld [vmem:[#allocation9 + $0x820] sm:$0xff]
    %v1706 = vld [vmem:[#allocation9 + $0x828] sm:$0xff]
    %v1707 = vld [vmem:[#allocation9 + $0x830] sm:$0xff]
    %v1708 = vld [vmem:[#allocation9 + $0x838] sm:$0xff]
    %v1709 = vld [vmem:[#allocation9 + $0x840] sm:$0xff]
    %v1710 = vld [vmem:[#allocation9 + $0x848] sm:$0xff]
    %v1711 = vld [vmem:[#allocation9 + $0x850] sm:$0xff]
    %v1712 = vld [vmem:[#allocation9 + $0x858] sm:$0xff]
    %v1713 = vld [vmem:[#allocation9 + $0x860] sm:$0xff]
    %v1714 = vld [vmem:[#allocation9 + $0x868] sm:$0xff]
    %v1715 = vld [vmem:[#allocation9 + $0x870] sm:$0xff]
    %v1716 = vld [vmem:[#allocation9 + $0x878] sm:$0xff]
    %v1717 = vld [vmem:[#allocation9 + $0x880] sm:$0xff]
    %v1718 = vld [vmem:[#allocation9 + $0x888] sm:$0xff]
    %v1719 = vld [vmem:[#allocation9 + $0x890] sm:$0xff]
    %v1720 = vld [vmem:[#allocation9 + $0x898] sm:$0xff]
    %v1721 = vld [vmem:[#allocation9 + $0x8a0] sm:$0xff]
    %v1722 = vld [vmem:[#allocation9 + $0x8a8] sm:$0xff]
    %v1723 = vld [vmem:[#allocation9 + $0x8b0] sm:$0xff]
    %v1724 = vld [vmem:[#allocation9 + $0x8b8] sm:$0xff]
    %v1725 = vld [vmem:[#allocation9 + $0x8c0] sm:$0xff]
    %v1726 = vld [vmem:[#allocation9 + $0x8c8] sm:$0xff]
    %v1727 = vld [vmem:[#allocation9 + $0x8d0] sm:$0xff]
    %v1728 = vld [vmem:[#allocation9 + $0x8d8] sm:$0xff]
    %v1729 = vld [vmem:[#allocation9 + $0x8e0] sm:$0xff]
    %v1730 = vld [vmem:[#allocation9 + $0x8e8] sm:$0xff]
    %v1731 = vld [vmem:[#allocation9 + $0x8f0] sm:$0xff]
    %v1732 = vld [vmem:[#allocation9 + $0x8f8] sm:$0xff]
    %v1733 = vld [vmem:[#allocation9 + $0x900] sm:$0xff]
    %v1734 = vld [vmem:[#allocation9 + $0x908] sm:$0xff]
    %v1735 = vld [vmem:[#allocation9 + $0x910] sm:$0xff]
    %v1736 = vld [vmem:[#allocation9 + $0x918] sm:$0xff]
    %v1737 = vld [vmem:[#allocation9 + $0x920] sm:$0xff]
    %v1738 = vld [vmem:[#allocation9 + $0x928] sm:$0xff]
    %v1739 = vld [vmem:[#allocation9 + $0x930] sm:$0xff]
    %v1740 = vld [vmem:[#allocation9 + $0x938] sm:$0xff]
    %v1741 = vld [vmem:[#allocation9 + $0x940] sm:$0xff]
    %v1742 = vld [vmem:[#allocation9 + $0x948] sm:$0xff]
    %v1743 = vld [vmem:[#allocation9 + $0x950] sm:$0xff]
    %v1744 = vld [vmem:[#allocation9 + $0x958] sm:$0xff]
    %v1745 = vld [vmem:[#allocation9 + $0x960] sm:$0xff]
    %v1746 = vld [vmem:[#allocation9 + $0x968] sm:$0xff]
    %v1747 = vld [vmem:[#allocation9 + $0x970] sm:$0xff]
    %v1748 = vld [vmem:[#allocation9 + $0x978] sm:$0xff]
    %v1749 = vld [vmem:[#allocation9 + $0x980] sm:$0xff]
    %v1750 = vld [vmem:[#allocation9 + $0x988] sm:$0xff]
    %v1751 = vld [vmem:[#allocation9 + $0x990] sm:$0xff]
    %v1752 = vld [vmem:[#allocation9 + $0x998] sm:$0xff]
    %v1753 = vld [vmem:[#allocation9 + $0x9a0] sm:$0xff]
    %v1754 = vld [vmem:[#allocation9 + $0x9a8] sm:$0xff]
    %v1755 = vld [vmem:[#allocation9 + $0x9b0] sm:$0xff]
    %v1756 = vld [vmem:[#allocation9 + $0x9b8] sm:$0xff]
    %v1757 = vld [vmem:[#allocation9 + $0x9c0] sm:$0xff]
    %v1758 = vld [vmem:[#allocation9 + $0x9c8] sm:$0xff]
    %v1759 = vld [vmem:[#allocation9 + $0x9d0] sm:$0xff]
    %v1760 = vld [vmem:[#allocation9 + $0x9d8] sm:$0xff]
    %v1761 = vld [vmem:[#allocation9 + $0x9e0] sm:$0xff]
    %v1762 = vld [vmem:[#allocation9 + $0x9e8] sm:$0xff]
    %v1763 = vld [vmem:[#allocation9 + $0x9f0] sm:$0xff]
    %v1764 = vld [vmem:[#allocation9 + $0x9f8] sm:$0xff]
    %v1765 = vld [vmem:[#allocation9 + $0xa00] sm:$0xff]
    %v1766 = vld [vmem:[#allocation9 + $0xa08] sm:$0xff]
    %v1767 = vld [vmem:[#allocation9 + $0xa10] sm:$0xff]
    %v1768 = vld [vmem:[#allocation9 + $0xa18] sm:$0xff]
    %v1769 = vld [vmem:[#allocation9 + $0xa20] sm:$0xff]
    %v1770 = vld [vmem:[#allocation9 + $0xa28] sm:$0xff]
    %v1771 = vld [vmem:[#allocation9 + $0xa30] sm:$0xff]
    %v1772 = vld [vmem:[#allocation9 + $0xa38] sm:$0xff]
    %v1773 = vld [vmem:[#allocation9 + $0xa40] sm:$0xff]
    %v1774 = vld [vmem:[#allocation9 + $0xa48] sm:$0xff]
    %v1775 = vld [vmem:[#allocation9 + $0xa50] sm:$0xff]
    %v1776 = vld [vmem:[#allocation9 + $0xa58] sm:$0xff]
    %v1777 = vld [vmem:[#allocation9 + $0xa60] sm:$0xff]
    %v1778 = vld [vmem:[#allocation9 + $0xa68] sm:$0xff]
    %v1779 = vld [vmem:[#allocation9 + $0xa70] sm:$0xff]
    %v1780 = vld [vmem:[#allocation9 + $0xa78] sm:$0xff]
    %v1781 = vld [vmem:[#allocation9 + $0xa80] sm:$0xff]
    %v1782 = vld [vmem:[#allocation9 + $0xa88] sm:$0xff]
    %v1783 = vld [vmem:[#allocation9 + $0xa90] sm:$0xff]
    %v1784 = vld [vmem:[#allocation9 + $0xa98] sm:$0xff]
    %v1785 = vld [vmem:[#allocation9 + $0xaa0] sm:$0xff]
    %v1786 = vld [vmem:[#allocation9 + $0xaa8] sm:$0xff]
    %v1787 = vld [vmem:[#allocation9 + $0xab0] sm:$0xff]
    %v1788 = vld [vmem:[#allocation9 + $0xab8] sm:$0xff]
    %v1789 = vld [vmem:[#allocation9 + $0xac0] sm:$0xff]
    %v1790 = vld [vmem:[#allocation9 + $0xac8] sm:$0xff]
    %v1791 = vld [vmem:[#allocation9 + $0xad0] sm:$0xff]
    %v1792 = vld [vmem:[#allocation9 + $0xad8] sm:$0xff]
    %v1793 = vld [vmem:[#allocation9 + $0xae0] sm:$0xff]
    %v1794 = vld [vmem:[#allocation9 + $0xae8] sm:$0xff]
    %v1795 = vld [vmem:[#allocation9 + $0xaf0] sm:$0xff]
    %v1796 = vld [vmem:[#allocation9 + $0xaf8] sm:$0xff]
    %v1797 = vld [vmem:[#allocation9 + $0xb00] sm:$0xff]
    %v1798 = vld [vmem:[#allocation9 + $0xb08] sm:$0xff]
    %v1799 = vld [vmem:[#allocation9 + $0xb10] sm:$0xff]
    %v1800 = vld [vmem:[#allocation9 + $0xb18] sm:$0xff]
    %v1801 = vld [vmem:[#allocation9 + $0xb20] sm:$0xff]
    %v1802 = vld [vmem:[#allocation9 + $0xb28] sm:$0xff]
    %v1803 = vld [vmem:[#allocation9 + $0xb30] sm:$0xff]
    %v1804 = vld [vmem:[#allocation9 + $0xb38] sm:$0xff]
    %v1805 = vld [vmem:[#allocation9 + $0xb40] sm:$0xff]
    %v1806 = vld [vmem:[#allocation9 + $0xb48] sm:$0xff]
    %v1807 = vld [vmem:[#allocation9 + $0xb50] sm:$0xff]
    %v1808 = vld [vmem:[#allocation9 + $0xb58] sm:$0xff]
    %v1809 = vld [vmem:[#allocation9 + $0xb60] sm:$0xff]
    %v1810 = vld [vmem:[#allocation9 + $0xb68] sm:$0xff]
    %v1811 = vld [vmem:[#allocation9 + $0xb70] sm:$0xff]
    %v1812 = vld [vmem:[#allocation9 + $0xb78] sm:$0xff]
    %v1813 = vld [vmem:[#allocation9 + $0xb80] sm:$0xff]
    %v1814 = vld [vmem:[#allocation9 + $0xb88] sm:$0xff]
    %v1815 = vld [vmem:[#allocation9 + $0xb90] sm:$0xff]
    %v1816 = vld [vmem:[#allocation9 + $0xb98] sm:$0xff]
    %v1817 = vld [vmem:[#allocation9 + $0xba0] sm:$0xff]
    %v1818 = vld [vmem:[#allocation9 + $0xba8] sm:$0xff]
    %v1819 = vld [vmem:[#allocation9 + $0xbb0] sm:$0xff]
    %v1820 = vld [vmem:[#allocation9 + $0xbb8] sm:$0xff]
    %v1821 = vld [vmem:[#allocation9 + $0xbc0] sm:$0xff]
    %v1822 = vld [vmem:[#allocation9 + $0xbc8] sm:$0xff]
    %v1823 = vld [vmem:[#allocation9 + $0xbd0] sm:$0xff]
    %v1824 = vld [vmem:[#allocation9 + $0xbd8] sm:$0xff]
    %v1825 = vld [vmem:[#allocation9 + $0xbe0] sm:$0xff]
    %v1826 = vld [vmem:[#allocation9 + $0xbe8] sm:$0xff]
    %v1827 = vld [vmem:[#allocation9 + $0xbf0] sm:$0xff]
    %v1828 = vld [vmem:[#allocation9 + $0xbf8] sm:$0xff]
    %v1829 = vld [vmem:[#allocation9 + $0xc00] sm:$0xff]
    %v1830 = vld [vmem:[#allocation9 + $0xc08] sm:$0xff]
    %v1831 = vld [vmem:[#allocation9 + $0xc10] sm:$0xff]
    %v1832 = vld [vmem:[#allocation9 + $0xc18] sm:$0xff]
    %v1833 = vld [vmem:[#allocation9 + $0xc20] sm:$0xff]
    %v1834 = vld [vmem:[#allocation9 + $0xc28] sm:$0xff]
    %v1835 = vld [vmem:[#allocation9 + $0xc30] sm:$0xff]
    %v1836 = vld [vmem:[#allocation9 + $0xc38] sm:$0xff]
    %v1837 = vld [vmem:[#allocation9 + $0xc40] sm:$0xff]
    %v1838 = vld [vmem:[#allocation9 + $0xc48] sm:$0xff]
    %v1839 = vld [vmem:[#allocation9 + $0xc50] sm:$0xff]
    %v1840 = vld [vmem:[#allocation9 + $0xc58] sm:$0xff]
    %v1841 = vld [vmem:[#allocation9 + $0xc60] sm:$0xff]
    %v1842 = vld [vmem:[#allocation9 + $0xc68] sm:$0xff]
    %v1843 = vld [vmem:[#allocation9 + $0xc70] sm:$0xff]
    %v1844 = vld [vmem:[#allocation9 + $0xc78] sm:$0xff]
    %v1845 = vld [vmem:[#allocation9 + $0xc80] sm:$0xff]
    %v1846 = vld [vmem:[#allocation9 + $0xc88] sm:$0xff]
    %v1847 = vld [vmem:[#allocation9 + $0xc90] sm:$0xff]
    %v1848 = vld [vmem:[#allocation9 + $0xc98] sm:$0xff]
    %v1849 = vld [vmem:[#allocation9 + $0xca0] sm:$0xff]
    %v1850 = vld [vmem:[#allocation9 + $0xca8] sm:$0xff]
    %v1851 = vld [vmem:[#allocation9 + $0xcb0] sm:$0xff]
    %v1852 = vld [vmem:[#allocation9 + $0xcb8] sm:$0xff]
    %v1853 = vld [vmem:[#allocation9 + $0xcc0] sm:$0xff]
    %v1854 = vld [vmem:[#allocation9 + $0xcc8] sm:$0xff]
    %v1855 = vld [vmem:[#allocation9 + $0xcd0] sm:$0xff]
    %v1856 = vld [vmem:[#allocation9 + $0xcd8] sm:$0xff]
    %v1857 = vld [vmem:[#allocation9 + $0xce0] sm:$0xff]
    %v1858 = vld [vmem:[#allocation9 + $0xce8] sm:$0xff]
    %v1859 = vld [vmem:[#allocation9 + $0xcf0] sm:$0xff]
    %v1860 = vld [vmem:[#allocation9 + $0xcf8] sm:$0xff]
    %v1861 = vld [vmem:[#allocation9 + $0xd00] sm:$0xff]
    %v1862 = vld [vmem:[#allocation9 + $0xd08] sm:$0xff]
    %v1863 = vld [vmem:[#allocation9 + $0xd10] sm:$0xff]
    %v1864 = vld [vmem:[#allocation9 + $0xd18] sm:$0xff]
    %v1865 = vld [vmem:[#allocation9 + $0xd20] sm:$0xff]
    %v1866 = vld [vmem:[#allocation9 + $0xd28] sm:$0xff]
    %v1867 = vld [vmem:[#allocation9 + $0xd30] sm:$0xff]
    %v1868 = vld [vmem:[#allocation9 + $0xd38] sm:$0xff]
    %v1869 = vld [vmem:[#allocation9 + $0xd40] sm:$0xff]
    %v1870 = vld [vmem:[#allocation9 + $0xd48] sm:$0xff]
    %v1871 = vld [vmem:[#allocation9 + $0xd50] sm:$0xff]
    %v1872 = vld [vmem:[#allocation9 + $0xd58] sm:$0xff]
    %v1873 = vld [vmem:[#allocation9 + $0xd60] sm:$0xff]
    %v1874 = vld [vmem:[#allocation9 + $0xd68] sm:$0xff]
    %v1875 = vld [vmem:[#allocation9 + $0xd70] sm:$0xff]
    %v1876 = vld [vmem:[#allocation9 + $0xd78] sm:$0xff]
    %v1877 = vld [vmem:[#allocation9 + $0xd80] sm:$0xff]
    %v1878 = vld [vmem:[#allocation9 + $0xd88] sm:$0xff]
    %v1879 = vld [vmem:[#allocation9 + $0xd90] sm:$0xff]
    %v1880 = vld [vmem:[#allocation9 + $0xd98] sm:$0xff]
    %v1881 = vld [vmem:[#allocation9 + $0xda0] sm:$0xff]
    %v1882 = vld [vmem:[#allocation9 + $0xda8] sm:$0xff]
    %v1883 = vld [vmem:[#allocation9 + $0xdb0] sm:$0xff]
    %v1884 = vld [vmem:[#allocation9 + $0xdb8] sm:$0xff]
    %v1885 = vld [vmem:[#allocation9 + $0xdc0] sm:$0xff]
    %v1886 = vld [vmem:[#allocation9 + $0xdc8] sm:$0xff]
    %v1887 = vld [vmem:[#allocation9 + $0xdd0] sm:$0xff]
    %v1888 = vld [vmem:[#allocation9 + $0xdd8] sm:$0xff]
    %v1889 = vld [vmem:[#allocation9 + $0xde0] sm:$0xff]
    %v1890 = vld [vmem:[#allocation9 + $0xde8] sm:$0xff]
    %v1891 = vld [vmem:[#allocation9 + $0xdf0] sm:$0xff]
    %v1892 = vld [vmem:[#allocation9 + $0xdf8] sm:$0xff]
    %v1893 = vld [vmem:[#allocation9 + $0xe00] sm:$0xff]
    %v1894 = vld [vmem:[#allocation9 + $0xe08] sm:$0xff]
    %v1895 = vld [vmem:[#allocation9 + $0xe10] sm:$0xff]
    %v1896 = vld [vmem:[#allocation9 + $0xe18] sm:$0xff]
    %v1897 = vld [vmem:[#allocation9 + $0xe20] sm:$0xff]
    %v1898 = vld [vmem:[#allocation9 + $0xe28] sm:$0xff]
    %v1899 = vld [vmem:[#allocation9 + $0xe30] sm:$0xff]
    %v1900 = vld [vmem:[#allocation9 + $0xe38] sm:$0xff]
    %v1901 = vld [vmem:[#allocation9 + $0xe40] sm:$0xff]
    %v1902 = vld [vmem:[#allocation9 + $0xe48] sm:$0xff]
    %v1903 = vld [vmem:[#allocation9 + $0xe50] sm:$0xff]
    %v1904 = vld [vmem:[#allocation9 + $0xe58] sm:$0xff]
    %v1905 = vld [vmem:[#allocation9 + $0xe60] sm:$0xff]
    %v1906 = vld [vmem:[#allocation9 + $0xe68] sm:$0xff]
    %v1907 = vld [vmem:[#allocation9 + $0xe70] sm:$0xff]
    %v1908 = vld [vmem:[#allocation9 + $0xe78] sm:$0xff]
    %v1909 = vld [vmem:[#allocation9 + $0xe80] sm:$0xff]
    %v1910 = vld [vmem:[#allocation9 + $0xe88] sm:$0xff]
    %v1911 = vld [vmem:[#allocation9 + $0xe90] sm:$0xff]
    %v1912 = vld [vmem:[#allocation9 + $0xe98] sm:$0xff]
    %v1913 = vld [vmem:[#allocation9 + $0xea0] sm:$0xff]
    %v1914 = vld [vmem:[#allocation9 + $0xea8] sm:$0xff]
    %v1915 = vld [vmem:[#allocation9 + $0xeb0] sm:$0xff]
    %v1916 = vld [vmem:[#allocation9 + $0xeb8] sm:$0xff]
    %v1917 = vld [vmem:[#allocation9 + $0xec0] sm:$0xff]
    %v1918 = vld [vmem:[#allocation9 + $0xec8] sm:$0xff]
    %v1919 = vld [vmem:[#allocation9 + $0xed0] sm:$0xff]
    %v1920 = vld [vmem:[#allocation9 + $0xed8] sm:$0xff]
    %v1921 = vld [vmem:[#allocation9 + $0xee0] sm:$0xff]
    %v1922 = vld [vmem:[#allocation9 + $0xee8] sm:$0xff]
    %v1923 = vld [vmem:[#allocation9 + $0xef0] sm:$0xff]
    %v1924 = vld [vmem:[#allocation9 + $0xef8] sm:$0xff]
    %v1925 = vld [vmem:[#allocation9 + $0xf00] sm:$0xff]
    %v1926 = vld [vmem:[#allocation9 + $0xf08] sm:$0xff]
    %v1927 = vld [vmem:[#allocation9 + $0xf10] sm:$0xff]
    %v1928 = vld [vmem:[#allocation9 + $0xf18] sm:$0xff]
    %v1929 = vld [vmem:[#allocation9 + $0xf20] sm:$0xff]
    %v1930 = vld [vmem:[#allocation9 + $0xf28] sm:$0xff]
    %v1931 = vld [vmem:[#allocation9 + $0xf30] sm:$0xff]
    %v1932 = vld [vmem:[#allocation9 + $0xf38] sm:$0xff]
    %v1933 = vld [vmem:[#allocation9 + $0xf40] sm:$0xff]
    %v1934 = vld [vmem:[#allocation9 + $0xf48] sm:$0xff]
    %v1935 = vld [vmem:[#allocation9 + $0xf50] sm:$0xff]
    %v1936 = vld [vmem:[#allocation9 + $0xf58] sm:$0xff]
    %v1937 = vld [vmem:[#allocation9 + $0xf60] sm:$0xff]
    %v1938 = vld [vmem:[#allocation9 + $0xf68] sm:$0xff]
    %v1939 = vld [vmem:[#allocation9 + $0xf70] sm:$0xff]
    %v1940 = vld [vmem:[#allocation9 + $0xf78] sm:$0xff]
    %v1941 = vld [vmem:[#allocation9 + $0xf80] sm:$0xff]
    %v1942 = vld [vmem:[#allocation9 + $0xf88] sm:$0xff]
    %v1943 = vld [vmem:[#allocation9 + $0xf90] sm:$0xff]
    %v1944 = vld [vmem:[#allocation9 + $0xf98] sm:$0xff]
    %v1945 = vld [vmem:[#allocation9 + $0xfa0] sm:$0xff]
    %v1946 = vld [vmem:[#allocation9 + $0xfa8] sm:$0xff]
    %v1947 = vld [vmem:[#allocation9 + $0xfb0] sm:$0xff]
    %v1948 = vld [vmem:[#allocation9 + $0xfb8] sm:$0xff]
    %v1949 = vld [vmem:[#allocation9 + $0xfc0] sm:$0xff]
    %v1950 = vld [vmem:[#allocation9 + $0xfc8] sm:$0xff]
    %v1951 = vld [vmem:[#allocation9 + $0xfd0] sm:$0xff]
    %v1952 = vld [vmem:[#allocation9 + $0xfd8] sm:$0xff]
    %v1953 = vld [vmem:[#allocation9 + $0xfe0] sm:$0xff]
    %v1954 = vld [vmem:[#allocation9 + $0xfe8] sm:$0xff]
    %v1955 = vld [vmem:[#allocation9 + $0xff0] sm:$0xff]
    %v1956 = vld [vmem:[#allocation9 + $0xff8] sm:$0xff]
    %v1957 = vld [vmem:[#allocation9 + $0x1000] sm:$0xff]
    %v1958 = vld [vmem:[#allocation9 + $0x1008] sm:$0xff]
    %v1959 = vld [vmem:[#allocation9 + $0x1010] sm:$0xff]
    %v1960 = vld [vmem:[#allocation9 + $0x1018] sm:$0xff]
    %v1961 = vld [vmem:[#allocation9 + $0x1020] sm:$0xff]
    %v1962 = vld [vmem:[#allocation9 + $0x1028] sm:$0xff]
    %v1963 = vld [vmem:[#allocation9 + $0x1030] sm:$0xff]
    %v1964 = vld [vmem:[#allocation9 + $0x1038] sm:$0xff]
    %v1965 = vld [vmem:[#allocation9 + $0x1040] sm:$0xff]
    %v1966 = vld [vmem:[#allocation9 + $0x1048] sm:$0xff]
    %v1967 = vld [vmem:[#allocation9 + $0x1050] sm:$0xff]
    %v1968 = vld [vmem:[#allocation9 + $0x1058] sm:$0xff]
    %v1969 = vld [vmem:[#allocation9 + $0x1060] sm:$0xff]
    %v1970 = vld [vmem:[#allocation9 + $0x1068] sm:$0xff]
    %v1971 = vld [vmem:[#allocation9 + $0x1070] sm:$0xff]
    %v1972 = vld [vmem:[#allocation9 + $0x1078] sm:$0xff]
    %v1973 = vld [vmem:[#allocation9 + $0x1080] sm:$0xff]
    %v1974 = vld [vmem:[#allocation9 + $0x1088] sm:$0xff]
    %v1975 = vld [vmem:[#allocation9 + $0x1090] sm:$0xff]
    %v1976 = vld [vmem:[#allocation9 + $0x1098] sm:$0xff]
    %v1977 = vld [vmem:[#allocation9 + $0x10a0] sm:$0xff]
    %v1978 = vld [vmem:[#allocation9 + $0x10a8] sm:$0xff]
    %v1979 = vld [vmem:[#allocation9 + $0x10b0] sm:$0xff]
    %v1980 = vld [vmem:[#allocation9 + $0x10b8] sm:$0xff]
    %v1981 = vld [vmem:[#allocation9 + $0x10c0] sm:$0xff]
    %v1982 = vld [vmem:[#allocation9 + $0x10c8] sm:$0xff]
    %v1983 = vld [vmem:[#allocation9 + $0x10d0] sm:$0xff]
    %v1984 = vld [vmem:[#allocation9 + $0x10d8] sm:$0xff]
    %v1985 = vld [vmem:[#allocation9 + $0x10e0] sm:$0xff]
    %v1986 = vld [vmem:[#allocation9 + $0x10e8] sm:$0xff]
    %v1987 = vld [vmem:[#allocation9 + $0x10f0] sm:$0xff]
    %v1988 = vld [vmem:[#allocation9 + $0x10f8] sm:$0xff]
    %v1989 = vld [vmem:[#allocation9 + $0x1100] sm:$0xff]
    %v1990 = vld [vmem:[#allocation9 + $0x1108] sm:$0xff]
    %v1991 = vld [vmem:[#allocation9 + $0x1110] sm:$0xff]
    %v1992 = vld [vmem:[#allocation9 + $0x1118] sm:$0xff]
    %v1993 = vld [vmem:[#allocation9 + $0x1120] sm:$0xff]
    %v1994 = vld [vmem:[#allocation9 + $0x1128] sm:$0xff]
    %v1995 = vld [vmem:[#allocation9 + $0x1130] sm:$0xff]
    %v1996 = vld [vmem:[#allocation9 + $0x1138] sm:$0xff]
    %v1997 = vld [vmem:[#allocation9 + $0x1140] sm:$0xff]
    %v1998 = vld [vmem:[#allocation9 + $0x1148] sm:$0xff]
    %v1999 = vld [vmem:[#allocation9 + $0x1150] sm:$0xff]
    %v2000 = vld [vmem:[#allocation9 + $0x1158] sm:$0xff]
    %v2001 = vld [vmem:[#allocation9 + $0x1160] sm:$0xff]
    %v2002 = vld [vmem:[#allocation9 + $0x1168] sm:$0xff]
    %v2003 = vld [vmem:[#allocation9 + $0x1170] sm:$0xff]
    %v2004 = vld [vmem:[#allocation9 + $0x1178] sm:$0xff]
    %v2005 = vld [vmem:[#allocation9 + $0x1180] sm:$0xff]
    %v2006 = vld [vmem:[#allocation9 + $0x1188] sm:$0xff]
    %v2007 = vld [vmem:[#allocation9 + $0x1190] sm:$0xff]
    %v2008 = vld [vmem:[#allocation9 + $0x1198] sm:$0xff]
    %v2009 = vld [vmem:[#allocation9 + $0x11a0] sm:$0xff]
    %v2010 = vld [vmem:[#allocation9 + $0x11a8] sm:$0xff]
    %v2011 = vld [vmem:[#allocation9 + $0x11b0] sm:$0xff]
    %v2012 = vld [vmem:[#allocation9 + $0x11b8] sm:$0xff]
    %v2013 = vld [vmem:[#allocation9 + $0x11c0] sm:$0xff]
    %v2014 = vld [vmem:[#allocation9 + $0x11c8] sm:$0xff]
    %v2015 = vld [vmem:[#allocation9 + $0x11d0] sm:$0xff]
    %v2016 = vld [vmem:[#allocation9 + $0x11d8] sm:$0xff]
    %v2017 = vld [vmem:[#allocation9 + $0x11e0] sm:$0xff]
    %v2018 = vld [vmem:[#allocation9 + $0x11e8] sm:$0xff]
    %v2019 = vld [vmem:[#allocation9 + $0x11f0] sm:$0xff]
    %v2020 = vld [vmem:[#allocation9 + $0x11f8] sm:$0xff]
    %v2021 = vld [vmem:[#allocation9 + $0x1200] sm:$0xff]
    %v2022 = vld [vmem:[#allocation9 + $0x1208] sm:$0xff]
    %v2023 = vld [vmem:[#allocation9 + $0x1210] sm:$0xff]
    %v2024 = vld [vmem:[#allocation9 + $0x1218] sm:$0xff]
    %v2025 = vld [vmem:[#allocation9 + $0x1220] sm:$0xff]
    %v2026 = vld [vmem:[#allocation9 + $0x1228] sm:$0xff]
    %v2027 = vld [vmem:[#allocation9 + $0x1230] sm:$0xff]
    %v2028 = vld [vmem:[#allocation9 + $0x1238] sm:$0xff]
    %v2029 = vld [vmem:[#allocation9 + $0x1240] sm:$0xff]
    %v2030 = vld [vmem:[#allocation9 + $0x1248] sm:$0xff]
    %v2031 = vld [vmem:[#allocation9 + $0x1250] sm:$0xff]
    %v2032 = vld [vmem:[#allocation9 + $0x1258] sm:$0xff]
    %v2033 = vld [vmem:[#allocation9 + $0x1260] sm:$0xff]
    %v2034 = vld [vmem:[#allocation9 + $0x1268] sm:$0xff]
    %v2035 = vld [vmem:[#allocation9 + $0x1270] sm:$0xff]
    %v2036 = vld [vmem:[#allocation9 + $0x1278] sm:$0xff]
    %v2037 = vld [vmem:[#allocation9 + $0x1280] sm:$0xff]
    %v2038 = vld [vmem:[#allocation9 + $0x1288] sm:$0xff]
    %v2039 = vld [vmem:[#allocation9 + $0x1290] sm:$0xff]
    %v2040 = vld [vmem:[#allocation9 + $0x1298] sm:$0xff]
    %v2041 = vld [vmem:[#allocation9 + $0x12a0] sm:$0xff]
    %v2042 = vld [vmem:[#allocation9 + $0x12a8] sm:$0xff]
    %v2043 = vld [vmem:[#allocation9 + $0x12b0] sm:$0xff]
    %v2044 = vld [vmem:[#allocation9 + $0x12b8] sm:$0xff]
    %v2045 = vld [vmem:[#allocation9 + $0x12c0] sm:$0xff]
    %v2046 = vld [vmem:[#allocation9 + $0x12c8] sm:$0xff]
    %v2047 = vld [vmem:[#allocation9 + $0x12d0] sm:$0xff]
    %v2048 = vld [vmem:[#allocation9 + $0x12d8] sm:$0xff]
    %v2049 = vld [vmem:[#allocation9 + $0x12e0] sm:$0xff]
    %v2050 = vld [vmem:[#allocation9 + $0x12e8] sm:$0xff]
    %v2051 = vld [vmem:[#allocation9 + $0x12f0] sm:$0xff]
    %v2052 = vld [vmem:[#allocation9 + $0x12f8] sm:$0xff]
    %v2053 = vld [vmem:[#allocation9 + $0x1300] sm:$0xff]
    %v2054 = vld [vmem:[#allocation9 + $0x1308] sm:$0xff]
    %v2055 = vld [vmem:[#allocation9 + $0x1310] sm:$0xff]
    %v2056 = vld [vmem:[#allocation9 + $0x1318] sm:$0xff]
    %v2057 = vld [vmem:[#allocation9 + $0x1320] sm:$0xff]
    %v2058 = vld [vmem:[#allocation9 + $0x1328] sm:$0xff]
    %v2059 = vld [vmem:[#allocation9 + $0x1330] sm:$0xff]
    %v2060 = vld [vmem:[#allocation9 + $0x1338] sm:$0xff]
    %v2061 = vld [vmem:[#allocation9 + $0x1340] sm:$0xff]
    %v2062 = vld [vmem:[#allocation9 + $0x1348] sm:$0xff]
    %v2063 = vld [vmem:[#allocation9 + $0x1350] sm:$0xff]
    %v2064 = vld [vmem:[#allocation9 + $0x1358] sm:$0xff]
    %v2065 = vld [vmem:[#allocation9 + $0x1360] sm:$0xff]
    %v2066 = vld [vmem:[#allocation9 + $0x1368] sm:$0xff]
    %v2067 = vld [vmem:[#allocation9 + $0x1370] sm:$0xff]
    %v2068 = vld [vmem:[#allocation9 + $0x1378] sm:$0xff]
    %v2069 = vld [vmem:[#allocation9 + $0x1380] sm:$0xff]
    %v2070 = vld [vmem:[#allocation9 + $0x1388] sm:$0xff]
    %v2071 = vld [vmem:[#allocation9 + $0x1390] sm:$0xff]
    %v2072 = vld [vmem:[#allocation9 + $0x1398] sm:$0xff]
    %v2073 = vld [vmem:[#allocation9 + $0x13a0] sm:$0xff]
    %v2074 = vld [vmem:[#allocation9 + $0x13a8] sm:$0xff]
    %v2075 = vld [vmem:[#allocation9 + $0x13b0] sm:$0xff]
    %v2076 = vld [vmem:[#allocation9 + $0x13b8] sm:$0xff]
    %v2077 = vld [vmem:[#allocation9 + $0x13c0] sm:$0xff]
    %v2078 = vld [vmem:[#allocation9 + $0x13c8] sm:$0xff]
    %v2079 = vld [vmem:[#allocation9 + $0x13d0] sm:$0xff]
    %v2080 = vld [vmem:[#allocation9 + $0x13d8] sm:$0xff]
    %v2081 = vld [vmem:[#allocation9 + $0x13e0] sm:$0xff]
    %v2082 = vld [vmem:[#allocation9 + $0x13e8] sm:$0xff]
    %v2083 = vld [vmem:[#allocation9 + $0x13f0] sm:$0xff]
    %v2084 = vld [vmem:[#allocation9 + $0x13f8] sm:$0xff]
    %v2085 = vld [vmem:[#allocation9 + $0x1400] sm:$0xff]
    %v2086 = vld [vmem:[#allocation9 + $0x1408] sm:$0xff]
    %v2087 = vld [vmem:[#allocation9 + $0x1410] sm:$0xff]
    %v2088 = vld [vmem:[#allocation9 + $0x1418] sm:$0xff]
    %v2089 = vld [vmem:[#allocation9 + $0x1420] sm:$0xff]
    %v2090 = vld [vmem:[#allocation9 + $0x1428] sm:$0xff]
    %v2091 = vld [vmem:[#allocation9 + $0x1430] sm:$0xff]
    %v2092 = vld [vmem:[#allocation9 + $0x1438] sm:$0xff]
    %v2093 = vld [vmem:[#allocation9 + $0x1440] sm:$0xff]
    %v2094 = vld [vmem:[#allocation9 + $0x1448] sm:$0xff]
    %v2095 = vld [vmem:[#allocation9 + $0x1450] sm:$0xff]
    %v2096 = vld [vmem:[#allocation9 + $0x1458] sm:$0xff]
    %v2097 = vld [vmem:[#allocation9 + $0x1460] sm:$0xff]
    %v2098 = vld [vmem:[#allocation9 + $0x1468] sm:$0xff]
    %v2099 = vld [vmem:[#allocation9 + $0x1470] sm:$0xff]
    %v2100 = vld [vmem:[#allocation9 + $0x1478] sm:$0xff]
    %v2101 = vld [vmem:[#allocation9 + $0x1480] sm:$0xff]
    %v2102 = vld [vmem:[#allocation9 + $0x1488] sm:$0xff]
    %v2103 = vld [vmem:[#allocation9 + $0x1490] sm:$0xff]
    %v2104 = vld [vmem:[#allocation9 + $0x1498] sm:$0xff]
    %v2105 = vld [vmem:[#allocation9 + $0x14a0] sm:$0xff]
    %v2106 = vld [vmem:[#allocation9 + $0x14a8] sm:$0xff]
    %v2107 = vld [vmem:[#allocation9 + $0x14b0] sm:$0xff]
    %v2108 = vld [vmem:[#allocation9 + $0x14b8] sm:$0xff]
    %v2109 = vld [vmem:[#allocation9 + $0x14c0] sm:$0xff]
    %v2110 = vld [vmem:[#allocation9 + $0x14c8] sm:$0xff]
    %v2111 = vld [vmem:[#allocation9 + $0x14d0] sm:$0xff]
    %v2112 = vld [vmem:[#allocation9 + $0x14d8] sm:$0xff]
    %v2113 = vld [vmem:[#allocation9 + $0x14e0] sm:$0xff]
    %v2114 = vld [vmem:[#allocation9 + $0x14e8] sm:$0xff]
    %v2115 = vld [vmem:[#allocation9 + $0x14f0] sm:$0xff]
    %v2116 = vld [vmem:[#allocation9 + $0x14f8] sm:$0xff]
    %v2117 = vld [vmem:[#allocation9 + $0x1500] sm:$0xff]
    %v2118 = vld [vmem:[#allocation9 + $0x1508] sm:$0xff]
    %v2119 = vld [vmem:[#allocation9 + $0x1510] sm:$0xff]
    %v2120 = vld [vmem:[#allocation9 + $0x1518] sm:$0xff]
    %v2121 = vld [vmem:[#allocation9 + $0x1520] sm:$0xff]
    %v2122 = vld [vmem:[#allocation9 + $0x1528] sm:$0xff]
    %v2123 = vld [vmem:[#allocation9 + $0x1530] sm:$0xff]
    %v2124 = vld [vmem:[#allocation9 + $0x1538] sm:$0xff]
    %v2125 = vld [vmem:[#allocation9 + $0x1540] sm:$0xff]
    %v2126 = vld [vmem:[#allocation9 + $0x1548] sm:$0xff]
    %v2127 = vld [vmem:[#allocation9 + $0x1550] sm:$0xff]
    %v2128 = vld [vmem:[#allocation9 + $0x1558] sm:$0xff]
    %v2129 = vld [vmem:[#allocation9 + $0x1560] sm:$0xff]
    %v2130 = vld [vmem:[#allocation9 + $0x1568] sm:$0xff]
    %v2131 = vld [vmem:[#allocation9 + $0x1570] sm:$0xff]
    %v2132 = vld [vmem:[#allocation9 + $0x1578] sm:$0xff]
    %v2133 = vld [vmem:[#allocation9 + $0x1580] sm:$0xff]
    %v2134 = vld [vmem:[#allocation9 + $0x1588] sm:$0xff]
    %v2135 = vld [vmem:[#allocation9 + $0x1590] sm:$0xff]
    %v2136 = vld [vmem:[#allocation9 + $0x1598] sm:$0xff]
    %v2137 = vld [vmem:[#allocation9 + $0x15a0] sm:$0xff]
    %v2138 = vld [vmem:[#allocation9 + $0x15a8] sm:$0xff]
    %v2139 = vld [vmem:[#allocation9 + $0x15b0] sm:$0xff]
    %v2140 = vld [vmem:[#allocation9 + $0x15b8] sm:$0xff]
    %v2141 = vld [vmem:[#allocation9 + $0x15c0] sm:$0xff]
    %v2142 = vld [vmem:[#allocation9 + $0x15c8] sm:$0xff]
    %v2143 = vld [vmem:[#allocation9 + $0x15d0] sm:$0xff]
    %v2144 = vld [vmem:[#allocation9 + $0x15d8] sm:$0xff]
    %v2145 = vld [vmem:[#allocation9 + $0x15e0] sm:$0xff]
    %v2146 = vld [vmem:[#allocation9 + $0x15e8] sm:$0xff]
    %v2147 = vld [vmem:[#allocation9 + $0x15f0] sm:$0xff]
    %v2148 = vld [vmem:[#allocation9 + $0x15f8] sm:$0xff]
    %v2149 = vld [vmem:[#allocation9 + $0x1600] sm:$0xff]
    %v2150 = vld [vmem:[#allocation9 + $0x1608] sm:$0xff]
    %v2151 = vld [vmem:[#allocation9 + $0x1610] sm:$0xff]
    %v2152 = vld [vmem:[#allocation9 + $0x1618] sm:$0xff]
    %v2153 = vld [vmem:[#allocation9 + $0x1620] sm:$0xff]
    %v2154 = vld [vmem:[#allocation9 + $0x1628] sm:$0xff]
    %v2155 = vld [vmem:[#allocation9 + $0x1630] sm:$0xff]
    %v2156 = vld [vmem:[#allocation9 + $0x1638] sm:$0xff]
    %v2157 = vld [vmem:[#allocation9 + $0x1640] sm:$0xff]
    %v2158 = vld [vmem:[#allocation9 + $0x1648] sm:$0xff]
    %v2159 = vld [vmem:[#allocation9 + $0x1650] sm:$0xff]
    %v2160 = vld [vmem:[#allocation9 + $0x1658] sm:$0xff]
    %v2161 = vld [vmem:[#allocation9 + $0x1660] sm:$0xff]
    %v2162 = vld [vmem:[#allocation9 + $0x1668] sm:$0xff]
    %v2163 = vld [vmem:[#allocation9 + $0x1670] sm:$0xff]
    %v2164 = vld [vmem:[#allocation9 + $0x1678] sm:$0xff]
    %v2165 = vld [vmem:[#allocation9 + $0x1680] sm:$0xff]
    %v2166 = vld [vmem:[#allocation9 + $0x1688] sm:$0xff]
    %v2167 = vld [vmem:[#allocation9 + $0x1690] sm:$0xff]
    %v2168 = vld [vmem:[#allocation9 + $0x1698] sm:$0xff]
    %v2169 = vld [vmem:[#allocation9 + $0x16a0] sm:$0xff]
    %v2170 = vld [vmem:[#allocation9 + $0x16a8] sm:$0xff]
    %v2171 = vld [vmem:[#allocation9 + $0x16b0] sm:$0xff]
    %v2172 = vld [vmem:[#allocation9 + $0x16b8] sm:$0xff]
    %v2173 = vld [vmem:[#allocation9 + $0x16c0] sm:$0xff]
    %v2174 = vld [vmem:[#allocation9 + $0x16c8] sm:$0xff]
    %v2175 = vld [vmem:[#allocation9 + $0x16d0] sm:$0xff]
    %v2176 = vld [vmem:[#allocation9 + $0x16d8] sm:$0xff]
    %v2177 = vld [vmem:[#allocation9 + $0x16e0] sm:$0xff]
    %v2178 = vld [vmem:[#allocation9 + $0x16e8] sm:$0xff]
    %v2179 = vld [vmem:[#allocation9 + $0x16f0] sm:$0xff]
    %v2180 = vld [vmem:[#allocation9 + $0x16f8] sm:$0xff]
    %v2181 = vld [vmem:[#allocation9 + $0x1700] sm:$0xff]
    %v2182 = vld [vmem:[#allocation9 + $0x1708] sm:$0xff]
    %v2183 = vld [vmem:[#allocation9 + $0x1710] sm:$0xff]
    %v2184 = vld [vmem:[#allocation9 + $0x1718] sm:$0xff]
    %v2185 = vld [vmem:[#allocation9 + $0x1720] sm:$0xff]
    %v2186 = vld [vmem:[#allocation9 + $0x1728] sm:$0xff]
    %v2187 = vld [vmem:[#allocation9 + $0x1730] sm:$0xff]
    %v2188 = vld [vmem:[#allocation9 + $0x1738] sm:$0xff]
    %v2189 = vld [vmem:[#allocation9 + $0x1740] sm:$0xff]
    %v2190 = vld [vmem:[#allocation9 + $0x1748] sm:$0xff]
    %v2191 = vld [vmem:[#allocation9 + $0x1750] sm:$0xff]
    %v2192 = vld [vmem:[#allocation9 + $0x1758] sm:$0xff]
    %v2193 = vld [vmem:[#allocation9 + $0x1760] sm:$0xff]
    %v2194 = vld [vmem:[#allocation9 + $0x1768] sm:$0xff]
    %v2195 = vld [vmem:[#allocation9 + $0x1770] sm:$0xff]
    %v2196 = vld [vmem:[#allocation9 + $0x1778] sm:$0xff]
    %v2197 = vld [vmem:[#allocation9 + $0x1780] sm:$0xff]
    %v2198 = vld [vmem:[#allocation9 + $0x1788] sm:$0xff]
    %v2199 = vld [vmem:[#allocation9 + $0x1790] sm:$0xff]
    %v2200 = vld [vmem:[#allocation9 + $0x1798] sm:$0xff]
    %v2201 = vld [vmem:[#allocation9 + $0x17a0] sm:$0xff]
    %v2202 = vld [vmem:[#allocation9 + $0x17a8] sm:$0xff]
    %v2203 = vld [vmem:[#allocation9 + $0x17b0] sm:$0xff]
    %v2204 = vld [vmem:[#allocation9 + $0x17b8] sm:$0xff]
    %v2205 = vld [vmem:[#allocation9 + $0x17c0] sm:$0xff]
    %v2206 = vld [vmem:[#allocation9 + $0x17c8] sm:$0xff]
    %v2207 = vld [vmem:[#allocation9 + $0x17d0] sm:$0xff]
    %v2208 = vld [vmem:[#allocation9 + $0x17d8] sm:$0xff]
    %v2209 = vld [vmem:[#allocation9 + $0x17e0] sm:$0xff]
    %v2210 = vld [vmem:[#allocation9 + $0x17e8] sm:$0xff]
    %v2211 = vld [vmem:[#allocation9 + $0x17f0] sm:$0xff]
    %v2212 = vld [vmem:[#allocation9 + $0x17f8] sm:$0xff]
    %v2213 = vld [vmem:[#allocation10] sm:$0x3f]
    %v2215 = vlaneseq
    %v2216 = vshrl.u32 %v2215, 7
    %v2217 = vsub.s32 0, %v2216
    %v2218 = vrot.slane %v2213, %v2217
    %v2219 = vlaneseq
    %v2220 = vshrl.u32 %v2219, 7
    %v2221 = vsub.s32 1, %v2220
    %v2222 = vrot.slane %v2213, %v2221
    %v2223 = vlaneseq
    %v2224 = vshrl.u32 %v2223, 7
    %v2225 = vsub.s32 2, %v2224
    %v2226 = vrot.slane %v2213, %v2225
    %v2227 = vlaneseq
    %v2228 = vshrl.u32 %v2227, 7
    %v2229 = vsub.s32 3, %v2228
    %v2230 = vrot.slane %v2213, %v2229
    %v2231 = vlaneseq
    %v2232 = vshrl.u32 %v2231, 7
    %v2233 = vsub.s32 4, %v2232
    %v2234 = vrot.slane %v2213, %v2233
    %v2235 = vlaneseq
    %v2236 = vshrl.u32 %v2235, 7
    %v2237 = vsub.s32 5, %v2236
    %v2238 = vrot.slane %v2213, %v2237
    %2245 = vmatprep.subr.mxu0 %v1536
    %2246 = vmatpush1.msra.mxu0 %v1535
    %2247 = vmatprep.subr.mxu0 %v1530
    %2248 = vmatpush1.msra.mxu0 %v1529
    %2249 = vmatprep.subr.mxu0 %v1524
    %2250 = vmatpush1.msra.mxu0 %v1523
    %2251 = vmatprep.subr.mxu0 %v1518
    %2252 = vmatpush1.msra.mxu0 %v1517
    %2253 = vmatprep.subr.mxu0 %v1512
    %2254 = vmatpush1.msra.mxu0 %v1511
    %2255 = vmatprep.subr.mxu0 %v1506
    %2256 = vmatpush1.msra.mxu0 %v1505
    %2257 = vmatprep.subr.mxu0 %v1500
    %2258 = vmatpush1.msra.mxu0 %v1499
    %2259 = vmatprep.subr.mxu0 %v1494
    %2260 = vmatpush1.msra.mxu0 %v1493
    %2261 = vmatprep.subr.mxu0 %v1488
    %2262 = vmatpush1.msra.mxu0 %v1487
    %2263 = vmatprep.subr.mxu0 %v1482
    %2264 = vmatpush1.msra.mxu0 %v1481
    %2265 = vmatprep.subr.mxu0 %v1476
    %2266 = vmatpush1.msra.mxu0 %v1475
    %2267 = vmatprep.subr.mxu0 %v1470
    %2268 = vmatpush1.msra.mxu0 %v1469
    %2269 = vmatprep.subr.mxu0 %v1464
    %2270 = vmatpush1.msra.mxu0 %v1463
    %2271 = vmatprep.subr.mxu0 %v1458
    %2272 = vmatpush1.msra.mxu0 %v1457
    %2273 = vmatprep.subr.mxu0 %v1452
    %2274 = vmatpush1.msra.mxu0 %v1451
    %2275 = vmatprep.subr.mxu0 %v1446
    %2276 = vmatpush1.msra.mxu0 %v1445
    %2277 = vmatprep.subr.mxu0 %v1632
    %2278 = vmatpush2.msra.mxu0 %v1631
    %2279 = vmatprep.subr.mxu0 %v1626
    %2280 = vmatpush2.msra.mxu0 %v1625
    %2281 = vmatprep.subr.mxu0 %v1620
    %2282 = vmatpush2.msra.mxu0 %v1619
    %2283 = vmatprep.subr.mxu0 %v1614
    %2284 = vmatpush2.msra.mxu0 %v1613
    %2285 = vmatprep.subr.mxu0 %v1608
    %2286 = vmatpush2.msra.mxu0 %v1607
    %2287 = vmatprep.subr.mxu0 %v1602
    %2288 = vmatpush2.msra.mxu0 %v1601
    %2289 = vmatprep.subr.mxu0 %v1596
    %2290 = vmatpush2.msra.mxu0 %v1595
    %2291 = vmatprep.subr.mxu0 %v1590
    %2292 = vmatpush2.msra.mxu0 %v1589
    %2293 = vmatprep.subr.mxu0 %v1584
    %2294 = vmatpush2.msra.mxu0 %v1583
    %2295 = vmatprep.subr.mxu0 %v1578
    %2296 = vmatpush2.msra.mxu0 %v1577
    %2297 = vmatprep.subr.mxu0 %v1572
    %2298 = vmatpush2.msra.mxu0 %v1571
    %2299 = vmatprep.subr.mxu0 %v1566
    %2300 = vmatpush2.msra.mxu0 %v1565
    %2301 = vmatprep.subr.mxu0 %v1560
    %2302 = vmatpush2.msra.mxu0 %v1559
    %2303 = vmatprep.subr.mxu0 %v1554
    %2304 = vmatpush2.msra.mxu0 %v1553
    %2305 = vmatprep.subr.mxu0 %v1548
    %2306 = vmatpush2.msra.mxu0 %v1547
    %2307 = vmatprep.subr.mxu0 %v1542
    %2308 = vmatpush2.msra.mxu0 %v1541
    %2309 = vmatprep.mubr.f32.mxu0 %v1438
    %2310 = vmatmul.mubr.f32.gmra.mxu0 %v1437
    %v2311 = vpop.f32.mrf.mxu0
    %v2312 = vadd.f32 %v2218, %v2311
    %v2313 = vpop.f32.mrf.mxu0
    %v2314 = vadd.f32 %v2222, %v2313
    %2315 = vdwg.mxu0
    %2316 = vmatprep.subr.mxu0 %v1728
    %2317 = vmatpush1.msra.mxu0 %v1727
    %2318 = vmatprep.subr.mxu0 %v1722
    %2319 = vmatpush1.msra.mxu0 %v1721
    %2320 = vmatprep.subr.mxu0 %v1716
    %2321 = vmatpush1.msra.mxu0 %v1715
    %2322 = vmatprep.subr.mxu0 %v1710
    %2323 = vmatpush1.msra.mxu0 %v1709
    %2324 = vmatprep.subr.mxu0 %v1704
    %2325 = vmatpush1.msra.mxu0 %v1703
    %2326 = vmatprep.subr.mxu0 %v1698
    %2327 = vmatpush1.msra.mxu0 %v1697
    %2328 = vmatprep.subr.mxu0 %v1692
    %2329 = vmatpush1.msra.mxu0 %v1691
    %2330 = vmatprep.subr.mxu0 %v1686
    %2331 = vmatpush1.msra.mxu0 %v1685
    %2332 = vmatprep.subr.mxu0 %v1680
    %2333 = vmatpush1.msra.mxu0 %v1679
    %2334 = vmatprep.subr.mxu0 %v1674
    %2335 = vmatpush1.msra.mxu0 %v1673
    %2336 = vmatprep.subr.mxu0 %v1668
    %2337 = vmatpush1.msra.mxu0 %v1667
    %2338 = vmatprep.subr.mxu0 %v1662
    %2339 = vmatpush1.msra.mxu0 %v1661
    %2340 = vmatprep.subr.mxu0 %v1656
    %2341 = vmatpush1.msra.mxu0 %v1655
    %2342 = vmatprep.subr.mxu0 %v1650
    %2343 = vmatpush1.msra.mxu0 %v1649
    %2344 = vmatprep.subr.mxu0 %v1644
    %2345 = vmatpush1.msra.mxu0 %v1643
    %2346 = vmatprep.subr.mxu0 %v1638
    %2347 = vmatpush1.msra.mxu0 %v1637
    %2348 = vmatprep.subr.mxu0 %v1824
    %2349 = vmatpush2.msra.mxu0 %v1823
    %2350 = vmatprep.subr.mxu0 %v1818
    %2351 = vmatpush2.msra.mxu0 %v1817
    %2352 = vmatprep.subr.mxu0 %v1812
    %2353 = vmatpush2.msra.mxu0 %v1811
    %2354 = vmatprep.subr.mxu0 %v1806
    %2355 = vmatpush2.msra.mxu0 %v1805
    %2356 = vmatprep.subr.mxu0 %v1800
    %2357 = vmatpush2.msra.mxu0 %v1799
    %2358 = vmatprep.subr.mxu0 %v1794
    %2359 = vmatpush2.msra.mxu0 %v1793
    %2360 = vmatprep.subr.mxu0 %v1788
    %2361 = vmatpush2.msra.mxu0 %v1787
    %2362 = vmatprep.subr.mxu0 %v1782
    %2363 = vmatpush2.msra.mxu0 %v1781
    %2364 = vmatprep.subr.mxu0 %v1776
    %2365 = vmatpush2.msra.mxu0 %v1775
    %2366 = vmatprep.subr.mxu0 %v1770
    %2367 = vmatpush2.msra.mxu0 %v1769
    %2368 = vmatprep.subr.mxu0 %v1764
    %2369 = vmatpush2.msra.mxu0 %v1763
    %2370 = vmatprep.subr.mxu0 %v1758
    %2371 = vmatpush2.msra.mxu0 %v1757
    %2372 = vmatprep.subr.mxu0 %v1752
    %2373 = vmatpush2.msra.mxu0 %v1751
    %2374 = vmatprep.subr.mxu0 %v1746
    %2375 = vmatpush2.msra.mxu0 %v1745
    %2376 = vmatprep.subr.mxu0 %v1740
    %2377 = vmatpush2.msra.mxu0 %v1739
    %2378 = vmatprep.subr.mxu0 %v1734
    %2379 = vmatpush2.msra.mxu0 %v1733
    %2380 = vmatprep.mubr.f32.mxu0 %v1440
    %2381 = vmatmul.mubr.f32.gmra.mxu0 %v1439
    %v2382 = vpop.f32.mrf.mxu0
    %v2383 = vadd.f32 %v2312, %v2382
    %v2384 = vpop.f32.mrf.mxu0
    %v2385 = vadd.f32 %v2314, %v2384
    %2386 = vdwg.mxu0
    %2387 = vmatprep.subr.mxu0 %v1920
    %2388 = vmatpush1.msra.mxu0 %v1919
    %2389 = vmatprep.subr.mxu0 %v1914
    %2390 = vmatpush1.msra.mxu0 %v1913
    %2391 = vmatprep.subr.mxu0 %v1908
    %2392 = vmatpush1.msra.mxu0 %v1907
    %2393 = vmatprep.subr.mxu0 %v1902
    %2394 = vmatpush1.msra.mxu0 %v1901
    %2395 = vmatprep.subr.mxu0 %v1896
    %2396 = vmatpush1.msra.mxu0 %v1895
    %2397 = vmatprep.subr.mxu0 %v1890
    %2398 = vmatpush1.msra.mxu0 %v1889
    %2399 = vmatprep.subr.mxu0 %v1884
    %2400 = vmatpush1.msra.mxu0 %v1883
    %2401 = vmatprep.subr.mxu0 %v1878
    %2402 = vmatpush1.msra.mxu0 %v1877
    %2403 = vmatprep.subr.mxu0 %v1872
    %2404 = vmatpush1.msra.mxu0 %v1871
    %2405 = vmatprep.subr.mxu0 %v1866
    %2406 = vmatpush1.msra.mxu0 %v1865
    %2407 = vmatprep.subr.mxu0 %v1860
    %2408 = vmatpush1.msra.mxu0 %v1859
    %2409 = vmatprep.subr.mxu0 %v1854
    %2410 = vmatpush1.msra.mxu0 %v1853
    %2411 = vmatprep.subr.mxu0 %v1848
    %2412 = vmatpush1.msra.mxu0 %v1847
    %2413 = vmatprep.subr.mxu0 %v1842
    %2414 = vmatpush1.msra.mxu0 %v1841
    %2415 = vmatprep.subr.mxu0 %v1836
    %2416 = vmatpush1.msra.mxu0 %v1835
    %2417 = vmatprep.subr.mxu0 %v1830
    %2418 = vmatpush1.msra.mxu0 %v1829
    %2419 = vmatprep.subr.mxu0 %v2016
    %2420 = vmatpush2.msra.mxu0 %v2015
    %2421 = vmatprep.subr.mxu0 %v2010
    %2422 = vmatpush2.msra.mxu0 %v2009
    %2423 = vmatprep.subr.mxu0 %v2004
    %2424 = vmatpush2.msra.mxu0 %v2003
    %2425 = vmatprep.subr.mxu0 %v1998
    %2426 = vmatpush2.msra.mxu0 %v1997
    %2427 = vmatprep.subr.mxu0 %v1992
    %2428 = vmatpush2.msra.mxu0 %v1991
    %2429 = vmatprep.subr.mxu0 %v1986
    %2430 = vmatpush2.msra.mxu0 %v1985
    %2431 = vmatprep.subr.mxu0 %v1980
    %2432 = vmatpush2.msra.mxu0 %v1979
    %2433 = vmatprep.subr.mxu0 %v1974
    %2434 = vmatpush2.msra.mxu0 %v1973
    %2435 = vmatprep.subr.mxu0 %v1968
    %2436 = vmatpush2.msra.mxu0 %v1967
    %2437 = vmatprep.subr.mxu0 %v1962
    %2438 = vmatpush2.msra.mxu0 %v1961
    %2439 = vmatprep.subr.mxu0 %v1956
    %2440 = vmatpush2.msra.mxu0 %v1955
    %2441 = vmatprep.subr.mxu0 %v1950
    %2442 = vmatpush2.msra.mxu0 %v1949
    %2443 = vmatprep.subr.mxu0 %v1944
    %2444 = vmatpush2.msra.mxu0 %v1943
    %2445 = vmatprep.subr.mxu0 %v1938
    %2446 = vmatpush2.msra.mxu0 %v1937
    %2447 = vmatprep.subr.mxu0 %v1932
    %2448 = vmatpush2.msra.mxu0 %v1931
    %2449 = vmatprep.subr.mxu0 %v1926
    %2450 = vmatpush2.msra.mxu0 %v1925
    %2451 = vmatprep.mubr.f32.mxu0 %v1442
    %2452 = vmatmul.mubr.f32.gmra.mxu0 %v1441
    %v2453 = vpop.f32.mrf.mxu0
    %v2454 = vadd.f32 %v2383, %v2453
    %v2455 = vpop.f32.mrf.mxu0
    %v2456 = vadd.f32 %v2385, %v2455
    %2457 = vdwg.mxu0
    %2458 = vmatprep.subr.mxu0 %v2112
    %2459 = vmatpush1.msra.mxu0 %v2111
    %2460 = vmatprep.subr.mxu0 %v2106
    %2461 = vmatpush1.msra.mxu0 %v2105
    %2462 = vmatprep.subr.mxu0 %v2100
    %2463 = vmatpush1.msra.mxu0 %v2099
    %2464 = vmatprep.subr.mxu0 %v2094
    %2465 = vmatpush1.msra.mxu0 %v2093
    %2466 = vmatprep.subr.mxu0 %v2088
    %2467 = vmatpush1.msra.mxu0 %v2087
    %2468 = vmatprep.subr.mxu0 %v2082
    %2469 = vmatpush1.msra.mxu0 %v2081
    %2470 = vmatprep.subr.mxu0 %v2076
    %2471 = vmatpush1.msra.mxu0 %v2075
    %2472 = vmatprep.subr.mxu0 %v2070
    %2473 = vmatpush1.msra.mxu0 %v2069
    %2474 = vmatprep.subr.mxu0 %v2064
    %2475 = vmatpush1.msra.mxu0 %v2063
    %2476 = vmatprep.subr.mxu0 %v2058
    %2477 = vmatpush1.msra.mxu0 %v2057
    %2478 = vmatprep.subr.mxu0 %v2052
    %2479 = vmatpush1.msra.mxu0 %v2051
    %2480 = vmatprep.subr.mxu0 %v2046
    %2481 = vmatpush1.msra.mxu0 %v2045
    %2482 = vmatprep.subr.mxu0 %v2040
    %2483 = vmatpush1.msra.mxu0 %v2039
    %2484 = vmatprep.subr.mxu0 %v2034
    %2485 = vmatpush1.msra.mxu0 %v2033
    %2486 = vmatprep.subr.mxu0 %v2028
    %2487 = vmatpush1.msra.mxu0 %v2027
    %2488 = vmatprep.subr.mxu0 %v2022
    %2489 = vmatpush1.msra.mxu0 %v2021
    %2490 = vmatprep.subr.mxu0 %v2208
    %2491 = vmatpush2.msra.mxu0 %v2207
    %2492 = vmatprep.subr.mxu0 %v2202
    %2493 = vmatpush2.msra.mxu0 %v2201
    %2494 = vmatprep.subr.mxu0 %v2196
    %2495 = vmatpush2.msra.mxu0 %v2195
    %2496 = vmatprep.subr.mxu0 %v2190
    %2497 = vmatpush2.msra.mxu0 %v2189
    %2498 = vmatprep.subr.mxu0 %v2184
    %2499 = vmatpush2.msra.mxu0 %v2183
    %2500 = vmatprep.subr.mxu0 %v2178
    %2501 = vmatpush2.msra.mxu0 %v2177
    %2502 = vmatprep.subr.mxu0 %v2172
    %2503 = vmatpush2.msra.mxu0 %v2171
    %2504 = vmatprep.subr.mxu0 %v2166
    %2505 = vmatpush2.msra.mxu0 %v2165
    %2506 = vmatprep.subr.mxu0 %v2160
    %2507 = vmatpush2.msra.mxu0 %v2159
    %2508 = vmatprep.subr.mxu0 %v2154
    %2509 = vmatpush2.msra.mxu0 %v2153
    %2510 = vmatprep.subr.mxu0 %v2148
    %2511 = vmatpush2.msra.mxu0 %v2147
    %2512 = vmatprep.subr.mxu0 %v2142
    %2513 = vmatpush2.msra.mxu0 %v2141
    %2514 = vmatprep.subr.mxu0 %v2136
    %2515 = vmatpush2.msra.mxu0 %v2135
    %2516 = vmatprep.subr.mxu0 %v2130
    %2517 = vmatpush2.msra.mxu0 %v2129
    %2518 = vmatprep.subr.mxu0 %v2124
    %2519 = vmatpush2.msra.mxu0 %v2123
    %2520 = vmatprep.subr.mxu0 %v2118
    %2521 = vmatpush2.msra.mxu0 %v2117
    %2522 = vmatprep.mubr.f32.mxu0 %v1444
    %2523 = vmatmul.mubr.f32.gmra.mxu0 %v1443
    %v2524 = vpop.f32.mrf.mxu0
    %v2525 = vadd.f32 %v2454, %v2524
    %v2526 = vpop.f32.mrf.mxu0
    %v2527 = vadd.f32 %v2456, %v2526
    %2528 = vdwg.mxu0
    %2529 = vmatprep.subr.mxu0 %v1538
    %2530 = vmatpush1.msra.mxu0 %v1537
    %2531 = vmatprep.subr.mxu0 %v1532
    %2532 = vmatpush1.msra.mxu0 %v1531
    %2533 = vmatprep.subr.mxu0 %v1526
    %2534 = vmatpush1.msra.mxu0 %v1525
    %2535 = vmatprep.subr.mxu0 %v1520
    %2536 = vmatpush1.msra.mxu0 %v1519
    %2537 = vmatprep.subr.mxu0 %v1514
    %2538 = vmatpush1.msra.mxu0 %v1513
    %2539 = vmatprep.subr.mxu0 %v1508
    %2540 = vmatpush1.msra.mxu0 %v1507
    %2541 = vmatprep.subr.mxu0 %v1502
    %2542 = vmatpush1.msra.mxu0 %v1501
    %2543 = vmatprep.subr.mxu0 %v1496
    %2544 = vmatpush1.msra.mxu0 %v1495
    %2545 = vmatprep.subr.mxu0 %v1490
    %2546 = vmatpush1.msra.mxu0 %v1489
    %2547 = vmatprep.subr.mxu0 %v1484
    %2548 = vmatpush1.msra.mxu0 %v1483
    %2549 = vmatprep.subr.mxu0 %v1478
    %2550 = vmatpush1.msra.mxu0 %v1477
    %2551 = vmatprep.subr.mxu0 %v1472
    %2552 = vmatpush1.msra.mxu0 %v1471
    %2553 = vmatprep.subr.mxu0 %v1466
    %2554 = vmatpush1.msra.mxu0 %v1465
    %2555 = vmatprep.subr.mxu0 %v1460
    %2556 = vmatpush1.msra.mxu0 %v1459
    %2557 = vmatprep.subr.mxu0 %v1454
    %2558 = vmatpush1.msra.mxu0 %v1453
    %2559 = vmatprep.subr.mxu0 %v1448
    %2560 = vmatpush1.msra.mxu0 %v1447
    %2561 = vmatprep.subr.mxu0 %v1634
    %2562 = vmatpush2.msra.mxu0 %v1633
    %2563 = vmatprep.subr.mxu0 %v1628
    %2564 = vmatpush2.msra.mxu0 %v1627
    %2565 = vmatprep.subr.mxu0 %v1622
    %2566 = vmatpush2.msra.mxu0 %v1621
    %2567 = vmatprep.subr.mxu0 %v1616
    %2568 = vmatpush2.msra.mxu0 %v1615
    %2569 = vmatprep.subr.mxu0 %v1610
    %2570 = vmatpush2.msra.mxu0 %v1609
    %2571 = vmatprep.subr.mxu0 %v1604
    %2572 = vmatpush2.msra.mxu0 %v1603
    %2573 = vmatprep.subr.mxu0 %v1598
    %2574 = vmatpush2.msra.mxu0 %v1597
    %2575 = vmatprep.subr.mxu0 %v1592
    %2576 = vmatpush2.msra.mxu0 %v1591
    %2577 = vmatprep.subr.mxu0 %v1586
    %2578 = vmatpush2.msra.mxu0 %v1585
    %2579 = vmatprep.subr.mxu0 %v1580
    %2580 = vmatpush2.msra.mxu0 %v1579
    %2581 = vmatprep.subr.mxu0 %v1574
    %2582 = vmatpush2.msra.mxu0 %v1573
    %2583 = vmatprep.subr.mxu0 %v1568
    %2584 = vmatpush2.msra.mxu0 %v1567
    %2585 = vmatprep.subr.mxu0 %v1562
    %2586 = vmatpush2.msra.mxu0 %v1561
    %2587 = vmatprep.subr.mxu0 %v1556
    %2588 = vmatpush2.msra.mxu0 %v1555
    %2589 = vmatprep.subr.mxu0 %v1550
    %2590 = vmatpush2.msra.mxu0 %v1549
    %2591 = vmatprep.subr.mxu0 %v1544
    %2592 = vmatpush2.msra.mxu0 %v1543
    %2593 = vmatprep.mubr.f32.mxu0 %v1438
    %2594 = vmatmul.mubr.f32.gmra.mxu0 %v1437
    %v2595 = vpop.f32.mrf.mxu0
    %v2596 = vadd.f32 %v2226, %v2595
    %v2597 = vpop.f32.mrf.mxu0
    %v2598 = vadd.f32 %v2230, %v2597
    %2599 = vdwg.mxu0
    %2600 = vmatprep.subr.mxu0 %v1730
    %2601 = vmatpush1.msra.mxu0 %v1729
    %2602 = vmatprep.subr.mxu0 %v1724
    %2603 = vmatpush1.msra.mxu0 %v1723
    %2604 = vmatprep.subr.mxu0 %v1718
    %2605 = vmatpush1.msra.mxu0 %v1717
    %2606 = vmatprep.subr.mxu0 %v1712
    %2607 = vmatpush1.msra.mxu0 %v1711
    %2608 = vmatprep.subr.mxu0 %v1706
    %2609 = vmatpush1.msra.mxu0 %v1705
    %2610 = vmatprep.subr.mxu0 %v1700
    %2611 = vmatpush1.msra.mxu0 %v1699
    %2612 = vmatprep.subr.mxu0 %v1694
    %2613 = vmatpush1.msra.mxu0 %v1693
    %2614 = vmatprep.subr.mxu0 %v1688
    %2615 = vmatpush1.msra.mxu0 %v1687
    %2616 = vmatprep.subr.mxu0 %v1682
    %2617 = vmatpush1.msra.mxu0 %v1681
    %2618 = vmatprep.subr.mxu0 %v1676
    %2619 = vmatpush1.msra.mxu0 %v1675
    %2620 = vmatprep.subr.mxu0 %v1670
    %2621 = vmatpush1.msra.mxu0 %v1669
    %2622 = vmatprep.subr.mxu0 %v1664
    %2623 = vmatpush1.msra.mxu0 %v1663
    %2624 = vmatprep.subr.mxu0 %v1658
    %2625 = vmatpush1.msra.mxu0 %v1657
    %2626 = vmatprep.subr.mxu0 %v1652
    %2627 = vmatpush1.msra.mxu0 %v1651
    %2628 = vmatprep.subr.mxu0 %v1646
    %2629 = vmatpush1.msra.mxu0 %v1645
    %2630 = vmatprep.subr.mxu0 %v1640
    %2631 = vmatpush1.msra.mxu0 %v1639
    %2632 = vmatprep.subr.mxu0 %v1826
    %2633 = vmatpush2.msra.mxu0 %v1825
    %2634 = vmatprep.subr.mxu0 %v1820
    %2635 = vmatpush2.msra.mxu0 %v1819
    %2636 = vmatprep.subr.mxu0 %v1814
    %2637 = vmatpush2.msra.mxu0 %v1813
    %2638 = vmatprep.subr.mxu0 %v1808
    %2639 = vmatpush2.msra.mxu0 %v1807
    %2640 = vmatprep.subr.mxu0 %v1802
    %2641 = vmatpush2.msra.mxu0 %v1801
    %2642 = vmatprep.subr.mxu0 %v1796
    %2643 = vmatpush2.msra.mxu0 %v1795
    %2644 = vmatprep.subr.mxu0 %v1790
    %2645 = vmatpush2.msra.mxu0 %v1789
    %2646 = vmatprep.subr.mxu0 %v1784
    %2647 = vmatpush2.msra.mxu0 %v1783
    %2648 = vmatprep.subr.mxu0 %v1778
    %2649 = vmatpush2.msra.mxu0 %v1777
    %2650 = vmatprep.subr.mxu0 %v1772
    %2651 = vmatpush2.msra.mxu0 %v1771
    %2652 = vmatprep.subr.mxu0 %v1766
    %2653 = vmatpush2.msra.mxu0 %v1765
    %2654 = vmatprep.subr.mxu0 %v1760
    %2655 = vmatpush2.msra.mxu0 %v1759
    %2656 = vmatprep.subr.mxu0 %v1754
    %2657 = vmatpush2.msra.mxu0 %v1753
    %2658 = vmatprep.subr.mxu0 %v1748
    %2659 = vmatpush2.msra.mxu0 %v1747
    %2660 = vmatprep.subr.mxu0 %v1742
    %2661 = vmatpush2.msra.mxu0 %v1741
    %2662 = vmatprep.subr.mxu0 %v1736
    %2663 = vmatpush2.msra.mxu0 %v1735
    %2664 = vmatprep.mubr.f32.mxu0 %v1440
    %2665 = vmatmul.mubr.f32.gmra.mxu0 %v1439
    %v2666 = vpop.f32.mrf.mxu0
    %v2667 = vadd.f32 %v2596, %v2666
    %v2668 = vpop.f32.mrf.mxu0
    %v2669 = vadd.f32 %v2598, %v2668
    %2670 = vdwg.mxu0
    %2671 = vmatprep.subr.mxu0 %v1922
    %2672 = vmatpush1.msra.mxu0 %v1921
    %2673 = vmatprep.subr.mxu0 %v1916
    %2674 = vmatpush1.msra.mxu0 %v1915
    %2675 = vmatprep.subr.mxu0 %v1910
    %2676 = vmatpush1.msra.mxu0 %v1909
    %2677 = vmatprep.subr.mxu0 %v1904
    %2678 = vmatpush1.msra.mxu0 %v1903
    %2679 = vmatprep.subr.mxu0 %v1898
    %2680 = vmatpush1.msra.mxu0 %v1897
    %2681 = vmatprep.subr.mxu0 %v1892
    %2682 = vmatpush1.msra.mxu0 %v1891
    %2683 = vmatprep.subr.mxu0 %v1886
    %2684 = vmatpush1.msra.mxu0 %v1885
    %2685 = vmatprep.subr.mxu0 %v1880
    %2686 = vmatpush1.msra.mxu0 %v1879
    %2687 = vmatprep.subr.mxu0 %v1874
    %2688 = vmatpush1.msra.mxu0 %v1873
    %2689 = vmatprep.subr.mxu0 %v1868
    %2690 = vmatpush1.msra.mxu0 %v1867
    %2691 = vmatprep.subr.mxu0 %v1862
    %2692 = vmatpush1.msra.mxu0 %v1861
    %2693 = vmatprep.subr.mxu0 %v1856
    %2694 = vmatpush1.msra.mxu0 %v1855
    %2695 = vmatprep.subr.mxu0 %v1850
    %2696 = vmatpush1.msra.mxu0 %v1849
    %2697 = vmatprep.subr.mxu0 %v1844
    %2698 = vmatpush1.msra.mxu0 %v1843
    %2699 = vmatprep.subr.mxu0 %v1838
    %2700 = vmatpush1.msra.mxu0 %v1837
    %2701 = vmatprep.subr.mxu0 %v1832
    %2702 = vmatpush1.msra.mxu0 %v1831
    %2703 = vmatprep.subr.mxu0 %v2018
    %2704 = vmatpush2.msra.mxu0 %v2017
    %2705 = vmatprep.subr.mxu0 %v2012
    %2706 = vmatpush2.msra.mxu0 %v2011
    %2707 = vmatprep.subr.mxu0 %v2006
    %2708 = vmatpush2.msra.mxu0 %v2005
    %2709 = vmatprep.subr.mxu0 %v2000
    %2710 = vmatpush2.msra.mxu0 %v1999
    %2711 = vmatprep.subr.mxu0 %v1994
    %2712 = vmatpush2.msra.mxu0 %v1993
    %2713 = vmatprep.subr.mxu0 %v1988
    %2714 = vmatpush2.msra.mxu0 %v1987
    %2715 = vmatprep.subr.mxu0 %v1982
    %2716 = vmatpush2.msra.mxu0 %v1981
    %2717 = vmatprep.subr.mxu0 %v1976
    %2718 = vmatpush2.msra.mxu0 %v1975
    %2719 = vmatprep.subr.mxu0 %v1970
    %2720 = vmatpush2.msra.mxu0 %v1969
    %2721 = vmatprep.subr.mxu0 %v1964
    %2722 = vmatpush2.msra.mxu0 %v1963
    %2723 = vmatprep.subr.mxu0 %v1958
    %2724 = vmatpush2.msra.mxu0 %v1957
    %2725 = vmatprep.subr.mxu0 %v1952
    %2726 = vmatpush2.msra.mxu0 %v1951
    %2727 = vmatprep.subr.mxu0 %v1946
    %2728 = vmatpush2.msra.mxu0 %v1945
    %2729 = vmatprep.subr.mxu0 %v1940
    %2730 = vmatpush2.msra.mxu0 %v1939
    %2731 = vmatprep.subr.mxu0 %v1934
    %2732 = vmatpush2.msra.mxu0 %v1933
    %2733 = vmatprep.subr.mxu0 %v1928
    %2734 = vmatpush2.msra.mxu0 %v1927
    %2735 = vmatprep.mubr.f32.mxu0 %v1442
    %2736 = vmatmul.mubr.f32.gmra.mxu0 %v1441
    %v2737 = vpop.f32.mrf.mxu0
    %v2738 = vadd.f32 %v2667, %v2737
    %v2739 = vpop.f32.mrf.mxu0
    %v2740 = vadd.f32 %v2669, %v2739
    %2741 = vdwg.mxu0
    %2742 = vmatprep.subr.mxu0 %v2114
    %2743 = vmatpush1.msra.mxu0 %v2113
    %2744 = vmatprep.subr.mxu0 %v2108
    %2745 = vmatpush1.msra.mxu0 %v2107
    %2746 = vmatprep.subr.mxu0 %v2102
    %2747 = vmatpush1.msra.mxu0 %v2101
    %2748 = vmatprep.subr.mxu0 %v2096
    %2749 = vmatpush1.msra.mxu0 %v2095
    %2750 = vmatprep.subr.mxu0 %v2090
    %2751 = vmatpush1.msra.mxu0 %v2089
    %2752 = vmatprep.subr.mxu0 %v2084
    %2753 = vmatpush1.msra.mxu0 %v2083
    %2754 = vmatprep.subr.mxu0 %v2078
    %2755 = vmatpush1.msra.mxu0 %v2077
    %2756 = vmatprep.subr.mxu0 %v2072
    %2757 = vmatpush1.msra.mxu0 %v2071
    %2758 = vmatprep.subr.mxu0 %v2066
    %2759 = vmatpush1.msra.mxu0 %v2065
    %2760 = vmatprep.subr.mxu0 %v2060
    %2761 = vmatpush1.msra.mxu0 %v2059
    %2762 = vmatprep.subr.mxu0 %v2054
    %2763 = vmatpush1.msra.mxu0 %v2053
    %2764 = vmatprep.subr.mxu0 %v2048
    %2765 = vmatpush1.msra.mxu0 %v2047
    %2766 = vmatprep.subr.mxu0 %v2042
    %2767 = vmatpush1.msra.mxu0 %v2041
    %2768 = vmatprep.subr.mxu0 %v2036
    %2769 = vmatpush1.msra.mxu0 %v2035
    %2770 = vmatprep.subr.mxu0 %v2030
    %2771 = vmatpush1.msra.mxu0 %v2029
    %2772 = vmatprep.subr.mxu0 %v2024
    %2773 = vmatpush1.msra.mxu0 %v2023
    %2774 = vmatprep.subr.mxu0 %v2210
    %2775 = vmatpush2.msra.mxu0 %v2209
    %2776 = vmatprep.subr.mxu0 %v2204
    %2777 = vmatpush2.msra.mxu0 %v2203
    %2778 = vmatprep.subr.mxu0 %v2198
    %2779 = vmatpush2.msra.mxu0 %v2197
    %2780 = vmatprep.subr.mxu0 %v2192
    %2781 = vmatpush2.msra.mxu0 %v2191
    %2782 = vmatprep.subr.mxu0 %v2186
    %2783 = vmatpush2.msra.mxu0 %v2185
    %2784 = vmatprep.subr.mxu0 %v2180
    %2785 = vmatpush2.msra.mxu0 %v2179
    %2786 = vmatprep.subr.mxu0 %v2174
    %2787 = vmatpush2.msra.mxu0 %v2173
    %2788 = vmatprep.subr.mxu0 %v2168
    %2789 = vmatpush2.msra.mxu0 %v2167
    %2790 = vmatprep.subr.mxu0 %v2162
    %2791 = vmatpush2.msra.mxu0 %v2161
    %2792 = vmatprep.subr.mxu0 %v2156
    %2793 = vmatpush2.msra.mxu0 %v2155
    %2794 = vmatprep.subr.mxu0 %v2150
    %2795 = vmatpush2.msra.mxu0 %v2149
    %2796 = vmatprep.subr.mxu0 %v2144
    %2797 = vmatpush2.msra.mxu0 %v2143
    %2798 = vmatprep.subr.mxu0 %v2138
    %2799 = vmatpush2.msra.mxu0 %v2137
    %2800 = vmatprep.subr.mxu0 %v2132
    %2801 = vmatpush2.msra.mxu0 %v2131
    %2802 = vmatprep.subr.mxu0 %v2126
    %2803 = vmatpush2.msra.mxu0 %v2125
    %2804 = vmatprep.subr.mxu0 %v2120
    %2805 = vmatpush2.msra.mxu0 %v2119
    %2806 = vmatprep.mubr.f32.mxu0 %v1444
    %2807 = vmatmul.mubr.f32.gmra.mxu0 %v1443
    %v2808 = vpop.f32.mrf.mxu0
    %v2809 = vadd.f32 %v2738, %v2808
    %v2810 = vpop.f32.mrf.mxu0
    %v2811 = vadd.f32 %v2740, %v2810
    %2812 = vdwg.mxu0
    %2813 = vmatprep.subr.mxu0 %v1540
    %2814 = vmatpush1.msra.mxu0 %v1539
    %2815 = vmatprep.subr.mxu0 %v1534
    %2816 = vmatpush1.msra.mxu0 %v1533
    %2817 = vmatprep.subr.mxu0 %v1528
    %2818 = vmatpush1.msra.mxu0 %v1527
    %2819 = vmatprep.subr.mxu0 %v1522
    %2820 = vmatpush1.msra.mxu0 %v1521
    %2821 = vmatprep.subr.mxu0 %v1516
    %2822 = vmatpush1.msra.mxu0 %v1515
    %2823 = vmatprep.subr.mxu0 %v1510
    %2824 = vmatpush1.msra.mxu0 %v1509
    %2825 = vmatprep.subr.mxu0 %v1504
    %2826 = vmatpush1.msra.mxu0 %v1503
    %2827 = vmatprep.subr.mxu0 %v1498
    %2828 = vmatpush1.msra.mxu0 %v1497
    %2829 = vmatprep.subr.mxu0 %v1492
    %2830 = vmatpush1.msra.mxu0 %v1491
    %2831 = vmatprep.subr.mxu0 %v1486
    %2832 = vmatpush1.msra.mxu0 %v1485
    %2833 = vmatprep.subr.mxu0 %v1480
    %2834 = vmatpush1.msra.mxu0 %v1479
    %2835 = vmatprep.subr.mxu0 %v1474
    %2836 = vmatpush1.msra.mxu0 %v1473
    %2837 = vmatprep.subr.mxu0 %v1468
    %2838 = vmatpush1.msra.mxu0 %v1467
    %2839 = vmatprep.subr.mxu0 %v1462
    %2840 = vmatpush1.msra.mxu0 %v1461
    %2841 = vmatprep.subr.mxu0 %v1456
    %2842 = vmatpush1.msra.mxu0 %v1455
    %2843 = vmatprep.subr.mxu0 %v1450
    %2844 = vmatpush1.msra.mxu0 %v1449
    %2845 = vmatprep.subr.mxu0 %v1636
    %2846 = vmatpush2.msra.mxu0 %v1635
    %2847 = vmatprep.subr.mxu0 %v1630
    %2848 = vmatpush2.msra.mxu0 %v1629
    %2849 = vmatprep.subr.mxu0 %v1624
    %2850 = vmatpush2.msra.mxu0 %v1623
    %2851 = vmatprep.subr.mxu0 %v1618
    %2852 = vmatpush2.msra.mxu0 %v1617
    %2853 = vmatprep.subr.mxu0 %v1612
    %2854 = vmatpush2.msra.mxu0 %v1611
    %2855 = vmatprep.subr.mxu0 %v1606
    %2856 = vmatpush2.msra.mxu0 %v1605
    %2857 = vmatprep.subr.mxu0 %v1600
    %2858 = vmatpush2.msra.mxu0 %v1599
    %2859 = vmatprep.subr.mxu0 %v1594
    %2860 = vmatpush2.msra.mxu0 %v1593
    %2861 = vmatprep.subr.mxu0 %v1588
    %2862 = vmatpush2.msra.mxu0 %v1587
    %2863 = vmatprep.subr.mxu0 %v1582
    %2864 = vmatpush2.msra.mxu0 %v1581
    %2865 = vmatprep.subr.mxu0 %v1576
    %2866 = vmatpush2.msra.mxu0 %v1575
    %2867 = vmatprep.subr.mxu0 %v1570
    %2868 = vmatpush2.msra.mxu0 %v1569
    %2869 = vmatprep.subr.mxu0 %v1564
    %2870 = vmatpush2.msra.mxu0 %v1563
    %2871 = vmatprep.subr.mxu0 %v1558
    %2872 = vmatpush2.msra.mxu0 %v1557
    %2873 = vmatprep.subr.mxu0 %v1552
    %2874 = vmatpush2.msra.mxu0 %v1551
    %2875 = vmatprep.subr.mxu0 %v1546
    %2876 = vmatpush2.msra.mxu0 %v1545
    %2877 = vmatprep.mubr.f32.mxu0 %v1438
    %2878 = vmatmul.mubr.f32.gmra.mxu0 %v1437
    %v2879 = vpop.f32.mrf.mxu0
    %v2880 = vadd.f32 %v2234, %v2879
    %v2881 = vpop.f32.mrf.mxu0
    %v2882 = vadd.f32 %v2238, %v2881
    %2883 = vdwg.mxu0
    %2884 = vmatprep.subr.mxu0 %v1732
    %2885 = vmatpush1.msra.mxu0 %v1731
    %2886 = vmatprep.subr.mxu0 %v1726
    %2887 = vmatpush1.msra.mxu0 %v1725
    %2888 = vmatprep.subr.mxu0 %v1720
    %2889 = vmatpush1.msra.mxu0 %v1719
    %2890 = vmatprep.subr.mxu0 %v1714
    %2891 = vmatpush1.msra.mxu0 %v1713
    %2892 = vmatprep.subr.mxu0 %v1708
    %2893 = vmatpush1.msra.mxu0 %v1707
    %2894 = vmatprep.subr.mxu0 %v1702
    %2895 = vmatpush1.msra.mxu0 %v1701
    %2896 = vmatprep.subr.mxu0 %v1696
    %2897 = vmatpush1.msra.mxu0 %v1695
    %2898 = vmatprep.subr.mxu0 %v1690
    %2899 = vmatpush1.msra.mxu0 %v1689
    %2900 = vmatprep.subr.mxu0 %v1684
    %2901 = vmatpush1.msra.mxu0 %v1683
    %2902 = vmatprep.subr.mxu0 %v1678
    %2903 = vmatpush1.msra.mxu0 %v1677
    %2904 = vmatprep.subr.mxu0 %v1672
    %2905 = vmatpush1.msra.mxu0 %v1671
    %2906 = vmatprep.subr.mxu0 %v1666
    %2907 = vmatpush1.msra.mxu0 %v1665
    %2908 = vmatprep.subr.mxu0 %v1660
    %2909 = vmatpush1.msra.mxu0 %v1659
    %2910 = vmatprep.subr.mxu0 %v1654
    %2911 = vmatpush1.msra.mxu0 %v1653
    %2912 = vmatprep.subr.mxu0 %v1648
    %2913 = vmatpush1.msra.mxu0 %v1647
    %2914 = vmatprep.subr.mxu0 %v1642
    %2915 = vmatpush1.msra.mxu0 %v1641
    %2916 = vmatprep.subr.mxu0 %v1828
    %2917 = vmatpush2.msra.mxu0 %v1827
    %2918 = vmatprep.subr.mxu0 %v1822
    %2919 = vmatpush2.msra.mxu0 %v1821
    %2920 = vmatprep.subr.mxu0 %v1816
    %2921 = vmatpush2.msra.mxu0 %v1815
    %2922 = vmatprep.subr.mxu0 %v1810
    %2923 = vmatpush2.msra.mxu0 %v1809
    %2924 = vmatprep.subr.mxu0 %v1804
    %2925 = vmatpush2.msra.mxu0 %v1803
    %2926 = vmatprep.subr.mxu0 %v1798
    %2927 = vmatpush2.msra.mxu0 %v1797
    %2928 = vmatprep.subr.mxu0 %v1792
    %2929 = vmatpush2.msra.mxu0 %v1791
    %2930 = vmatprep.subr.mxu0 %v1786
    %2931 = vmatpush2.msra.mxu0 %v1785
    %2932 = vmatprep.subr.mxu0 %v1780
    %2933 = vmatpush2.msra.mxu0 %v1779
    %2934 = vmatprep.subr.mxu0 %v1774
    %2935 = vmatpush2.msra.mxu0 %v1773
    %2936 = vmatprep.subr.mxu0 %v1768
    %2937 = vmatpush2.msra.mxu0 %v1767
    %2938 = vmatprep.subr.mxu0 %v1762
    %2939 = vmatpush2.msra.mxu0 %v1761
    %2940 = vmatprep.subr.mxu0 %v1756
    %2941 = vmatpush2.msra.mxu0 %v1755
    %2942 = vmatprep.subr.mxu0 %v1750
    %2943 = vmatpush2.msra.mxu0 %v1749
    %2944 = vmatprep.subr.mxu0 %v1744
    %2945 = vmatpush2.msra.mxu0 %v1743
    %2946 = vmatprep.subr.mxu0 %v1738
    %2947 = vmatpush2.msra.mxu0 %v1737
    %2948 = vmatprep.mubr.f32.mxu0 %v1440
    %2949 = vmatmul.mubr.f32.gmra.mxu0 %v1439
    %v2950 = vpop.f32.mrf.mxu0
    %v2951 = vadd.f32 %v2880, %v2950
    %v2952 = vpop.f32.mrf.mxu0
    %v2953 = vadd.f32 %v2882, %v2952
    %2954 = vdwg.mxu0
    %2955 = vmatprep.subr.mxu0 %v1924
    %2956 = vmatpush1.msra.mxu0 %v1923
    %2957 = vmatprep.subr.mxu0 %v1918
    %2958 = vmatpush1.msra.mxu0 %v1917
    %2959 = vmatprep.subr.mxu0 %v1912
    %2960 = vmatpush1.msra.mxu0 %v1911
    %2961 = vmatprep.subr.mxu0 %v1906
    %2962 = vmatpush1.msra.mxu0 %v1905
    %2963 = vmatprep.subr.mxu0 %v1900
    %2964 = vmatpush1.msra.mxu0 %v1899
    %2965 = vmatprep.subr.mxu0 %v1894
    %2966 = vmatpush1.msra.mxu0 %v1893
    %2967 = vmatprep.subr.mxu0 %v1888
    %2968 = vmatpush1.msra.mxu0 %v1887
    %2969 = vmatprep.subr.mxu0 %v1882
    %2970 = vmatpush1.msra.mxu0 %v1881
    %2971 = vmatprep.subr.mxu0 %v1876
    %2972 = vmatpush1.msra.mxu0 %v1875
    %2973 = vmatprep.subr.mxu0 %v1870
    %2974 = vmatpush1.msra.mxu0 %v1869
    %2975 = vmatprep.subr.mxu0 %v1864
    %2976 = vmatpush1.msra.mxu0 %v1863
    %2977 = vmatprep.subr.mxu0 %v1858
    %2978 = vmatpush1.msra.mxu0 %v1857
    %2979 = vmatprep.subr.mxu0 %v1852
    %2980 = vmatpush1.msra.mxu0 %v1851
    %2981 = vmatprep.subr.mxu0 %v1846
    %2982 = vmatpush1.msra.mxu0 %v1845
    %2983 = vmatprep.subr.mxu0 %v1840
    %2984 = vmatpush1.msra.mxu0 %v1839
    %2985 = vmatprep.subr.mxu0 %v1834
    %2986 = vmatpush1.msra.mxu0 %v1833
    %2987 = vmatprep.subr.mxu0 %v2020
    %2988 = vmatpush2.msra.mxu0 %v2019
    %2989 = vmatprep.subr.mxu0 %v2014
    %2990 = vmatpush2.msra.mxu0 %v2013
    %2991 = vmatprep.subr.mxu0 %v2008
    %2992 = vmatpush2.msra.mxu0 %v2007
    %2993 = vmatprep.subr.mxu0 %v2002
    %2994 = vmatpush2.msra.mxu0 %v2001
    %2995 = vmatprep.subr.mxu0 %v1996
    %2996 = vmatpush2.msra.mxu0 %v1995
    %2997 = vmatprep.subr.mxu0 %v1990
    %2998 = vmatpush2.msra.mxu0 %v1989
    %2999 = vmatprep.subr.mxu0 %v1984
    %3000 = vmatpush2.msra.mxu0 %v1983
    %3001 = vmatprep.subr.mxu0 %v1978
    %3002 = vmatpush2.msra.mxu0 %v1977
    %3003 = vmatprep.subr.mxu0 %v1972
    %3004 = vmatpush2.msra.mxu0 %v1971
    %3005 = vmatprep.subr.mxu0 %v1966
    %3006 = vmatpush2.msra.mxu0 %v1965
    %3007 = vmatprep.subr.mxu0 %v1960
    %3008 = vmatpush2.msra.mxu0 %v1959
    %3009 = vmatprep.subr.mxu0 %v1954
    %3010 = vmatpush2.msra.mxu0 %v1953
    %3011 = vmatprep.subr.mxu0 %v1948
    %3012 = vmatpush2.msra.mxu0 %v1947
    %3013 = vmatprep.subr.mxu0 %v1942
    %3014 = vmatpush2.msra.mxu0 %v1941
    %3015 = vmatprep.subr.mxu0 %v1936
    %3016 = vmatpush2.msra.mxu0 %v1935
    %3017 = vmatprep.subr.mxu0 %v1930
    %3018 = vmatpush2.msra.mxu0 %v1929
    %3019 = vmatprep.mubr.f32.mxu0 %v1442
    %3020 = vmatmul.mubr.f32.gmra.mxu0 %v1441
    %v3021 = vpop.f32.mrf.mxu0
    %v3022 = vadd.f32 %v2951, %v3021
    %v3023 = vpop.f32.mrf.mxu0
    %v3024 = vadd.f32 %v2953, %v3023
    %3025 = vdwg.mxu0
    %3026 = vmatprep.subr.mxu0 %v2116
    %3027 = vmatpush1.msra.mxu0 %v2115
    %3028 = vmatprep.subr.mxu0 %v2110
    %3029 = vmatpush1.msra.mxu0 %v2109
    %3030 = vmatprep.subr.mxu0 %v2104
    %3031 = vmatpush1.msra.mxu0 %v2103
    %3032 = vmatprep.subr.mxu0 %v2098
    %3033 = vmatpush1.msra.mxu0 %v2097
    %3034 = vmatprep.subr.mxu0 %v2092
    %3035 = vmatpush1.msra.mxu0 %v2091
    %3036 = vmatprep.subr.mxu0 %v2086
    %3037 = vmatpush1.msra.mxu0 %v2085
    %3038 = vmatprep.subr.mxu0 %v2080
    %3039 = vmatpush1.msra.mxu0 %v2079
    %3040 = vmatprep.subr.mxu0 %v2074
    %3041 = vmatpush1.msra.mxu0 %v2073
    %3042 = vmatprep.subr.mxu0 %v2068
    %3043 = vmatpush1.msra.mxu0 %v2067
    %3044 = vmatprep.subr.mxu0 %v2062
    %3045 = vmatpush1.msra.mxu0 %v2061
    %3046 = vmatprep.subr.mxu0 %v2056
    %3047 = vmatpush1.msra.mxu0 %v2055
    %3048 = vmatprep.subr.mxu0 %v2050
    %3049 = vmatpush1.msra.mxu0 %v2049
    %3050 = vmatprep.subr.mxu0 %v2044
    %3051 = vmatpush1.msra.mxu0 %v2043
    %3052 = vmatprep.subr.mxu0 %v2038
    %3053 = vmatpush1.msra.mxu0 %v2037
    %3054 = vmatprep.subr.mxu0 %v2032
    %3055 = vmatpush1.msra.mxu0 %v2031
    %3056 = vmatprep.subr.mxu0 %v2026
    %3057 = vmatpush1.msra.mxu0 %v2025
    %3058 = vmatprep.subr.mxu0 %v2212
    %3059 = vmatpush2.msra.mxu0 %v2211
    %3060 = vmatprep.subr.mxu0 %v2206
    %3061 = vmatpush2.msra.mxu0 %v2205
    %3062 = vmatprep.subr.mxu0 %v2200
    %3063 = vmatpush2.msra.mxu0 %v2199
    %3064 = vmatprep.subr.mxu0 %v2194
    %3065 = vmatpush2.msra.mxu0 %v2193
    %3066 = vmatprep.subr.mxu0 %v2188
    %3067 = vmatpush2.msra.mxu0 %v2187
    %3068 = vmatprep.subr.mxu0 %v2182
    %3069 = vmatpush2.msra.mxu0 %v2181
    %3070 = vmatprep.subr.mxu0 %v2176
    %3071 = vmatpush2.msra.mxu0 %v2175
    %3072 = vmatprep.subr.mxu0 %v2170
    %3073 = vmatpush2.msra.mxu0 %v2169
    %3074 = vmatprep.subr.mxu0 %v2164
    %3075 = vmatpush2.msra.mxu0 %v2163
    %3076 = vmatprep.subr.mxu0 %v2158
    %3077 = vmatpush2.msra.mxu0 %v2157
    %3078 = vmatprep.subr.mxu0 %v2152
    %3079 = vmatpush2.msra.mxu0 %v2151
    %3080 = vmatprep.subr.mxu0 %v2146
    %3081 = vmatpush2.msra.mxu0 %v2145
    %3082 = vmatprep.subr.mxu0 %v2140
    %3083 = vmatpush2.msra.mxu0 %v2139
    %3084 = vmatprep.subr.mxu0 %v2134
    %3085 = vmatpush2.msra.mxu0 %v2133
    %3086 = vmatprep.subr.mxu0 %v2128
    %3087 = vmatpush2.msra.mxu0 %v2127
    %3088 = vmatprep.subr.mxu0 %v2122
    %3089 = vmatpush2.msra.mxu0 %v2121
    %3090 = vmatprep.mubr.f32.mxu0 %v1444
    %3091 = vmatmul.mubr.f32.gmra.mxu0 %v1443
    %v3092 = vpop.f32.mrf.mxu0
    %v3093 = vadd.f32 %v3022, %v3092
    %v3094 = vpop.f32.mrf.mxu0
    %v3095 = vadd.f32 %v3024, %v3094
    %3096 = vdwg.mxu0
    %v3097 = vsub.f32 0.0, %v2525
    %v3098 = vsub.f32 0.0, %v2527
    %v3099 = vsub.f32 0.0, %v2809
    %v3100 = vsub.f32 0.0, %v2811
    %v3101 = vsub.f32 0.0, %v3093
    %v3102 = vsub.f32 0.0, %v3095
    %v3103 = vmul.f32 %v3097, 1.442695
    %v3104 = vpow.pop %v3103
    %v3105 = vmul.f32 %v3098, 1.442695
    %v3106 = vpow.pop %v3105
    %v3107 = vmul.f32 %v3099, 1.442695
    %v3108 = vpow.pop %v3107
    %v3109 = vmul.f32 %v3100, 1.442695
    %v3110 = vpow.pop %v3109
    %v3111 = vmul.f32 %v3101, 1.442695
    %v3112 = vpow.pop %v3111
    %v3113 = vmul.f32 %v3102, 1.442695
    %v3114 = vpow.pop %v3113
    %v3115 = vadd.f32 %v3104, 1.0
    %v3116 = vadd.f32 %v3106, 1.0
    %v3117 = vadd.f32 %v3108, 1.0
    %v3118 = vadd.f32 %v3110, 1.0
    %v3119 = vadd.f32 %v3112, 1.0
    %v3120 = vadd.f32 %v3114, 1.0
    %v3121 = vrcp.pop %v3115
    %v3122 = vmul.f32 1.0, %v3121
    %v3123 = vrcp.pop %v3116
    %v3124 = vmul.f32 1.0, %v3123
    %v3125 = vrcp.pop %v3117
    %v3126 = vmul.f32 1.0, %v3125
    %v3127 = vrcp.pop %v3118
    %v3128 = vmul.f32 1.0, %v3127
    %v3129 = vrcp.pop %v3119
    %v3130 = vmul.f32 1.0, %v3129
    %v3131 = vrcp.pop %v3120
    %v3132 = vmul.f32 1.0, %v3131
    %3133 = vst [vmem:[%s7] sm:$0xff] %v3122
    %3134 = vst [vmem:[%s7 + $0x8] sm:$0xff] %v3124
    %3135 = vst [vmem:[%s7 + $0x10] sm:$0xff] %v3126
    %3136 = vst [vmem:[%s7 + $0x18] sm:$0xff] %v3128
    %3137 = vst [vmem:[%s7 + $0x20] sm:$0xff] %v3130
    %3138 = vst [vmem:[%s7 + $0x28] sm:$0xff] %v3132
    // Predicated region
    $region54: #{base_decoder_forward.1} parent=1 // pred_check
      _
    $region55: #{base_decoder_forward.1} parent=1 // pred_check_branch
      %3140 = sbr.rel (0) target = $region57
    $region56: #{base_decoder_forward.1} parent=1 // pred_region
      _
    $region57: #{base_decoder_forward.1} parent=1 // pred_fallthru
      _
    // Predicated region
    $region58: #{base_decoder_forward.1} parent=1 // pred_check
      _
    $region59: #{base_decoder_forward.1} parent=1 // pred_check_branch
      %3142 = sbr.rel (0) target = $region61
    $region60: #{base_decoder_forward.1} parent=1 // pred_region
      _
    $region61: #{base_decoder_forward.1} parent=1 // pred_fallthru
      _
    %3143 = vsyncpa [#allocation3], 1
    %3144 = vsyncpa [#allocation5], 1
    %3145 = vsyncpa [#allocation8], 1
    %3146 = vsyncpa [#allocation11], 1

</llo_original>
